<compile_context>
chip_gen: v7x
topology: tpu7x:2x2x1
jax: 0.10.0
libtpu: 0.0.40
codegen_flags: <defaults>
</compile_context>

<pallas_src>
import jax
import jax.numpy as jnp
import numpy as np
from jax.experimental import pallas as pl
from jax.experimental.pallas import tpu as pltpu

# ----------------------------- configuration --------------------------------
B, C_IN, C_OUT = 2, 4, 8
F, J = 16, 16                  # frames, joints
GROUPS = 2
T_KERNEL = 3                   # odd -> 'same' temporal padding like torch
S_KERNEL = 1                   # num adjacency matrices (forward path uses 1)
PAD = T_KERNEL // 2
FJ = F * J
FJ_PAD = (F + 2 * PAD) * J     # frames padded by PAD on each side, in lanes
BN_EPS = 1e-5
NEG_SLOPE = 0.05               # nn.LeakyReLU(0.05)


# ------------------------------- the kernel ---------------------------------
def _st_gcn_kernel(x_ref, a_ref, wg_ref, bg_ref, wtc_ref, wr_ref, br_ref,
                   o_ref, y_s, zp_s):
    # Hoist all (tiny) weight loads out of the loops.
    a_mat = a_ref[...]            # [J, J]          adjacency
    wg = wg_ref[...]              # [C_OUT, C_IN]   grouped 1x1 conv (dense block-diag)
    bg = bg_ref[...]              # [C_OUT, 1]
    wtc = wtc_ref[...]            # [C_OUT, T*C_OUT] concatenated temporal taps
    wr = wr_ref[...]              # [C_OUT, C_IN]   residual conv (BN folded)
    br = br_ref[...]              # [C_OUT, 1]

    # Zero the temporal 'same'-padding frames once (shared by both batch elements).
    zp_s[:, :PAD * J] = jnp.zeros((C_OUT, PAD * J), jnp.float32)
    zp_s[:, PAD * J + FJ:] = jnp.zeros((C_OUT, PAD * J), jnp.float32)

    for b in range(B):                                   # static unroll, B=2
        x = x_ref[b]                                     # [C_IN, FJ], lane-dense

        # GCNUnit: grouped 1x1 conv (+bias); nn.Dropout(0.5) is identity at inference.
        y_s[...] = jnp.dot(wg, x, preferred_element_type=jnp.float32) + bg   # [C_OUT, FJ]

        # GCNUnit: einsum('cfj,jh->cfh') — one 16-lane frame window at a time
        # against the small dense adjacency (no 256x256 kron operand / HBM blowup).
        for f in range(F):
            lo = f * J
            zp_s[:, PAD * J + lo: PAD * J + lo + J] = jnp.dot(
                y_s[:, lo:lo + J], a_mat, preferred_element_type=jnp.float32)

        # Residual branch (1x1 conv + eval-mode BN, folded) initializes the accumulator.
        acc = jnp.dot(wr, x, preferred_element_type=jnp.float32) + br        # [C_OUT, FJ]

        # TemporalUnit: grouped (T,1) conv, stride 1, 'same' padding.  The three taps
        # are shifted 256-lane windows of the zero-padded scratch, stacked on sublanes
        # and contracted with the concatenated tap weights in one MXU matmul.
        stacked = jnp.concatenate(
            [zp_s[:, k * J: k * J + FJ] for k in range(T_KERNEL)], axis=0)   # [T*C_OUT, FJ]
        acc = acc + jnp.dot(wtc, stacked, preferred_element_type=jnp.float32)

        # LeakyReLU(0.05) + lane-dense store.
        o_ref[b] = jnp.where(acc >= 0, acc, NEG_SLOPE * acc)


# ------------------------------- the wrapper ---------------------------------
def st_gcn_block(x_nchw, adjacent, params):
    """x_nchw: [B, C_IN, F, J]; adjacent: [J, J]. Returns [B, C_OUT, F, J]."""
    wg, bg, wtc, wr, br = params

    # free view (no transpose): NCHW -> [B, C_IN, F*J]
    x_view = x_nchw.reshape(B, C_IN, FJ)

    out = pl.pallas_call(
        _st_gcn_kernel,
        out_shape=jax.ShapeDtypeStruct((B, C_OUT, FJ), jnp.float32),
        grid_spec=pltpu.PrefetchScalarGridSpec(
            num_scalar_prefetch=0,
            grid=(1,),                      # whole batch in one invocation
            in_specs=[
                pl.BlockSpec((B, C_IN, FJ), lambda i: (0, 0, 0)),             # x
                pl.BlockSpec((J, J), lambda i: (0, 0)),                       # adjacency A
                pl.BlockSpec((C_OUT, C_IN), lambda i: (0, 0)),                # gcn W (block-diag dense)
                pl.BlockSpec((C_OUT, 1), lambda i: (0, 0)),                   # gcn bias
                pl.BlockSpec((C_OUT, T_KERNEL * C_OUT), lambda i: (0, 0)),    # tcn taps, concatenated
                pl.BlockSpec((C_OUT, C_IN), lambda i: (0, 0)),                # residual W (BN folded)
                pl.BlockSpec((C_OUT, 1), lambda i: (0, 0)),                   # residual bias (BN folded)
            ],
            out_specs=pl.BlockSpec((B, C_OUT, FJ), lambda i: (0, 0, 0)),
            scratch_shapes=[
                pltpu.VMEM((C_OUT, FJ), jnp.float32),       # gcn conv output
                pltpu.VMEM((C_OUT, FJ_PAD), jnp.float32),   # zero-padded, joint-mixed feature
            ],
        ),
    )(x_view, adjacent, wg, bg, wtc, wr, br)

    # free view back to NCHW
    return out.reshape(B, C_OUT, F, J)


# ------------------------ parameter setup (glue) -----------------------------
def expand_grouped(w, groups):
    """Expand a grouped 1x1 conv weight [C_out, C_in/groups] to a dense
    block-diagonal [C_out, C_in] matrix."""
    c_out, c_in_pg = w.shape
    og = c_out // groups
    full = jnp.zeros((c_out, c_in_pg * groups), w.dtype)
    for g in range(groups):
        full = full.at[g * og:(g + 1) * og,
                       g * c_in_pg:(g + 1) * c_in_pg].set(w[g * og:(g + 1) * og])
    return full


if __name__ == "__main__":
    key = jax.random.PRNGKey(0)
    ks = jax.random.split(key, 11)

    # inputs
    x = jax.random.normal(ks[0], (B, C_IN, F, J), jnp.float32)
    adjacent = 0.3 * jax.random.normal(ks[1], (J, J), jnp.float32)

    # GCNUnit conv: weight [C_OUT*S_KERNEL, C_IN//GROUPS, 1, 1], bias [C_OUT*S_KERNEL]
    wg = 0.3 * jax.random.normal(ks[2], (C_OUT * S_KERNEL, C_IN // GROUPS), jnp.float32)
    bg = 0.1 * jax.random.normal(ks[3], (C_OUT * S_KERNEL,), jnp.float32)
    # TemporalUnit conv: weight [C_OUT, C_OUT//GROUPS, T, 1], no bias
    wt = 0.3 * jax.random.normal(ks[4], (C_OUT, C_OUT // GROUPS, T_KERNEL), jnp.float32)
    # residual: Conv2d(C_IN, C_OUT, 1) + BatchNorm2d(C_OUT) (eval mode)
    wr = 0.3 * jax.random.normal(ks[5], (C_OUT, C_IN), jnp.float32)
    br = 0.1 * jax.random.normal(ks[6], (C_OUT,), jnp.float32)
    bn_gamma = 1.0 + 0.1 * jax.random.normal(ks[7], (C_OUT,), jnp.float32)
    bn_beta = 0.1 * jax.random.normal(ks[8], (C_OUT,), jnp.float32)
    bn_mean = 0.1 * jax.random.normal(ks[9], (C_OUT,), jnp.float32)
    bn_var = 0.5 + jax.random.uniform(ks[10], (C_OUT,), jnp.float32)

    # expand grouped weights to dense block-diagonal matrices
    wg_full = expand_grouped(wg, GROUPS)                              # [C_OUT, C_IN]
    wt_full = jnp.stack([expand_grouped(wt[:, :, k], GROUPS)
                         for k in range(T_KERNEL)])                   # [T, C_OUT, C_OUT]
    # fold eval-mode BatchNorm into the residual conv
    scale = bn_gamma / jnp.sqrt(bn_var + BN_EPS)
    wr_eff = wr * scale[:, None]
    br_eff = br * scale + bn_beta - bn_mean * scale
    # pack the three temporal taps side-by-side: wt_cat[o, k*C_OUT + c] = wt_full[k, o, c]
    wt_cat = jnp.transpose(wt_full, (1, 0, 2)).reshape(C_OUT, T_KERNEL * C_OUT)

    params = (
        wg_full,                                # [C_OUT, C_IN]
        bg[:, None],                            # [C_OUT, 1]
        wt_cat,                                 # [C_OUT, T*C_OUT]
        wr_eff,                                 # [C_OUT, C_IN]
        br_eff[:, None],                        # [C_OUT, 1]
    )

    out = jax.block_until_ready(st_gcn_block(x, adjacent, params))
    assert out.shape == (B, C_OUT, F, J)

    # ---------------- pure-JAX reference (torch semantics, NCHW) ------------
    def reference(x, A):
        hp = jax.lax.Precision.HIGHEST
        y = jnp.einsum('oc,bcfj->bofj', wg_full, x, precision=hp) + bg[None, :, None, None]
        y = jnp.einsum('bcfj,jh->bcfh', y, A, precision=hp)
        ypad = jnp.pad(y, ((0, 0), (0, 0), (PAD, PAD), (0, 0)))
        t = jnp.zeros((B, C_OUT, F, J), jnp.float32)
        for k in range(T_KERNEL):
            t = t + jnp.einsum('oc,bcfj->bofj', wt_full[k], ypad[:, :, k:k + F, :],
                               precision=hp)
        r = jnp.einsum('oc,bcfj->bofj', wr, x, precision=hp) + br[None, :, None, None]
        r = ((r - bn_mean[None, :, None, None])
             / jnp.sqrt(bn_var + BN_EPS)[None, :, None, None]
             * bn_gamma[None, :, None, None] + bn_beta[None, :, None, None])
        s = t + r
        return jnp.where(s >= 0, s, NEG_SLOPE * s)

    ref = jax.block_until_ready(reference(x, adjacent))
    # Tolerance reflects MXU matmul precision (default bf16 passes), not layout slack;
    # layout/transpose bugs would show up as O(1) mismatches.
    np.testing.assert_allclose(np.asarray(out), np.asarray(ref), rtol=2e-2, atol=2e-2)
    print("KERNEL_OK")
</pallas_src>

<mosaic_0001>
module attributes {stable_mosaic.version = 11 : i64} {
  func.func @_st_gcn_kernel(%arg0: i32, %arg1: memref<2x4x256xf32, #tpu.memory_space<vmem>>, %arg2: memref<16x16xf32, #tpu.memory_space<vmem>>, %arg3: memref<8x4xf32, #tpu.memory_space<vmem>>, %arg4: memref<8x1xf32, #tpu.memory_space<vmem>>, %arg5: memref<8x24xf32, #tpu.memory_space<vmem>>, %arg6: memref<8x4xf32, #tpu.memory_space<vmem>>, %arg7: memref<8x1xf32, #tpu.memory_space<vmem>>, %arg8: memref<2x8x256xf32, #tpu.memory_space<vmem>>, %arg9: memref<8x256xf32, #tpu.memory_space<vmem>>, %arg10: memref<8x288xf32, #tpu.memory_space<vmem>>) attributes {dimension_semantics = [#tpu.dimension_semantics<arbitrary>], iteration_bounds = array<i64: 1>, scalar_prefetch = 0 : i64, scratch_operands = 2 : i64, tpu.core_type = #tpu.core_type<tc>, window_params = [{pipeline_mode = #tpu.pipeline_mode<synchronous>, transform_indices = @transform_0, window_bounds = array<i64: 2, 4, 256>}, {pipeline_mode = #tpu.pipeline_mode<synchronous>, transform_indices = @transform_1, window_bounds = array<i64: 16, 16>}, {pipeline_mode = #tpu.pipeline_mode<synchronous>, transform_indices = @transform_2, window_bounds = array<i64: 8, 4>}, {pipeline_mode = #tpu.pipeline_mode<synchronous>, transform_indices = @transform_3, window_bounds = array<i64: 8, 1>}, {pipeline_mode = #tpu.pipeline_mode<synchronous>, transform_indices = @transform_4, window_bounds = array<i64: 8, 24>}, {pipeline_mode = #tpu.pipeline_mode<synchronous>, transform_indices = @transform_5, window_bounds = array<i64: 8, 4>}, {pipeline_mode = #tpu.pipeline_mode<synchronous>, transform_indices = @transform_6, window_bounds = array<i64: 8, 1>}, {pipeline_mode = #tpu.pipeline_mode<synchronous>, transform_indices = @transform_7, window_bounds = array<i64: 2, 8, 256>}]} {
    %c0 = arith.constant 0 : index
    %c0_0 = arith.constant 0 : index
    %0 = vector.load %arg2[%c0, %c0_0] : memref<16x16xf32, #tpu.memory_space<vmem>>, vector<16x16xf32>
    %c0_1 = arith.constant 0 : index
    %c0_2 = arith.constant 0 : index
    %1 = vector.load %arg3[%c0_1, %c0_2] : memref<8x4xf32, #tpu.memory_space<vmem>>, vector<8x4xf32>
    %c0_3 = arith.constant 0 : index
    %c0_4 = arith.constant 0 : index
    %2 = vector.load %arg4[%c0_3, %c0_4] : memref<8x1xf32, #tpu.memory_space<vmem>>, vector<8x1xf32>
    %c0_5 = arith.constant 0 : index
    %c0_6 = arith.constant 0 : index
    %3 = vector.load %arg5[%c0_5, %c0_6] : memref<8x24xf32, #tpu.memory_space<vmem>>, vector<8x24xf32>
    %c0_7 = arith.constant 0 : index
    %c0_8 = arith.constant 0 : index
    %4 = vector.load %arg6[%c0_7, %c0_8] : memref<8x4xf32, #tpu.memory_space<vmem>>, vector<8x4xf32>
    %c0_9 = arith.constant 0 : index
    %c0_10 = arith.constant 0 : index
    %5 = vector.load %arg7[%c0_9, %c0_10] : memref<8x1xf32, #tpu.memory_space<vmem>>, vector<8x1xf32>
    %cst = arith.constant 0.000000e+00 : f32
    %6 = vector.broadcast %cst : f32 to vector<8x16xf32>
    %c0_11 = arith.constant 0 : index
    %c0_12 = arith.constant 0 : index
    %7 = vector.load %arg10[%c0_11, %c0_12] : memref<8x288xf32, #tpu.memory_space<vmem>>, vector<8x16xf32>
    tpu.vector_store %arg10[%c0_11, %c0_12], %6 {strides = array<i32>} : memref<8x288xf32, #tpu.memory_space<vmem>>, vector<8x16xf32>,
    %cst_13 = arith.constant 0.000000e+00 : f32
    %8 = vector.broadcast %cst_13 : f32 to vector<8x16xf32>
    %c0_14 = arith.constant 0 : index
    %c272 = arith.constant 272 : index
    %9 = vector.load %arg10[%c0_14, %c272] : memref<8x288xf32, #tpu.memory_space<vmem>>, vector<8x16xf32>
    tpu.vector_store %arg10[%c0_14, %c272], %8 {strides = array<i32>} : memref<8x288xf32, #tpu.memory_space<vmem>>, vector<8x16xf32>,
    %c0_15 = arith.constant 0 : index
    %c0_16 = arith.constant 0 : index
    %c0_17 = arith.constant 0 : index
    %10 = vector.load %arg1[%c0_15, %c0_16, %c0_17] : memref<2x4x256xf32, #tpu.memory_space<vmem>>, vector<1x4x256xf32>
    %11 = vector.shape_cast %10 : vector<1x4x256xf32> to vector<4x256xf32>
    %cst_18 = arith.constant dense<0.000000e+00> : vector<8x256xf32>
    %12 = tpu.matmul %1, %11, %cst_18 {dimension_numbers = #tpu.dot_dimension_numbers<[1], [0], [0], [1], [0, 0, 1, 1], [], []>} : vector<8x4xf32>, vector<4x256xf32>, vector<8x256xf32> -> vector<8x256xf32>
    %13 = vector.broadcast %2 : vector<8x1xf32> to vector<8x256xf32>
    %14 = arith.addf %12, %13 : vector<8x256xf32>
    %c0_19 = arith.constant 0 : index
    %c0_20 = arith.constant 0 : index
    %15 = vector.load %arg9[%c0_19, %c0_20] : memref<8x256xf32, #tpu.memory_space<vmem>>, vector<8x256xf32>
    tpu.vector_store %arg9[%c0_19, %c0_20], %14 {strides = array<i32>} : memref<8x256xf32, #tpu.memory_space<vmem>>, vector<8x256xf32>,
    %c0_21 = arith.constant 0 : index
    %c0_22 = arith.constant 0 : index
    %16 = vector.load %arg9[%c0_21, %c0_22] : memref<8x256xf32, #tpu.memory_space<vmem>>, vector<8x16xf32>
    %cst_23 = arith.constant dense<0.000000e+00> : vector<8x16xf32>
    %17 = tpu.matmul %16, %0, %cst_23 {dimension_numbers = #tpu.dot_dimension_numbers<[1], [0], [0], [1], [0, 0, 1, 1], [], []>} : vector<8x16xf32>, vector<16x16xf32>, vector<8x16xf32> -> vector<8x16xf32>
    %c0_24 = arith.constant 0 : index
    %c16 = arith.constant 16 : index
    %18 = vector.load %arg10[%c0_24, %c16] : memref<8x288xf32, #tpu.memory_space<vmem>>, vector<8x16xf32>
    tpu.vector_store %arg10[%c0_24, %c16], %17 {strides = array<i32>} : memref<8x288xf32, #tpu.memory_space<vmem>>, vector<8x16xf32>,
    %c0_25 = arith.constant 0 : index
    %c16_26 = arith.constant 16 : index
    %19 = vector.load %arg9[%c0_25, %c16_26] : memref<8x256xf32, #tpu.memory_space<vmem>>, vector<8x16xf32>
    %cst_27 = arith.constant dense<0.000000e+00> : vector<8x16xf32>
    %20 = tpu.matmul %19, %0, %cst_27 {dimension_numbers = #tpu.dot_dimension_numbers<[1], [0], [0], [1], [0, 0, 1, 1], [], []>} : vector<8x16xf32>, vector<16x16xf32>, vector<8x16xf32> -> vector<8x16xf32>
    %c0_28 = arith.constant 0 : index
    %c32 = arith.constant 32 : index
    %21 = vector.load %arg10[%c0_28, %c32] : memref<8x288xf32, #tpu.memory_space<vmem>>, vector<8x16xf32>
    tpu.vector_store %arg10[%c0_28, %c32], %20 {strides = array<i32>} : memref<8x288xf32, #tpu.memory_space<vmem>>, vector<8x16xf32>,
    %c0_29 = arith.constant 0 : index
    %c32_30 = arith.constant 32 : index
    %22 = vector.load %arg9[%c0_29, %c32_30] : memref<8x256xf32, #tpu.memory_space<vmem>>, vector<8x16xf32>
    %cst_31 = arith.constant dense<0.000000e+00> : vector<8x16xf32>
    %23 = tpu.matmul %22, %0, %cst_31 {dimension_numbers = #tpu.dot_dimension_numbers<[1], [0], [0], [1], [0, 0, 1, 1], [], []>} : vector<8x16xf32>, vector<16x16xf32>, vector<8x16xf32> -> vector<8x16xf32>
    %c0_32 = arith.constant 0 : index
    %c48 = arith.constant 48 : index
    %24 = vector.load %arg10[%c0_32, %c48] : memref<8x288xf32, #tpu.memory_space<vmem>>, vector<8x16xf32>
    tpu.vector_store %arg10[%c0_32, %c48], %23 {strides = array<i32>} : memref<8x288xf32, #tpu.memory_space<vmem>>, vector<8x16xf32>,
    %c0_33 = arith.constant 0 : index
    %c48_34 = arith.constant 48 : index
    %25 = vector.load %arg9[%c0_33, %c48_34] : memref<8x256xf32, #tpu.memory_space<vmem>>, vector<8x16xf32>
    %cst_35 = arith.constant dense<0.000000e+00> : vector<8x16xf32>
    %26 = tpu.matmul %25, %0, %cst_35 {dimension_numbers = #tpu.dot_dimension_numbers<[1], [0], [0], [1], [0, 0, 1, 1], [], []>} : vector<8x16xf32>, vector<16x16xf32>, vector<8x16xf32> -> vector<8x16xf32>
    %c0_36 = arith.constant 0 : index
    %c64 = arith.constant 64 : index
    %27 = vector.load %arg10[%c0_36, %c64] : memref<8x288xf32, #tpu.memory_space<vmem>>, vector<8x16xf32>
    tpu.vector_store %arg10[%c0_36, %c64], %26 {strides = array<i32>} : memref<8x288xf32, #tpu.memory_space<vmem>>, vector<8x16xf32>,
    %c0_37 = arith.constant 0 : index
    %c64_38 = arith.constant 64 : index
    %28 = vector.load %arg9[%c0_37, %c64_38] : memref<8x256xf32, #tpu.memory_space<vmem>>, vector<8x16xf32>
    %cst_39 = arith.constant dense<0.000000e+00> : vector<8x16xf32>
    %29 = tpu.matmul %28, %0, %cst_39 {dimension_numbers = #tpu.dot_dimension_numbers<[1], [0], [0], [1], [0, 0, 1, 1], [], []>} : vector<8x16xf32>, vector<16x16xf32>, vector<8x16xf32> -> vector<8x16xf32>
    %c0_40 = arith.constant 0 : index
    %c80 = arith.constant 80 : index
    %30 = vector.load %arg10[%c0_40, %c80] : memref<8x288xf32, #tpu.memory_space<vmem>>, vector<8x16xf32>
    tpu.vector_store %arg10[%c0_40, %c80], %29 {strides = array<i32>} : memref<8x288xf32, #tpu.memory_space<vmem>>, vector<8x16xf32>,
    %c0_41 = arith.constant 0 : index
    %c80_42 = arith.constant 80 : index
    %31 = vector.load %arg9[%c0_41, %c80_42] : memref<8x256xf32, #tpu.memory_space<vmem>>, vector<8x16xf32>
    %cst_43 = arith.constant dense<0.000000e+00> : vector<8x16xf32>
    %32 = tpu.matmul %31, %0, %cst_43 {dimension_numbers = #tpu.dot_dimension_numbers<[1], [0], [0], [1], [0, 0, 1, 1], [], []>} : vector<8x16xf32>, vector<16x16xf32>, vector<8x16xf32> -> vector<8x16xf32>
    %c0_44 = arith.constant 0 : index
    %c96 = arith.constant 96 : index
    %33 = vector.load %arg10[%c0_44, %c96] : memref<8x288xf32, #tpu.memory_space<vmem>>, vector<8x16xf32>
    tpu.vector_store %arg10[%c0_44, %c96], %32 {strides = array<i32>} : memref<8x288xf32, #tpu.memory_space<vmem>>, vector<8x16xf32>,
    %c0_45 = arith.constant 0 : index
    %c96_46 = arith.constant 96 : index
    %34 = vector.load %arg9[%c0_45, %c96_46] : memref<8x256xf32, #tpu.memory_space<vmem>>, vector<8x16xf32>
    %cst_47 = arith.constant dense<0.000000e+00> : vector<8x16xf32>
    %35 = tpu.matmul %34, %0, %cst_47 {dimension_numbers = #tpu.dot_dimension_numbers<[1], [0], [0], [1], [0, 0, 1, 1], [], []>} : vector<8x16xf32>, vector<16x16xf32>, vector<8x16xf32> -> vector<8x16xf32>
    %c0_48 = arith.constant 0 : index
    %c112 = arith.constant 112 : index
    %36 = vector.load %arg10[%c0_48, %c112] : memref<8x288xf32, #tpu.memory_space<vmem>>, vector<8x16xf32>
    tpu.vector_store %arg10[%c0_48, %c112], %35 {strides = array<i32>} : memref<8x288xf32, #tpu.memory_space<vmem>>, vector<8x16xf32>,
    %c0_49 = arith.constant 0 : index
    %c112_50 = arith.constant 112 : index
    %37 = vector.load %arg9[%c0_49, %c112_50] : memref<8x256xf32, #tpu.memory_space<vmem>>, vector<8x16xf32>
    %cst_51 = arith.constant dense<0.000000e+00> : vector<8x16xf32>
    %38 = tpu.matmul %37, %0, %cst_51 {dimension_numbers = #tpu.dot_dimension_numbers<[1], [0], [0], [1], [0, 0, 1, 1], [], []>} : vector<8x16xf32>, vector<16x16xf32>, vector<8x16xf32> -> vector<8x16xf32>
    %c0_52 = arith.constant 0 : index
    %c128 = arith.constant 128 : index
    %39 = vector.load %arg10[%c0_52, %c128] : memref<8x288xf32, #tpu.memory_space<vmem>>, vector<8x16xf32>
    tpu.vector_store %arg10[%c0_52, %c128], %38 {strides = array<i32>} : memref<8x288xf32, #tpu.memory_space<vmem>>, vector<8x16xf32>,
    %c0_53 = arith.constant 0 : index
    %c128_54 = arith.constant 128 : index
    %40 = vector.load %arg9[%c0_53, %c128_54] : memref<8x256xf32, #tpu.memory_space<vmem>>, vector<8x16xf32>
    %cst_55 = arith.constant dense<0.000000e+00> : vector<8x16xf32>
    %41 = tpu.matmul %40, %0, %cst_55 {dimension_numbers = #tpu.dot_dimension_numbers<[1], [0], [0], [1], [0, 0, 1, 1], [], []>} : vector<8x16xf32>, vector<16x16xf32>, vector<8x16xf32> -> vector<8x16xf32>
    %c0_56 = arith.constant 0 : index
    %c144 = arith.constant 144 : index
    %42 = vector.load %arg10[%c0_56, %c144] : memref<8x288xf32, #tpu.memory_space<vmem>>, vector<8x16xf32>
    tpu.vector_store %arg10[%c0_56, %c144], %41 {strides = array<i32>} : memref<8x288xf32, #tpu.memory_space<vmem>>, vector<8x16xf32>,
    %c0_57 = arith.constant 0 : index
    %c144_58 = arith.constant 144 : index
    %43 = vector.load %arg9[%c0_57, %c144_58] : memref<8x256xf32, #tpu.memory_space<vmem>>, vector<8x16xf32>
    %cst_59 = arith.constant dense<0.000000e+00> : vector<8x16xf32>
    %44 = tpu.matmul %43, %0, %cst_59 {dimension_numbers = #tpu.dot_dimension_numbers<[1], [0], [0], [1], [0, 0, 1, 1], [], []>} : vector<8x16xf32>, vector<16x16xf32>, vector<8x16xf32> -> vector<8x16xf32>
    %c0_60 = arith.constant 0 : index
    %c160 = arith.constant 160 : index
    %45 = vector.load %arg10[%c0_60, %c160] : memref<8x288xf32, #tpu.memory_space<vmem>>, vector<8x16xf32>
    tpu.vector_store %arg10[%c0_60, %c160], %44 {strides = array<i32>} : memref<8x288xf32, #tpu.memory_space<vmem>>, vector<8x16xf32>,
    %c0_61 = arith.constant 0 : index
    %c160_62 = arith.constant 160 : index
    %46 = vector.load %arg9[%c0_61, %c160_62] : memref<8x256xf32, #tpu.memory_space<vmem>>, vector<8x16xf32>
    %cst_63 = arith.constant dense<0.000000e+00> : vector<8x16xf32>
    %47 = tpu.matmul %46, %0, %cst_63 {dimension_numbers = #tpu.dot_dimension_numbers<[1], [0], [0], [1], [0, 0, 1, 1], [], []>} : vector<8x16xf32>, vector<16x16xf32>, vector<8x16xf32> -> vector<8x16xf32>
    %c0_64 = arith.constant 0 : index
    %c176 = arith.constant 176 : index
    %48 = vector.load %arg10[%c0_64, %c176] : memref<8x288xf32, #tpu.memory_space<vmem>>, vector<8x16xf32>
    tpu.vector_store %arg10[%c0_64, %c176], %47 {strides = array<i32>} : memref<8x288xf32, #tpu.memory_space<vmem>>, vector<8x16xf32>,
    %c0_65 = arith.constant 0 : index
    %c176_66 = arith.constant 176 : index
    %49 = vector.load %arg9[%c0_65, %c176_66] : memref<8x256xf32, #tpu.memory_space<vmem>>, vector<8x16xf32>
    %cst_67 = arith.constant dense<0.000000e+00> : vector<8x16xf32>
    %50 = tpu.matmul %49, %0, %cst_67 {dimension_numbers = #tpu.dot_dimension_numbers<[1], [0], [0], [1], [0, 0, 1, 1], [], []>} : vector<8x16xf32>, vector<16x16xf32>, vector<8x16xf32> -> vector<8x16xf32>
    %c0_68 = arith.constant 0 : index
    %c192 = arith.constant 192 : index
    %51 = vector.load %arg10[%c0_68, %c192] : memref<8x288xf32, #tpu.memory_space<vmem>>, vector<8x16xf32>
    tpu.vector_store %arg10[%c0_68, %c192], %50 {strides = array<i32>} : memref<8x288xf32, #tpu.memory_space<vmem>>, vector<8x16xf32>,
    %c0_69 = arith.constant 0 : index
    %c192_70 = arith.constant 192 : index
    %52 = vector.load %arg9[%c0_69, %c192_70] : memref<8x256xf32, #tpu.memory_space<vmem>>, vector<8x16xf32>
    %cst_71 = arith.constant dense<0.000000e+00> : vector<8x16xf32>
    %53 = tpu.matmul %52, %0, %cst_71 {dimension_numbers = #tpu.dot_dimension_numbers<[1], [0], [0], [1], [0, 0, 1, 1], [], []>} : vector<8x16xf32>, vector<16x16xf32>, vector<8x16xf32> -> vector<8x16xf32>
    %c0_72 = arith.constant 0 : index
    %c208 = arith.constant 208 : index
    %54 = vector.load %arg10[%c0_72, %c208] : memref<8x288xf32, #tpu.memory_space<vmem>>, vector<8x16xf32>
    tpu.vector_store %arg10[%c0_72, %c208], %53 {strides = array<i32>} : memref<8x288xf32, #tpu.memory_space<vmem>>, vector<8x16xf32>,
    %c0_73 = arith.constant 0 : index
    %c208_74 = arith.constant 208 : index
    %55 = vector.load %arg9[%c0_73, %c208_74] : memref<8x256xf32, #tpu.memory_space<vmem>>, vector<8x16xf32>
    %cst_75 = arith.constant dense<0.000000e+00> : vector<8x16xf32>
    %56 = tpu.matmul %55, %0, %cst_75 {dimension_numbers = #tpu.dot_dimension_numbers<[1], [0], [0], [1], [0, 0, 1, 1], [], []>} : vector<8x16xf32>, vector<16x16xf32>, vector<8x16xf32> -> vector<8x16xf32>
    %c0_76 = arith.constant 0 : index
    %c224 = arith.constant 224 : index
    %57 = vector.load %arg10[%c0_76, %c224] : memref<8x288xf32, #tpu.memory_space<vmem>>, vector<8x16xf32>
    tpu.vector_store %arg10[%c0_76, %c224], %56 {strides = array<i32>} : memref<8x288xf32, #tpu.memory_space<vmem>>, vector<8x16xf32>,
    %c0_77 = arith.constant 0 : index
    %c224_78 = arith.constant 224 : index
    %58 = vector.load %arg9[%c0_77, %c224_78] : memref<8x256xf32, #tpu.memory_space<vmem>>, vector<8x16xf32>
    %cst_79 = arith.constant dense<0.000000e+00> : vector<8x16xf32>
    %59 = tpu.matmul %58, %0, %cst_79 {dimension_numbers = #tpu.dot_dimension_numbers<[1], [0], [0], [1], [0, 0, 1, 1], [], []>} : vector<8x16xf32>, vector<16x16xf32>, vector<8x16xf32> -> vector<8x16xf32>
    %c0_80 = arith.constant 0 : index
    %c240 = arith.constant 240 : index
    %60 = vector.load %arg10[%c0_80, %c240] : memref<8x288xf32, #tpu.memory_space<vmem>>, vector<8x16xf32>
    tpu.vector_store %arg10[%c0_80, %c240], %59 {strides = array<i32>} : memref<8x288xf32, #tpu.memory_space<vmem>>, vector<8x16xf32>,
    %c0_81 = arith.constant 0 : index
    %c240_82 = arith.constant 240 : index
    %61 = vector.load %arg9[%c0_81, %c240_82] : memref<8x256xf32, #tpu.memory_space<vmem>>, vector<8x16xf32>
    %cst_83 = arith.constant dense<0.000000e+00> : vector<8x16xf32>
    %62 = tpu.matmul %61, %0, %cst_83 {dimension_numbers = #tpu.dot_dimension_numbers<[1], [0], [0], [1], [0, 0, 1, 1], [], []>} : vector<8x16xf32>, vector<16x16xf32>, vector<8x16xf32> -> vector<8x16xf32>
    %c0_84 = arith.constant 0 : index
    %c256 = arith.constant 256 : index
    %63 = vector.load %arg10[%c0_84, %c256] : memref<8x288xf32, #tpu.memory_space<vmem>>, vector<8x16xf32>
    tpu.vector_store %arg10[%c0_84, %c256], %62 {strides = array<i32>} : memref<8x288xf32, #tpu.memory_space<vmem>>, vector<8x16xf32>,
    %cst_85 = arith.constant dense<0.000000e+00> : vector<8x256xf32>
    %64 = tpu.matmul %4, %11, %cst_85 {dimension_numbers = #tpu.dot_dimension_numbers<[1], [0], [0], [1], [0, 0, 1, 1], [], []>} : vector<8x4xf32>, vector<4x256xf32>, vector<8x256xf32> -> vector<8x256xf32>
    %65 = vector.broadcast %5 : vector<8x1xf32> to vector<8x256xf32>
    %66 = arith.addf %64, %65 : vector<8x256xf32>
    %c0_86 = arith.constant 0 : index
    %c0_87 = arith.constant 0 : index
    %67 = vector.load %arg10[%c0_86, %c0_87] : memref<8x288xf32, #tpu.memory_space<vmem>>, vector<8x256xf32>
    %c0_88 = arith.constant 0 : index
    %c16_89 = arith.constant 16 : index
    %68 = vector.load %arg10[%c0_88, %c16_89] : memref<8x288xf32, #tpu.memory_space<vmem>>, vector<8x256xf32>
    %c0_90 = arith.constant 0 : index
    %c32_91 = arith.constant 32 : index
    %69 = vector.load %arg10[%c0_90, %c32_91] : memref<8x288xf32, #tpu.memory_space<vmem>>, vector<8x256xf32>
    %70 = tpu.concatenate %67, %68, %69 in 0 : vector<8x256xf32>, vector<8x256xf32>, vector<8x256xf32> -> vector<24x256xf32>
    %cst_92 = arith.constant dense<0.000000e+00> : vector<8x256xf32>
    %71 = tpu.matmul %3, %70, %cst_92 {dimension_numbers = #tpu.dot_dimension_numbers<[1], [0], [0], [1], [0, 0, 1, 1], [], []>} : vector<8x24xf32>, vector<24x256xf32>, vector<8x256xf32> -> vector<8x256xf32>
    %72 = arith.addf %66, %71 : vector<8x256xf32>
    %cst_93 = arith.constant 0.000000e+00 : f32
    %73 = vector.broadcast %cst_93 : f32 to vector<8x256xf32>
    %74 = arith.cmpf oge, %72, %73 : vector<8x256xf32>
    %cst_94 = arith.constant 5.000000e-02 : f32
    %75 = vector.broadcast %cst_94 : f32 to vector<8x256xf32>
    %76 = arith.mulf %75, %72 : vector<8x256xf32>
    %77 = arith.select %74, %72, %76 : vector<8x256xi1>, vector<8x256xf32>
    %c0_95 = arith.constant 0 : index
    %c0_96 = arith.constant 0 : index
    %c0_97 = arith.constant 0 : index
    %78 = vector.load %arg8[%c0_95, %c0_96, %c0_97] : memref<2x8x256xf32, #tpu.memory_space<vmem>>, vector<1x8x256xf32>
    %79 = vector.shape_cast %78 : vector<1x8x256xf32> to vector<8x256xf32>
    %80 = vector.shape_cast %77 : vector<8x256xf32> to vector<1x8x256xf32>
    tpu.vector_store %arg8[%c0_95, %c0_96, %c0_97], %80 {strides = array<i32>} : memref<2x8x256xf32, #tpu.memory_space<vmem>>, vector<1x8x256xf32>,
    %c1 = arith.constant 1 : index
    %c0_98 = arith.constant 0 : index
    %c0_99 = arith.constant 0 : index
    %81 = vector.load %arg1[%c1, %c0_98, %c0_99] : memref<2x4x256xf32, #tpu.memory_space<vmem>>, vector<1x4x256xf32>
    %82 = vector.shape_cast %81 : vector<1x4x256xf32> to vector<4x256xf32>
    %cst_100 = arith.constant dense<0.000000e+00> : vector<8x256xf32>
    %83 = tpu.matmul %1, %82, %cst_100 {dimension_numbers = #tpu.dot_dimension_numbers<[1], [0], [0], [1], [0, 0, 1, 1], [], []>} : vector<8x4xf32>, vector<4x256xf32>, vector<8x256xf32> -> vector<8x256xf32>
    %84 = vector.broadcast %2 : vector<8x1xf32> to vector<8x256xf32>
    %85 = arith.addf %83, %84 : vector<8x256xf32>
    %c0_101 = arith.constant 0 : index
    %c0_102 = arith.constant 0 : index
    %86 = vector.load %arg9[%c0_101, %c0_102] : memref<8x256xf32, #tpu.memory_space<vmem>>, vector<8x256xf32>
    tpu.vector_store %arg9[%c0_101, %c0_102], %85 {strides = array<i32>} : memref<8x256xf32, #tpu.memory_space<vmem>>, vector<8x256xf32>,
    %c0_103 = arith.constant 0 : index
    %c0_104 = arith.constant 0 : index
    %87 = vector.load %arg9[%c0_103, %c0_104] : memref<8x256xf32, #tpu.memory_space<vmem>>, vector<8x16xf32>
    %cst_105 = arith.constant dense<0.000000e+00> : vector<8x16xf32>
    %88 = tpu.matmul %87, %0, %cst_105 {dimension_numbers = #tpu.dot_dimension_numbers<[1], [0], [0], [1], [0, 0, 1, 1], [], []>} : vector<8x16xf32>, vector<16x16xf32>, vector<8x16xf32> -> vector<8x16xf32>
    %c0_106 = arith.constant 0 : index
    %c16_107 = arith.constant 16 : index
    %89 = vector.load %arg10[%c0_106, %c16_107] : memref<8x288xf32, #tpu.memory_space<vmem>>, vector<8x16xf32>
    tpu.vector_store %arg10[%c0_106, %c16_107], %88 {strides = array<i32>} : memref<8x288xf32, #tpu.memory_space<vmem>>, vector<8x16xf32>,
    %c0_108 = arith.constant 0 : index
    %c16_109 = arith.constant 16 : index
    %90 = vector.load %arg9[%c0_108, %c16_109] : memref<8x256xf32, #tpu.memory_space<vmem>>, vector<8x16xf32>
    %cst_110 = arith.constant dense<0.000000e+00> : vector<8x16xf32>
    %91 = tpu.matmul %90, %0, %cst_110 {dimension_numbers = #tpu.dot_dimension_numbers<[1], [0], [0], [1], [0, 0, 1, 1], [], []>} : vector<8x16xf32>, vector<16x16xf32>, vector<8x16xf32> -> vector<8x16xf32>
    %c0_111 = arith.constant 0 : index
    %c32_112 = arith.constant 32 : index
    %92 = vector.load %arg10[%c0_111, %c32_112] : memref<8x288xf32, #tpu.memory_space<vmem>>, vector<8x16xf32>
    tpu.vector_store %arg10[%c0_111, %c32_112], %91 {strides = array<i32>} : memref<8x288xf32, #tpu.memory_space<vmem>>, vector<8x16xf32>,
    %c0_113 = arith.constant 0 : index
    %c32_114 = arith.constant 32 : index
    %93 = vector.load %arg9[%c0_113, %c32_114] : memref<8x256xf32, #tpu.memory_space<vmem>>, vector<8x16xf32>
    %cst_115 = arith.constant dense<0.000000e+00> : vector<8x16xf32>
    %94 = tpu.matmul %93, %0, %cst_115 {dimension_numbers = #tpu.dot_dimension_numbers<[1], [0], [0], [1], [0, 0, 1, 1], [], []>} : vector<8x16xf32>, vector<16x16xf32>, vector<8x16xf32> -> vector<8x16xf32>
    %c0_116 = arith.constant 0 : index
    %c48_117 = arith.constant 48 : index
    %95 = vector.load %arg10[%c0_116, %c48_117] : memref<8x288xf32, #tpu.memory_space<vmem>>, vector<8x16xf32>
    tpu.vector_store %arg10[%c0_116, %c48_117], %94 {strides = array<i32>} : memref<8x288xf32, #tpu.memory_space<vmem>>, vector<8x16xf32>,
    %c0_118 = arith.constant 0 : index
    %c48_119 = arith.constant 48 : index
    %96 = vector.load %arg9[%c0_118, %c48_119] : memref<8x256xf32, #tpu.memory_space<vmem>>, vector<8x16xf32>
    %cst_120 = arith.constant dense<0.000000e+00> : vector<8x16xf32>
    %97 = tpu.matmul %96, %0, %cst_120 {dimension_numbers = #tpu.dot_dimension_numbers<[1], [0], [0], [1], [0, 0, 1, 1], [], []>} : vector<8x16xf32>, vector<16x16xf32>, vector<8x16xf32> -> vector<8x16xf32>
    %c0_121 = arith.constant 0 : index
    %c64_122 = arith.constant 64 : index
    %98 = vector.load %arg10[%c0_121, %c64_122] : memref<8x288xf32, #tpu.memory_space<vmem>>, vector<8x16xf32>
    tpu.vector_store %arg10[%c0_121, %c64_122], %97 {strides = array<i32>} : memref<8x288xf32, #tpu.memory_space<vmem>>, vector<8x16xf32>,
    %c0_123 = arith.constant 0 : index
    %c64_124 = arith.constant 64 : index
    %99 = vector.load %arg9[%c0_123, %c64_124] : memref<8x256xf32, #tpu.memory_space<vmem>>, vector<8x16xf32>
    %cst_125 = arith.constant dense<0.000000e+00> : vector<8x16xf32>
    %100 = tpu.matmul %99, %0, %cst_125 {dimension_numbers = #tpu.dot_dimension_numbers<[1], [0], [0], [1], [0, 0, 1, 1], [], []>} : vector<8x16xf32>, vector<16x16xf32>, vector<8x16xf32> -> vector<8x16xf32>
    %c0_126 = arith.constant 0 : index
    %c80_127 = arith.constant 80 : index
    %101 = vector.load %arg10[%c0_126, %c80_127] : memref<8x288xf32, #tpu.memory_space<vmem>>, vector<8x16xf32>
    tpu.vector_store %arg10[%c0_126, %c80_127], %100 {strides = array<i32>} : memref<8x288xf32, #tpu.memory_space<vmem>>, vector<8x16xf32>,
    %c0_128 = arith.constant 0 : index
    %c80_129 = arith.constant 80 : index
    %102 = vector.load %arg9[%c0_128, %c80_129] : memref<8x256xf32, #tpu.memory_space<vmem>>, vector<8x16xf32>
    %cst_130 = arith.constant dense<0.000000e+00> : vector<8x16xf32>
    %103 = tpu.matmul %102, %0, %cst_130 {dimension_numbers = #tpu.dot_dimension_numbers<[1], [0], [0], [1], [0, 0, 1, 1], [], []>} : vector<8x16xf32>, vector<16x16xf32>, vector<8x16xf32> -> vector<8x16xf32>
    %c0_131 = arith.constant 0 : index
    %c96_132 = arith.constant 96 : index
    %104 = vector.load %arg10[%c0_131, %c96_132] : memref<8x288xf32, #tpu.memory_space<vmem>>, vector<8x16xf32>
    tpu.vector_store %arg10[%c0_131, %c96_132], %103 {strides = array<i32>} : memref<8x288xf32, #tpu.memory_space<vmem>>, vector<8x16xf32>,
    %c0_133 = arith.constant 0 : index
    %c96_134 = arith.constant 96 : index
    %105 = vector.load %arg9[%c0_133, %c96_134] : memref<8x256xf32, #tpu.memory_space<vmem>>, vector<8x16xf32>
    %cst_135 = arith.constant dense<0.000000e+00> : vector<8x16xf32>
    %106 = tpu.matmul %105, %0, %cst_135 {dimension_numbers = #tpu.dot_dimension_numbers<[1], [0], [0], [1], [0, 0, 1, 1], [], []>} : vector<8x16xf32>, vector<16x16xf32>, vector<8x16xf32> -> vector<8x16xf32>
    %c0_136 = arith.constant 0 : index
    %c112_137 = arith.constant 112 : index
    %107 = vector.load %arg10[%c0_136, %c112_137] : memref<8x288xf32, #tpu.memory_space<vmem>>, vector<8x16xf32>
    tpu.vector_store %arg10[%c0_136, %c112_137], %106 {strides = array<i32>} : memref<8x288xf32, #tpu.memory_space<vmem>>, vector<8x16xf32>,
    %c0_138 = arith.constant 0 : index
    %c112_139 = arith.constant 112 : index
    %108 = vector.load %arg9[%c0_138, %c112_139] : memref<8x256xf32, #tpu.memory_space<vmem>>, vector<8x16xf32>
    %cst_140 = arith.constant dense<0.000000e+00> : vector<8x16xf32>
    %109 = tpu.matmul %108, %0, %cst_140 {dimension_numbers = #tpu.dot_dimension_numbers<[1], [0], [0], [1], [0, 0, 1, 1], [], []>} : vector<8x16xf32>, vector<16x16xf32>, vector<8x16xf32> -> vector<8x16xf32>
    %c0_141 = arith.constant 0 : index
    %c128_142 = arith.constant 128 : index
    %110 = vector.load %arg10[%c0_141, %c128_142] : memref<8x288xf32, #tpu.memory_space<vmem>>, vector<8x16xf32>
    tpu.vector_store %arg10[%c0_141, %c128_142], %109 {strides = array<i32>} : memref<8x288xf32, #tpu.memory_space<vmem>>, vector<8x16xf32>,
    %c0_143 = arith.constant 0 : index
    %c128_144 = arith.constant 128 : index
    %111 = vector.load %arg9[%c0_143, %c128_144] : memref<8x256xf32, #tpu.memory_space<vmem>>, vector<8x16xf32>
    %cst_145 = arith.constant dense<0.000000e+00> : vector<8x16xf32>
    %112 = tpu.matmul %111, %0, %cst_145 {dimension_numbers = #tpu.dot_dimension_numbers<[1], [0], [0], [1], [0, 0, 1, 1], [], []>} : vector<8x16xf32>, vector<16x16xf32>, vector<8x16xf32> -> vector<8x16xf32>
    %c0_146 = arith.constant 0 : index
    %c144_147 = arith.constant 144 : index
    %113 = vector.load %arg10[%c0_146, %c144_147] : memref<8x288xf32, #tpu.memory_space<vmem>>, vector<8x16xf32>
    tpu.vector_store %arg10[%c0_146, %c144_147], %112 {strides = array<i32>} : memref<8x288xf32, #tpu.memory_space<vmem>>, vector<8x16xf32>,
    %c0_148 = arith.constant 0 : index
    %c144_149 = arith.constant 144 : index
    %114 = vector.load %arg9[%c0_148, %c144_149] : memref<8x256xf32, #tpu.memory_space<vmem>>, vector<8x16xf32>
    %cst_150 = arith.constant dense<0.000000e+00> : vector<8x16xf32>
    %115 = tpu.matmul %114, %0, %cst_150 {dimension_numbers = #tpu.dot_dimension_numbers<[1], [0], [0], [1], [0, 0, 1, 1], [], []>} : vector<8x16xf32>, vector<16x16xf32>, vector<8x16xf32> -> vector<8x16xf32>
    %c0_151 = arith.constant 0 : index
    %c160_152 = arith.constant 160 : index
    %116 = vector.load %arg10[%c0_151, %c160_152] : memref<8x288xf32, #tpu.memory_space<vmem>>, vector<8x16xf32>
    tpu.vector_store %arg10[%c0_151, %c160_152], %115 {strides = array<i32>} : memref<8x288xf32, #tpu.memory_space<vmem>>, vector<8x16xf32>,
    %c0_153 = arith.constant 0 : index
    %c160_154 = arith.constant 160 : index
    %117 = vector.load %arg9[%c0_153, %c160_154] : memref<8x256xf32, #tpu.memory_space<vmem>>, vector<8x16xf32>
    %cst_155 = arith.constant dense<0.000000e+00> : vector<8x16xf32>
    %118 = tpu.matmul %117, %0, %cst_155 {dimension_numbers = #tpu.dot_dimension_numbers<[1], [0], [0], [1], [0, 0, 1, 1], [], []>} : vector<8x16xf32>, vector<16x16xf32>, vector<8x16xf32> -> vector<8x16xf32>
    %c0_156 = arith.constant 0 : index
    %c176_157 = arith.constant 176 : index
    %119 = vector.load %arg10[%c0_156, %c176_157] : memref<8x288xf32, #tpu.memory_space<vmem>>, vector<8x16xf32>
    tpu.vector_store %arg10[%c0_156, %c176_157], %118 {strides = array<i32>} : memref<8x288xf32, #tpu.memory_space<vmem>>, vector<8x16xf32>,
    %c0_158 = arith.constant 0 : index
    %c176_159 = arith.constant 176 : index
    %120 = vector.load %arg9[%c0_158, %c176_159] : memref<8x256xf32, #tpu.memory_space<vmem>>, vector<8x16xf32>
    %cst_160 = arith.constant dense<0.000000e+00> : vector<8x16xf32>
    %121 = tpu.matmul %120, %0, %cst_160 {dimension_numbers = #tpu.dot_dimension_numbers<[1], [0], [0], [1], [0, 0, 1, 1], [], []>} : vector<8x16xf32>, vector<16x16xf32>, vector<8x16xf32> -> vector<8x16xf32>
    %c0_161 = arith.constant 0 : index
    %c192_162 = arith.constant 192 : index
    %122 = vector.load %arg10[%c0_161, %c192_162] : memref<8x288xf32, #tpu.memory_space<vmem>>, vector<8x16xf32>
    tpu.vector_store %arg10[%c0_161, %c192_162], %121 {strides = array<i32>} : memref<8x288xf32, #tpu.memory_space<vmem>>, vector<8x16xf32>,
    %c0_163 = arith.constant 0 : index
    %c192_164 = arith.constant 192 : index
    %123 = vector.load %arg9[%c0_163, %c192_164] : memref<8x256xf32, #tpu.memory_space<vmem>>, vector<8x16xf32>
    %cst_165 = arith.constant dense<0.000000e+00> : vector<8x16xf32>
    %124 = tpu.matmul %123, %0, %cst_165 {dimension_numbers = #tpu.dot_dimension_numbers<[1], [0], [0], [1], [0, 0, 1, 1], [], []>} : vector<8x16xf32>, vector<16x16xf32>, vector<8x16xf32> -> vector<8x16xf32>
    %c0_166 = arith.constant 0 : index
    %c208_167 = arith.constant 208 : index
    %125 = vector.load %arg10[%c0_166, %c208_167] : memref<8x288xf32, #tpu.memory_space<vmem>>, vector<8x16xf32>
    tpu.vector_store %arg10[%c0_166, %c208_167], %124 {strides = array<i32>} : memref<8x288xf32, #tpu.memory_space<vmem>>, vector<8x16xf32>,
    %c0_168 = arith.constant 0 : index
    %c208_169 = arith.constant 208 : index
    %126 = vector.load %arg9[%c0_168, %c208_169] : memref<8x256xf32, #tpu.memory_space<vmem>>, vector<8x16xf32>
    %cst_170 = arith.constant dense<0.000000e+00> : vector<8x16xf32>
    %127 = tpu.matmul %126, %0, %cst_170 {dimension_numbers = #tpu.dot_dimension_numbers<[1], [0], [0], [1], [0, 0, 1, 1], [], []>} : vector<8x16xf32>, vector<16x16xf32>, vector<8x16xf32> -> vector<8x16xf32>
    %c0_171 = arith.constant 0 : index
    %c224_172 = arith.constant 224 : index
    %128 = vector.load %arg10[%c0_171, %c224_172] : memref<8x288xf32, #tpu.memory_space<vmem>>, vector<8x16xf32>
    tpu.vector_store %arg10[%c0_171, %c224_172], %127 {strides = array<i32>} : memref<8x288xf32, #tpu.memory_space<vmem>>, vector<8x16xf32>,
    %c0_173 = arith.constant 0 : index
    %c224_174 = arith.constant 224 : index
    %129 = vector.load %arg9[%c0_173, %c224_174] : memref<8x256xf32, #tpu.memory_space<vmem>>, vector<8x16xf32>
    %cst_175 = arith.constant dense<0.000000e+00> : vector<8x16xf32>
    %130 = tpu.matmul %129, %0, %cst_175 {dimension_numbers = #tpu.dot_dimension_numbers<[1], [0], [0], [1], [0, 0, 1, 1], [], []>} : vector<8x16xf32>, vector<16x16xf32>, vector<8x16xf32> -> vector<8x16xf32>
    %c0_176 = arith.constant 0 : index
    %c240_177 = arith.constant 240 : index
    %131 = vector.load %arg10[%c0_176, %c240_177] : memref<8x288xf32, #tpu.memory_space<vmem>>, vector<8x16xf32>
    tpu.vector_store %arg10[%c0_176, %c240_177], %130 {strides = array<i32>} : memref<8x288xf32, #tpu.memory_space<vmem>>, vector<8x16xf32>,
    %c0_178 = arith.constant 0 : index
    %c240_179 = arith.constant 240 : index
    %132 = vector.load %arg9[%c0_178, %c240_179] : memref<8x256xf32, #tpu.memory_space<vmem>>, vector<8x16xf32>
    %cst_180 = arith.constant dense<0.000000e+00> : vector<8x16xf32>
    %133 = tpu.matmul %132, %0, %cst_180 {dimension_numbers = #tpu.dot_dimension_numbers<[1], [0], [0], [1], [0, 0, 1, 1], [], []>} : vector<8x16xf32>, vector<16x16xf32>, vector<8x16xf32> -> vector<8x16xf32>
    %c0_181 = arith.constant 0 : index
    %c256_182 = arith.constant 256 : index
    %134 = vector.load %arg10[%c0_181, %c256_182] : memref<8x288xf32, #tpu.memory_space<vmem>>, vector<8x16xf32>
    tpu.vector_store %arg10[%c0_181, %c256_182], %133 {strides = array<i32>} : memref<8x288xf32, #tpu.memory_space<vmem>>, vector<8x16xf32>,
    %cst_183 = arith.constant dense<0.000000e+00> : vector<8x256xf32>
    %135 = tpu.matmul %4, %82, %cst_183 {dimension_numbers = #tpu.dot_dimension_numbers<[1], [0], [0], [1], [0, 0, 1, 1], [], []>} : vector<8x4xf32>, vector<4x256xf32>, vector<8x256xf32> -> vector<8x256xf32>
    %136 = vector.broadcast %5 : vector<8x1xf32> to vector<8x256xf32>
    %137 = arith.addf %135, %136 : vector<8x256xf32>
    %c0_184 = arith.constant 0 : index
    %c0_185 = arith.constant 0 : index
    %138 = vector.load %arg10[%c0_184, %c0_185] : memref<8x288xf32, #tpu.memory_space<vmem>>, vector<8x256xf32>
    %c0_186 = arith.constant 0 : index
    %c16_187 = arith.constant 16 : index
    %139 = vector.load %arg10[%c0_186, %c16_187] : memref<8x288xf32, #tpu.memory_space<vmem>>, vector<8x256xf32>
    %c0_188 = arith.constant 0 : index
    %c32_189 = arith.constant 32 : index
    %140 = vector.load %arg10[%c0_188, %c32_189] : memref<8x288xf32, #tpu.memory_space<vmem>>, vector<8x256xf32>
    %141 = tpu.concatenate %138, %139, %140 in 0 : vector<8x256xf32>, vector<8x256xf32>, vector<8x256xf32> -> vector<24x256xf32>
    %cst_190 = arith.constant dense<0.000000e+00> : vector<8x256xf32>
    %142 = tpu.matmul %3, %141, %cst_190 {dimension_numbers = #tpu.dot_dimension_numbers<[1], [0], [0], [1], [0, 0, 1, 1], [], []>} : vector<8x24xf32>, vector<24x256xf32>, vector<8x256xf32> -> vector<8x256xf32>
    %143 = arith.addf %137, %142 : vector<8x256xf32>
    %cst_191 = arith.constant 0.000000e+00 : f32
    %144 = vector.broadcast %cst_191 : f32 to vector<8x256xf32>
    %145 = arith.cmpf oge, %143, %144 : vector<8x256xf32>
    %cst_192 = arith.constant 5.000000e-02 : f32
    %146 = vector.broadcast %cst_192 : f32 to vector<8x256xf32>
    %147 = arith.mulf %146, %143 : vector<8x256xf32>
    %148 = arith.select %145, %143, %147 : vector<8x256xi1>, vector<8x256xf32>
    %c1_193 = arith.constant 1 : index
    %c0_194 = arith.constant 0 : index
    %c0_195 = arith.constant 0 : index
    %149 = vector.load %arg8[%c1_193, %c0_194, %c0_195] : memref<2x8x256xf32, #tpu.memory_space<vmem>>, vector<1x8x256xf32>
    %150 = vector.shape_cast %149 : vector<1x8x256xf32> to vector<8x256xf32>
    %151 = vector.shape_cast %148 : vector<8x256xf32> to vector<1x8x256xf32>
    tpu.vector_store %arg8[%c1_193, %c0_194, %c0_195], %151 {strides = array<i32>} : memref<2x8x256xf32, #tpu.memory_space<vmem>>, vector<1x8x256xf32>,
    return
  }
  func.func @transform_0(%arg0: i32) -> (i32, i32, i32) {
    %c0_i32 = arith.constant 0 : i32
    %c0_i32_0 = arith.constant 0 : i32
    %c0_i32_1 = arith.constant 0 : i32
    %c0_i32_2 = arith.constant 0 : i32
    return %c0_i32, %c0_i32_0, %c0_i32_1 : i32, i32, i32
  }
  func.func @transform_1(%arg0: i32) -> (i32, i32) {
    %c0_i32 = arith.constant 0 : i32
    %c0_i32_0 = arith.constant 0 : i32
    %c0_i32_1 = arith.constant 0 : i32
    return %c0_i32, %c0_i32_0 : i32, i32
  }
  func.func @transform_2(%arg0: i32) -> (i32, i32) {
    %c0_i32 = arith.constant 0 : i32
    %c0_i32_0 = arith.constant 0 : i32
    %c0_i32_1 = arith.constant 0 : i32
    return %c0_i32, %c0_i32_0 : i32, i32
  }
  func.func @transform_3(%arg0: i32) -> (i32, i32) {
    %c0_i32 = arith.constant 0 : i32
    %c0_i32_0 = arith.constant 0 : i32
    %c0_i32_1 = arith.constant 0 : i32
    return %c0_i32, %c0_i32_0 : i32, i32
  }
  func.func @transform_4(%arg0: i32) -> (i32, i32) {
    %c0_i32 = arith.constant 0 : i32
    %c0_i32_0 = arith.constant 0 : i32
    %c0_i32_1 = arith.constant 0 : i32
    return %c0_i32, %c0_i32_0 : i32, i32
  }
  func.func @transform_5(%arg0: i32) -> (i32, i32) {
    %c0_i32 = arith.constant 0 : i32
    %c0_i32_0 = arith.constant 0 : i32
    %c0_i32_1 = arith.constant 0 : i32
    return %c0_i32, %c0_i32_0 : i32, i32
  }
  func.func @transform_6(%arg0: i32) -> (i32, i32) {
    %c0_i32 = arith.constant 0 : i32
    %c0_i32_0 = arith.constant 0 : i32
    %c0_i32_1 = arith.constant 0 : i32
    return %c0_i32, %c0_i32_0 : i32, i32
  }
  func.func @transform_7(%arg0: i32) -> (i32, i32, i32) {
    %c0_i32 = arith.constant 0 : i32
    %c0_i32_0 = arith.constant 0 : i32
    %c0_i32_1 = arith.constant 0 : i32
    %c0_i32_2 = arith.constant 0 : i32
    return %c0_i32, %c0_i32_0, %c0_i32_1 : i32, i32, i32
  }
}

</mosaic_0001>

<llo_original>
// kernel: tpu_custom_call.1
$region0: #{tpu_custom_call.1}
  #allocation0 [shape = 'u32[]', space=smem, size = 0x4, offset = 0x4, fixed_abs, tag = 'smem constant byte address 0x4 - core index']
  #allocation1 [shape = 'u32[144,128]{1,0:T(1,128)}', space=vmem, size = 0x12000, scoped, tag = 'internal scratch']
  #allocation2 [shape = 'f32[8,256]{1,0:T(8,128)}', space=vmem, size = 0x2000, scoped, tag = 'scratch operand']
  #allocation3 [shape = 'f32[8,288]{1,0:T(8,128)}', space=vmem, size = 0x3000, scoped, tag = 'scratch operand']
  %s0 = inlined_call_operand.vmem [shape: f32[2,4,256], index: 0, kind: input, shape index: {}]
  %s1 = inlined_call_operand.vmem [shape: f32[16,16], index: 1, kind: input, shape index: {}]
  %s2 = inlined_call_operand.vmem [shape: f32[8,4], index: 2, kind: input, shape index: {}]
  %s3 = inlined_call_operand.vmem [shape: f32[8,1], index: 3, kind: input, shape index: {}]
  %s4 = inlined_call_operand.vmem [shape: f32[8,24], index: 4, kind: input, shape index: {}]
  %s5 = inlined_call_operand.vmem [shape: f32[8,4], index: 5, kind: input, shape index: {}]
  %s6 = inlined_call_operand.vmem [shape: f32[8,1], index: 6, kind: input, shape index: {}]
  %s7 = inlined_call_operand.hbm [shape: f32[2,8,256], index: 7, kind: output, shape index: {}]
  %s8 = sld [smem:[#allocation0]]
  $region38: #{tpu_custom_call.1} parent=0
    _
  %s10 = ssub.s32 1, %s8
  %s11 = scalar_select 0, %s10, %s8
  $region1: #{tpu_custom_call.1} parent=0
    #allocation4 [shape = 'u8[16384]{0}', space=vmem, size = 0x4000, scoped, tag = 'output window, operand 0, single buffered']
    #allocation5 [shape = 's32[1]{0}', space=sflag, size = 0x4, scoped, tag = 'scoped memory for tpu_custom_call.1']
    %12 = vsyncpa [#allocation5], 0
    // Predicated region
    $region2: #{tpu_custom_call.1} parent=1 // pred_check
      _
    $region3: #{tpu_custom_call.1} parent=1 // pred_check_branch
      %14 = sbr.rel (0) target = $region5
    $region4: #{tpu_custom_call.1} parent=1 // pred_region
      _
    $region5: #{tpu_custom_call.1} parent=1 // pred_fallthru
      _
    // Predicated region
    $region6: #{tpu_custom_call.1} parent=1 // pred_check
      _
    $region7: #{tpu_custom_call.1} parent=1 // pred_check_branch
      %16 = sbr.rel (0) target = $region9
    $region8: #{tpu_custom_call.1} parent=1 // pred_region
      _
    $region9: #{tpu_custom_call.1} parent=1 // pred_fallthru
      _
    // Predicated region
    $region10: #{tpu_custom_call.1} parent=1 // pred_check
      _
    $region11: #{tpu_custom_call.1} parent=1 // pred_check_branch
      %18 = sbr.rel (0) target = $region13
    $region12: #{tpu_custom_call.1} parent=1 // pred_region
      _
    $region13: #{tpu_custom_call.1} parent=1 // pred_fallthru
      _
    // Predicated region
    $region14: #{tpu_custom_call.1} parent=1 // pred_check
      _
    $region15: #{tpu_custom_call.1} parent=1 // pred_check_branch
      %20 = sbr.rel (0) target = $region17
    $region16: #{tpu_custom_call.1} parent=1 // pred_region
      _
    $region17: #{tpu_custom_call.1} parent=1 // pred_fallthru
      _
    // Predicated region
    $region18: #{tpu_custom_call.1} parent=1 // pred_check
      _
    $region19: #{tpu_custom_call.1} parent=1 // pred_check_branch
      %22 = sbr.rel (0) target = $region21
    $region20: #{tpu_custom_call.1} parent=1 // pred_region
      _
    $region21: #{tpu_custom_call.1} parent=1 // pred_fallthru
      _
    // Predicated region
    $region22: #{tpu_custom_call.1} parent=1 // pred_check
      _
    $region23: #{tpu_custom_call.1} parent=1 // pred_check_branch
      %24 = sbr.rel (0) target = $region25
    $region24: #{tpu_custom_call.1} parent=1 // pred_region
      _
    $region25: #{tpu_custom_call.1} parent=1 // pred_fallthru
      _
    // Predicated region
    $region26: #{tpu_custom_call.1} parent=1 // pred_check
      _
    $region27: #{tpu_custom_call.1} parent=1 // pred_check_branch
      %26 = sbr.rel (0) target = $region29
    $region28: #{tpu_custom_call.1} parent=1 // pred_region
      _
    $region29: #{tpu_custom_call.1} parent=1 // pred_fallthru
      _
    %v27 = vld [vmem:[%s1] sm:$0xff]
    %v28 = vld [vmem:[%s1 + $0x8] sm:$0xff]
    %v29 = vld [vmem:[%s2] sm:$0xff]
    %v30 = vld [vmem:[%s3] sm:$0xff]
    %v31 = vld [vmem:[%s4] sm:$0xff]
    %v32 = vld [vmem:[%s5] sm:$0xff]
    %v33 = vld [vmem:[%s6] sm:$0xff]
    %vm34 = vcmask 130048
    %35 = vst.msk [vmem:[#allocation3] sm:$0xff] %vm34, 0.0
    %vm36 = vcmask 261248
    %37 = vst.msk [vmem:[#allocation3 + $0x10] sm:$0xff] %vm36, 0.0
    %v38 = vld [vmem:[%s0] sm:$0xff]
    %40 = vset.pattern.permute.xlu0 0
    %41 = vperm.xlu0 %40, %v30
    %v42 = vpop.permute.xlu0 %41
    %v45 = vcombine.high %v38, %v38
    %vm46 = vcmask 31744
    %v48 = vsel %vm46, %v29, 0
    %vm50 = vcmask 1043456
    %v51 = vsel %vm50, %v38, 0
    %v53 = vsel %vm50, %v45, 0
    %55 = vmatprep.subr.mxu0 %v53
    %56 = vmatpush1.msra.mxu0 %v51
    %57 = vmatprep.subr.mxu0 0.0
    %58 = vmatpush1.msra.mxu0 0.0
    %59 = vmatprep.subr.mxu0 0.0
    %60 = vmatpush1.msra.mxu0 0.0
    %61 = vmatprep.subr.mxu0 0.0
    %62 = vmatpush1.msra.mxu0 0.0
    %63 = vmatprep.subr.mxu0 0.0
    %64 = vmatpush1.msra.mxu0 0.0
    %65 = vmatprep.subr.mxu0 0.0
    %66 = vmatpush1.msra.mxu0 0.0
    %67 = vmatprep.subr.mxu0 0.0
    %68 = vmatpush1.msra.mxu0 0.0
    %69 = vmatprep.subr.mxu0 0.0
    %70 = vmatpush1.msra.mxu0 0.0
    %71 = vmatprep.subr.mxu0 0.0
    %72 = vmatpush1.msra.mxu0 0.0
    %73 = vmatprep.subr.mxu0 0.0
    %74 = vmatpush1.msra.mxu0 0.0
    %75 = vmatprep.subr.mxu0 0.0
    %76 = vmatpush1.msra.mxu0 0.0
    %77 = vmatprep.subr.mxu0 0.0
    %78 = vmatpush1.msra.mxu0 0.0
    %79 = vmatprep.subr.mxu0 0.0
    %80 = vmatpush1.msra.mxu0 0.0
    %81 = vmatprep.subr.mxu0 0.0
    %82 = vmatpush1.msra.mxu0 0.0
    %83 = vmatprep.subr.mxu0 0.0
    %84 = vmatpush1.msra.mxu0 0.0
    %85 = vmatprep.subr.mxu0 0.0
    %86 = vmatpush1.msra.mxu0 0.0
    %87 = vmatprep.subr.mxu0 0.0
    %88 = vmatpush1.msra.mxu0 0.0
    %89 = vmatprep.subr.mxu0 0.0
    %90 = vmatpush1.msra.mxu0 0.0
    %91 = vmatprep.subr.mxu0 0.0
    %92 = vmatpush1.msra.mxu0 0.0
    %93 = vmatprep.subr.mxu0 0.0
    %94 = vmatpush1.msra.mxu0 0.0
    %95 = vmatprep.subr.mxu0 0.0
    %96 = vmatpush1.msra.mxu0 0.0
    %97 = vmatprep.subr.mxu0 0.0
    %98 = vmatpush1.msra.mxu0 0.0
    %99 = vmatprep.subr.mxu0 0.0
    %100 = vmatpush1.msra.mxu0 0.0
    %101 = vmatprep.subr.mxu0 0.0
    %102 = vmatpush1.msra.mxu0 0.0
    %103 = vmatprep.subr.mxu0 0.0
    %104 = vmatpush1.msra.mxu0 0.0
    %105 = vmatprep.subr.mxu0 0.0
    %106 = vmatpush1.msra.mxu0 0.0
    %107 = vmatprep.subr.mxu0 0.0
    %108 = vmatpush1.msra.mxu0 0.0
    %109 = vmatprep.subr.mxu0 0.0
    %110 = vmatpush1.msra.mxu0 0.0
    %111 = vmatprep.subr.mxu0 0.0
    %112 = vmatpush1.msra.mxu0 0.0
    %113 = vmatprep.subr.mxu0 0.0
    %114 = vmatpush1.msra.mxu0 0.0
    %115 = vmatprep.subr.mxu0 0.0
    %116 = vmatpush1.msra.mxu0 0.0
    %117 = vmatprep.subr.mxu0 0.0
    %118 = vmatpush1.msra.mxu0 0.0
    %119 = vmatprep.mubr.f32.mxu0 0.0
    %120 = vmatmul.mubr.f32.gmra.mrb[0].mxu0 %v48
    %v121 = vpop.f32.mrb[0].mxu0
    %v122 = vadd.f32 %v42, %v121
    %v123 = vpop.f32.mrb[0].mxu0
    %v124 = vadd.f32 %v42, %v123
    %125 = vdwg.mxu0
    %126 = vst [vmem:[#allocation2] sm:$0xff] %v122
    %127 = vst [vmem:[#allocation2 + $0x8] sm:$0xff] %v124
    %v128 = vld [vmem:[#allocation2] sm:$0xff]
    %v130 = vsel %vm34, %v128, 0
    %132 = vmatprep.subr.mxu0 0.0
    %133 = vmatpush1.msra.mxu0 %v27
    %134 = vmatprep.subr.mxu0 0.0
    %135 = vmatpush1.msra.mxu0 %v28
    %136 = vmatprep.subr.mxu0 0.0
    %137 = vmatpush1.msra.mxu0 0.0
    %138 = vmatprep.subr.mxu0 0.0
    %139 = vmatpush1.msra.mxu0 0.0
    %140 = vmatprep.subr.mxu0 0.0
    %141 = vmatpush1.msra.mxu0 0.0
    %142 = vmatprep.subr.mxu0 0.0
    %143 = vmatpush1.msra.mxu0 0.0
    %144 = vmatprep.subr.mxu0 0.0
    %145 = vmatpush1.msra.mxu0 0.0
    %146 = vmatprep.subr.mxu0 0.0
    %147 = vmatpush1.msra.mxu0 0.0
    %148 = vmatprep.subr.mxu0 0.0
    %149 = vmatpush1.msra.mxu0 0.0
    %150 = vmatprep.subr.mxu0 0.0
    %151 = vmatpush1.msra.mxu0 0.0
    %152 = vmatprep.subr.mxu0 0.0
    %153 = vmatpush1.msra.mxu0 0.0
    %154 = vmatprep.subr.mxu0 0.0
    %155 = vmatpush1.msra.mxu0 0.0
    %156 = vmatprep.subr.mxu0 0.0
    %157 = vmatpush1.msra.mxu0 0.0
    %158 = vmatprep.subr.mxu0 0.0
    %159 = vmatpush1.msra.mxu0 0.0
    %160 = vmatprep.subr.mxu0 0.0
    %161 = vmatpush1.msra.mxu0 0.0
    %162 = vmatprep.subr.mxu0 0.0
    %163 = vmatpush1.msra.mxu0 0.0
    %164 = vmatprep.subr.mxu0 0.0
    %165 = vmatpush1.msra.mxu0 0.0
    %166 = vmatprep.subr.mxu0 0.0
    %167 = vmatpush1.msra.mxu0 0.0
    %168 = vmatprep.subr.mxu0 0.0
    %169 = vmatpush1.msra.mxu0 0.0
    %170 = vmatprep.subr.mxu0 0.0
    %171 = vmatpush1.msra.mxu0 0.0
    %172 = vmatprep.subr.mxu0 0.0
    %173 = vmatpush1.msra.mxu0 0.0
    %174 = vmatprep.subr.mxu0 0.0
    %175 = vmatpush1.msra.mxu0 0.0
    %176 = vmatprep.subr.mxu0 0.0
    %177 = vmatpush1.msra.mxu0 0.0
    %178 = vmatprep.subr.mxu0 0.0
    %179 = vmatpush1.msra.mxu0 0.0
    %180 = vmatprep.subr.mxu0 0.0
    %181 = vmatpush1.msra.mxu0 0.0
    %182 = vmatprep.subr.mxu0 0.0
    %183 = vmatpush1.msra.mxu0 0.0
    %184 = vmatprep.subr.mxu0 0.0
    %185 = vmatpush1.msra.mxu0 0.0
    %186 = vmatprep.subr.mxu0 0.0
    %187 = vmatpush1.msra.mxu0 0.0
    %188 = vmatprep.subr.mxu0 0.0
    %189 = vmatpush1.msra.mxu0 0.0
    %190 = vmatprep.subr.mxu0 0.0
    %191 = vmatpush1.msra.mxu0 0.0
    %192 = vmatprep.subr.mxu0 0.0
    %193 = vmatpush1.msra.mxu0 0.0
    %194 = vmatprep.subr.mxu0 0.0
    %195 = vmatpush1.msra.mxu0 0.0
    %196 = vmatprep.mubr.f32.mxu0 0.0
    %197 = vmatmul.mubr.f32.gmra.mrb[0].mxu0 %v130
    %v198 = vpop.f32.mrb[0].mxu0
    %v199 = vadd.f32 0.0, %v198
    %v200 = vpop.f32.mrb[0].mxu0
    %201 = vdwg.mxu0
    %203 = vrot.lane.b32.xlu0 %v199, 16
    %v204 = vpop.permute.xlu0 %203
    %206 = vst.msk [vmem:[#allocation3] sm:$0xff] %vm36, %v204
    %v207 = vld [vmem:[#allocation2] sm:$0xff]
    %209 = vrot.lane.b32.xlu0 %v207, 112
    %v210 = vpop.permute.xlu0 %209
    %v211 = vsel %vm34, %v210, 0
    %213 = vmatprep.subr.mxu0 0.0
    %214 = vmatpush1.msra.mxu0 %v27
    %215 = vmatprep.subr.mxu0 0.0
    %216 = vmatpush1.msra.mxu0 %v28
    %217 = vmatprep.subr.mxu0 0.0
    %218 = vmatpush1.msra.mxu0 0.0
    %219 = vmatprep.subr.mxu0 0.0
    %220 = vmatpush1.msra.mxu0 0.0
    %221 = vmatprep.subr.mxu0 0.0
    %222 = vmatpush1.msra.mxu0 0.0
    %223 = vmatprep.subr.mxu0 0.0
    %224 = vmatpush1.msra.mxu0 0.0
    %225 = vmatprep.subr.mxu0 0.0
    %226 = vmatpush1.msra.mxu0 0.0
    %227 = vmatprep.subr.mxu0 0.0
    %228 = vmatpush1.msra.mxu0 0.0
    %229 = vmatprep.subr.mxu0 0.0
    %230 = vmatpush1.msra.mxu0 0.0
    %231 = vmatprep.subr.mxu0 0.0
    %232 = vmatpush1.msra.mxu0 0.0
    %233 = vmatprep.subr.mxu0 0.0
    %234 = vmatpush1.msra.mxu0 0.0
    %235 = vmatprep.subr.mxu0 0.0
    %236 = vmatpush1.msra.mxu0 0.0
    %237 = vmatprep.subr.mxu0 0.0
    %238 = vmatpush1.msra.mxu0 0.0
    %239 = vmatprep.subr.mxu0 0.0
    %240 = vmatpush1.msra.mxu0 0.0
    %241 = vmatprep.subr.mxu0 0.0
    %242 = vmatpush1.msra.mxu0 0.0
    %243 = vmatprep.subr.mxu0 0.0
    %244 = vmatpush1.msra.mxu0 0.0
    %245 = vmatprep.subr.mxu0 0.0
    %246 = vmatpush1.msra.mxu0 0.0
    %247 = vmatprep.subr.mxu0 0.0
    %248 = vmatpush1.msra.mxu0 0.0
    %249 = vmatprep.subr.mxu0 0.0
    %250 = vmatpush1.msra.mxu0 0.0
    %251 = vmatprep.subr.mxu0 0.0
    %252 = vmatpush1.msra.mxu0 0.0
    %253 = vmatprep.subr.mxu0 0.0
    %254 = vmatpush1.msra.mxu0 0.0
    %255 = vmatprep.subr.mxu0 0.0
    %256 = vmatpush1.msra.mxu0 0.0
    %257 = vmatprep.subr.mxu0 0.0
    %258 = vmatpush1.msra.mxu0 0.0
    %259 = vmatprep.subr.mxu0 0.0
    %260 = vmatpush1.msra.mxu0 0.0
    %261 = vmatprep.subr.mxu0 0.0
    %262 = vmatpush1.msra.mxu0 0.0
    %263 = vmatprep.subr.mxu0 0.0
    %264 = vmatpush1.msra.mxu0 0.0
    %265 = vmatprep.subr.mxu0 0.0
    %266 = vmatpush1.msra.mxu0 0.0
    %267 = vmatprep.subr.mxu0 0.0
    %268 = vmatpush1.msra.mxu0 0.0
    %269 = vmatprep.subr.mxu0 0.0
    %270 = vmatpush1.msra.mxu0 0.0
    %271 = vmatprep.subr.mxu0 0.0
    %272 = vmatpush1.msra.mxu0 0.0
    %273 = vmatprep.subr.mxu0 0.0
    %274 = vmatpush1.msra.mxu0 0.0
    %275 = vmatprep.subr.mxu0 0.0
    %276 = vmatpush1.msra.mxu0 0.0
    %277 = vmatprep.mubr.f32.mxu0 0.0
    %278 = vmatmul.mubr.f32.gmra.mrb[0].mxu0 %v211
    %v279 = vpop.f32.mrb[0].mxu0
    %v280 = vadd.f32 0.0, %v279
    %v281 = vpop.f32.mrb[0].mxu0
    %282 = vdwg.mxu0
    %284 = vrot.lane.b32.xlu0 %v280, 32
    %v285 = vpop.permute.xlu0 %284
    %vm287 = vcmask 392448
    %288 = vst.msk [vmem:[#allocation3] sm:$0xff] %vm287, %v285
    %v289 = vld [vmem:[#allocation2] sm:$0xff]
    %291 = vrot.lane.b32.xlu0 %v289, 96
    %v292 = vpop.permute.xlu0 %291
    %v293 = vsel %vm34, %v292, 0
    %295 = vmatprep.subr.mxu0 0.0
    %296 = vmatpush1.msra.mxu0 %v27
    %297 = vmatprep.subr.mxu0 0.0
    %298 = vmatpush1.msra.mxu0 %v28
    %299 = vmatprep.subr.mxu0 0.0
    %300 = vmatpush1.msra.mxu0 0.0
    %301 = vmatprep.subr.mxu0 0.0
    %302 = vmatpush1.msra.mxu0 0.0
    %303 = vmatprep.subr.mxu0 0.0
    %304 = vmatpush1.msra.mxu0 0.0
    %305 = vmatprep.subr.mxu0 0.0
    %306 = vmatpush1.msra.mxu0 0.0
    %307 = vmatprep.subr.mxu0 0.0
    %308 = vmatpush1.msra.mxu0 0.0
    %309 = vmatprep.subr.mxu0 0.0
    %310 = vmatpush1.msra.mxu0 0.0
    %311 = vmatprep.subr.mxu0 0.0
    %312 = vmatpush1.msra.mxu0 0.0
    %313 = vmatprep.subr.mxu0 0.0
    %314 = vmatpush1.msra.mxu0 0.0
    %315 = vmatprep.subr.mxu0 0.0
    %316 = vmatpush1.msra.mxu0 0.0
    %317 = vmatprep.subr.mxu0 0.0
    %318 = vmatpush1.msra.mxu0 0.0
    %319 = vmatprep.subr.mxu0 0.0
    %320 = vmatpush1.msra.mxu0 0.0
    %321 = vmatprep.subr.mxu0 0.0
    %322 = vmatpush1.msra.mxu0 0.0
    %323 = vmatprep.subr.mxu0 0.0
    %324 = vmatpush1.msra.mxu0 0.0
    %325 = vmatprep.subr.mxu0 0.0
    %326 = vmatpush1.msra.mxu0 0.0
    %327 = vmatprep.subr.mxu0 0.0
    %328 = vmatpush1.msra.mxu0 0.0
    %329 = vmatprep.subr.mxu0 0.0
    %330 = vmatpush1.msra.mxu0 0.0
    %331 = vmatprep.subr.mxu0 0.0
    %332 = vmatpush1.msra.mxu0 0.0
    %333 = vmatprep.subr.mxu0 0.0
    %334 = vmatpush1.msra.mxu0 0.0
    %335 = vmatprep.subr.mxu0 0.0
    %336 = vmatpush1.msra.mxu0 0.0
    %337 = vmatprep.subr.mxu0 0.0
    %338 = vmatpush1.msra.mxu0 0.0
    %339 = vmatprep.subr.mxu0 0.0
    %340 = vmatpush1.msra.mxu0 0.0
    %341 = vmatprep.subr.mxu0 0.0
    %342 = vmatpush1.msra.mxu0 0.0
    %343 = vmatprep.subr.mxu0 0.0
    %344 = vmatpush1.msra.mxu0 0.0
    %345 = vmatprep.subr.mxu0 0.0
    %346 = vmatpush1.msra.mxu0 0.0
    %347 = vmatprep.subr.mxu0 0.0
    %348 = vmatpush1.msra.mxu0 0.0
    %349 = vmatprep.subr.mxu0 0.0
    %350 = vmatpush1.msra.mxu0 0.0
    %351 = vmatprep.subr.mxu0 0.0
    %352 = vmatpush1.msra.mxu0 0.0
    %353 = vmatprep.subr.mxu0 0.0
    %354 = vmatpush1.msra.mxu0 0.0
    %355 = vmatprep.subr.mxu0 0.0
    %356 = vmatpush1.msra.mxu0 0.0
    %357 = vmatprep.subr.mxu0 0.0
    %358 = vmatpush1.msra.mxu0 0.0
    %359 = vmatprep.mubr.f32.mxu0 0.0
    %360 = vmatmul.mubr.f32.gmra.mrb[0].mxu0 %v293
    %v361 = vpop.f32.mrb[0].mxu0
    %v362 = vadd.f32 0.0, %v361
    %v363 = vpop.f32.mrb[0].mxu0
    %364 = vdwg.mxu0
    %366 = vrot.lane.b32.xlu0 %v362, 48
    %v367 = vpop.permute.xlu0 %366
    %vm369 = vcmask 523648
    %370 = vst.msk [vmem:[#allocation3] sm:$0xff] %vm369, %v367
    %v371 = vld [vmem:[#allocation2] sm:$0xff]
    %373 = vrot.lane.b32.xlu0 %v371, 80
    %v374 = vpop.permute.xlu0 %373
    %v375 = vsel %vm34, %v374, 0
    %377 = vmatprep.subr.mxu0 0.0
    %378 = vmatpush1.msra.mxu0 %v27
    %379 = vmatprep.subr.mxu0 0.0
    %380 = vmatpush1.msra.mxu0 %v28
    %381 = vmatprep.subr.mxu0 0.0
    %382 = vmatpush1.msra.mxu0 0.0
    %383 = vmatprep.subr.mxu0 0.0
    %384 = vmatpush1.msra.mxu0 0.0
    %385 = vmatprep.subr.mxu0 0.0
    %386 = vmatpush1.msra.mxu0 0.0
    %387 = vmatprep.subr.mxu0 0.0
    %388 = vmatpush1.msra.mxu0 0.0
    %389 = vmatprep.subr.mxu0 0.0
    %390 = vmatpush1.msra.mxu0 0.0
    %391 = vmatprep.subr.mxu0 0.0
    %392 = vmatpush1.msra.mxu0 0.0
    %393 = vmatprep.subr.mxu0 0.0
    %394 = vmatpush1.msra.mxu0 0.0
    %395 = vmatprep.subr.mxu0 0.0
    %396 = vmatpush1.msra.mxu0 0.0
    %397 = vmatprep.subr.mxu0 0.0
    %398 = vmatpush1.msra.mxu0 0.0
    %399 = vmatprep.subr.mxu0 0.0
    %400 = vmatpush1.msra.mxu0 0.0
    %401 = vmatprep.subr.mxu0 0.0
    %402 = vmatpush1.msra.mxu0 0.0
    %403 = vmatprep.subr.mxu0 0.0
    %404 = vmatpush1.msra.mxu0 0.0
    %405 = vmatprep.subr.mxu0 0.0
    %406 = vmatpush1.msra.mxu0 0.0
    %407 = vmatprep.subr.mxu0 0.0
    %408 = vmatpush1.msra.mxu0 0.0
    %409 = vmatprep.subr.mxu0 0.0
    %410 = vmatpush1.msra.mxu0 0.0
    %411 = vmatprep.subr.mxu0 0.0
    %412 = vmatpush1.msra.mxu0 0.0
    %413 = vmatprep.subr.mxu0 0.0
    %414 = vmatpush1.msra.mxu0 0.0
    %415 = vmatprep.subr.mxu0 0.0
    %416 = vmatpush1.msra.mxu0 0.0
    %417 = vmatprep.subr.mxu0 0.0
    %418 = vmatpush1.msra.mxu0 0.0
    %419 = vmatprep.subr.mxu0 0.0
    %420 = vmatpush1.msra.mxu0 0.0
    %421 = vmatprep.subr.mxu0 0.0
    %422 = vmatpush1.msra.mxu0 0.0
    %423 = vmatprep.subr.mxu0 0.0
    %424 = vmatpush1.msra.mxu0 0.0
    %425 = vmatprep.subr.mxu0 0.0
    %426 = vmatpush1.msra.mxu0 0.0
    %427 = vmatprep.subr.mxu0 0.0
    %428 = vmatpush1.msra.mxu0 0.0
    %429 = vmatprep.subr.mxu0 0.0
    %430 = vmatpush1.msra.mxu0 0.0
    %431 = vmatprep.subr.mxu0 0.0
    %432 = vmatpush1.msra.mxu0 0.0
    %433 = vmatprep.subr.mxu0 0.0
    %434 = vmatpush1.msra.mxu0 0.0
    %435 = vmatprep.subr.mxu0 0.0
    %436 = vmatpush1.msra.mxu0 0.0
    %437 = vmatprep.subr.mxu0 0.0
    %438 = vmatpush1.msra.mxu0 0.0
    %439 = vmatprep.subr.mxu0 0.0
    %440 = vmatpush1.msra.mxu0 0.0
    %441 = vmatprep.mubr.f32.mxu0 0.0
    %442 = vmatmul.mubr.f32.gmra.mrb[0].mxu0 %v375
    %v443 = vpop.f32.mrb[0].mxu0
    %v444 = vadd.f32 0.0, %v443
    %v445 = vpop.f32.mrb[0].mxu0
    %446 = vdwg.mxu0
    %448 = vrot.lane.b32.xlu0 %v444, 64
    %v449 = vpop.permute.xlu0 %448
    %vm451 = vcmask 654848
    %452 = vst.msk [vmem:[#allocation3] sm:$0xff] %vm451, %v449
    %v453 = vld [vmem:[#allocation2] sm:$0xff]
    %455 = vrot.lane.b32.xlu0 %v453, 64
    %v456 = vpop.permute.xlu0 %455
    %v457 = vsel %vm34, %v456, 0
    %459 = vmatprep.subr.mxu0 0.0
    %460 = vmatpush1.msra.mxu0 %v27
    %461 = vmatprep.subr.mxu0 0.0
    %462 = vmatpush1.msra.mxu0 %v28
    %463 = vmatprep.subr.mxu0 0.0
    %464 = vmatpush1.msra.mxu0 0.0
    %465 = vmatprep.subr.mxu0 0.0
    %466 = vmatpush1.msra.mxu0 0.0
    %467 = vmatprep.subr.mxu0 0.0
    %468 = vmatpush1.msra.mxu0 0.0
    %469 = vmatprep.subr.mxu0 0.0
    %470 = vmatpush1.msra.mxu0 0.0
    %471 = vmatprep.subr.mxu0 0.0
    %472 = vmatpush1.msra.mxu0 0.0
    %473 = vmatprep.subr.mxu0 0.0
    %474 = vmatpush1.msra.mxu0 0.0
    %475 = vmatprep.subr.mxu0 0.0
    %476 = vmatpush1.msra.mxu0 0.0
    %477 = vmatprep.subr.mxu0 0.0
    %478 = vmatpush1.msra.mxu0 0.0
    %479 = vmatprep.subr.mxu0 0.0
    %480 = vmatpush1.msra.mxu0 0.0
    %481 = vmatprep.subr.mxu0 0.0
    %482 = vmatpush1.msra.mxu0 0.0
    %483 = vmatprep.subr.mxu0 0.0
    %484 = vmatpush1.msra.mxu0 0.0
    %485 = vmatprep.subr.mxu0 0.0
    %486 = vmatpush1.msra.mxu0 0.0
    %487 = vmatprep.subr.mxu0 0.0
    %488 = vmatpush1.msra.mxu0 0.0
    %489 = vmatprep.subr.mxu0 0.0
    %490 = vmatpush1.msra.mxu0 0.0
    %491 = vmatprep.subr.mxu0 0.0
    %492 = vmatpush1.msra.mxu0 0.0
    %493 = vmatprep.subr.mxu0 0.0
    %494 = vmatpush1.msra.mxu0 0.0
    %495 = vmatprep.subr.mxu0 0.0
    %496 = vmatpush1.msra.mxu0 0.0
    %497 = vmatprep.subr.mxu0 0.0
    %498 = vmatpush1.msra.mxu0 0.0
    %499 = vmatprep.subr.mxu0 0.0
    %500 = vmatpush1.msra.mxu0 0.0
    %501 = vmatprep.subr.mxu0 0.0
    %502 = vmatpush1.msra.mxu0 0.0
    %503 = vmatprep.subr.mxu0 0.0
    %504 = vmatpush1.msra.mxu0 0.0
    %505 = vmatprep.subr.mxu0 0.0
    %506 = vmatpush1.msra.mxu0 0.0
    %507 = vmatprep.subr.mxu0 0.0
    %508 = vmatpush1.msra.mxu0 0.0
    %509 = vmatprep.subr.mxu0 0.0
    %510 = vmatpush1.msra.mxu0 0.0
    %511 = vmatprep.subr.mxu0 0.0
    %512 = vmatpush1.msra.mxu0 0.0
    %513 = vmatprep.subr.mxu0 0.0
    %514 = vmatpush1.msra.mxu0 0.0
    %515 = vmatprep.subr.mxu0 0.0
    %516 = vmatpush1.msra.mxu0 0.0
    %517 = vmatprep.subr.mxu0 0.0
    %518 = vmatpush1.msra.mxu0 0.0
    %519 = vmatprep.subr.mxu0 0.0
    %520 = vmatpush1.msra.mxu0 0.0
    %521 = vmatprep.subr.mxu0 0.0
    %522 = vmatpush1.msra.mxu0 0.0
    %523 = vmatprep.mubr.f32.mxu0 0.0
    %524 = vmatmul.mubr.f32.gmra.mrb[0].mxu0 %v457
    %v525 = vpop.f32.mrb[0].mxu0
    %v526 = vadd.f32 0.0, %v525
    %v527 = vpop.f32.mrb[0].mxu0
    %528 = vdwg.mxu0
    %530 = vrot.lane.b32.xlu0 %v526, 80
    %v531 = vpop.permute.xlu0 %530
    %vm533 = vcmask 786048
    %534 = vst.msk [vmem:[#allocation3] sm:$0xff] %vm533, %v531
    %v535 = vld [vmem:[#allocation2] sm:$0xff]
    %537 = vrot.lane.b32.xlu0 %v535, 48
    %v538 = vpop.permute.xlu0 %537
    %v539 = vsel %vm34, %v538, 0
    %541 = vmatprep.subr.mxu0 0.0
    %542 = vmatpush1.msra.mxu0 %v27
    %543 = vmatprep.subr.mxu0 0.0
    %544 = vmatpush1.msra.mxu0 %v28
    %545 = vmatprep.subr.mxu0 0.0
    %546 = vmatpush1.msra.mxu0 0.0
    %547 = vmatprep.subr.mxu0 0.0
    %548 = vmatpush1.msra.mxu0 0.0
    %549 = vmatprep.subr.mxu0 0.0
    %550 = vmatpush1.msra.mxu0 0.0
    %551 = vmatprep.subr.mxu0 0.0
    %552 = vmatpush1.msra.mxu0 0.0
    %553 = vmatprep.subr.mxu0 0.0
    %554 = vmatpush1.msra.mxu0 0.0
    %555 = vmatprep.subr.mxu0 0.0
    %556 = vmatpush1.msra.mxu0 0.0
    %557 = vmatprep.subr.mxu0 0.0
    %558 = vmatpush1.msra.mxu0 0.0
    %559 = vmatprep.subr.mxu0 0.0
    %560 = vmatpush1.msra.mxu0 0.0
    %561 = vmatprep.subr.mxu0 0.0
    %562 = vmatpush1.msra.mxu0 0.0
    %563 = vmatprep.subr.mxu0 0.0
    %564 = vmatpush1.msra.mxu0 0.0
    %565 = vmatprep.subr.mxu0 0.0
    %566 = vmatpush1.msra.mxu0 0.0
    %567 = vmatprep.subr.mxu0 0.0
    %568 = vmatpush1.msra.mxu0 0.0
    %569 = vmatprep.subr.mxu0 0.0
    %570 = vmatpush1.msra.mxu0 0.0
    %571 = vmatprep.subr.mxu0 0.0
    %572 = vmatpush1.msra.mxu0 0.0
    %573 = vmatprep.subr.mxu0 0.0
    %574 = vmatpush1.msra.mxu0 0.0
    %575 = vmatprep.subr.mxu0 0.0
    %576 = vmatpush1.msra.mxu0 0.0
    %577 = vmatprep.subr.mxu0 0.0
    %578 = vmatpush1.msra.mxu0 0.0
    %579 = vmatprep.subr.mxu0 0.0
    %580 = vmatpush1.msra.mxu0 0.0
    %581 = vmatprep.subr.mxu0 0.0
    %582 = vmatpush1.msra.mxu0 0.0
    %583 = vmatprep.subr.mxu0 0.0
    %584 = vmatpush1.msra.mxu0 0.0
    %585 = vmatprep.subr.mxu0 0.0
    %586 = vmatpush1.msra.mxu0 0.0
    %587 = vmatprep.subr.mxu0 0.0
    %588 = vmatpush1.msra.mxu0 0.0
    %589 = vmatprep.subr.mxu0 0.0
    %590 = vmatpush1.msra.mxu0 0.0
    %591 = vmatprep.subr.mxu0 0.0
    %592 = vmatpush1.msra.mxu0 0.0
    %593 = vmatprep.subr.mxu0 0.0
    %594 = vmatpush1.msra.mxu0 0.0
    %595 = vmatprep.subr.mxu0 0.0
    %596 = vmatpush1.msra.mxu0 0.0
    %597 = vmatprep.subr.mxu0 0.0
    %598 = vmatpush1.msra.mxu0 0.0
    %599 = vmatprep.subr.mxu0 0.0
    %600 = vmatpush1.msra.mxu0 0.0
    %601 = vmatprep.subr.mxu0 0.0
    %602 = vmatpush1.msra.mxu0 0.0
    %603 = vmatprep.subr.mxu0 0.0
    %604 = vmatpush1.msra.mxu0 0.0
    %605 = vmatprep.mubr.f32.mxu0 0.0
    %606 = vmatmul.mubr.f32.gmra.mrb[0].mxu0 %v539
    %v607 = vpop.f32.mrb[0].mxu0
    %v608 = vadd.f32 0.0, %v607
    %v609 = vpop.f32.mrb[0].mxu0
    %610 = vdwg.mxu0
    %612 = vrot.lane.b32.xlu0 %v608, 96
    %v613 = vpop.permute.xlu0 %612
    %vm615 = vcmask 917248
    %616 = vst.msk [vmem:[#allocation3] sm:$0xff] %vm615, %v613
    %v617 = vld [vmem:[#allocation2] sm:$0xff]
    %619 = vrot.lane.b32.xlu0 %v617, 32
    %v620 = vpop.permute.xlu0 %619
    %v621 = vsel %vm34, %v620, 0
    %623 = vmatprep.subr.mxu0 0.0
    %624 = vmatpush1.msra.mxu0 %v27
    %625 = vmatprep.subr.mxu0 0.0
    %626 = vmatpush1.msra.mxu0 %v28
    %627 = vmatprep.subr.mxu0 0.0
    %628 = vmatpush1.msra.mxu0 0.0
    %629 = vmatprep.subr.mxu0 0.0
    %630 = vmatpush1.msra.mxu0 0.0
    %631 = vmatprep.subr.mxu0 0.0
    %632 = vmatpush1.msra.mxu0 0.0
    %633 = vmatprep.subr.mxu0 0.0
    %634 = vmatpush1.msra.mxu0 0.0
    %635 = vmatprep.subr.mxu0 0.0
    %636 = vmatpush1.msra.mxu0 0.0
    %637 = vmatprep.subr.mxu0 0.0
    %638 = vmatpush1.msra.mxu0 0.0
    %639 = vmatprep.subr.mxu0 0.0
    %640 = vmatpush1.msra.mxu0 0.0
    %641 = vmatprep.subr.mxu0 0.0
    %642 = vmatpush1.msra.mxu0 0.0
    %643 = vmatprep.subr.mxu0 0.0
    %644 = vmatpush1.msra.mxu0 0.0
    %645 = vmatprep.subr.mxu0 0.0
    %646 = vmatpush1.msra.mxu0 0.0
    %647 = vmatprep.subr.mxu0 0.0
    %648 = vmatpush1.msra.mxu0 0.0
    %649 = vmatprep.subr.mxu0 0.0
    %650 = vmatpush1.msra.mxu0 0.0
    %651 = vmatprep.subr.mxu0 0.0
    %652 = vmatpush1.msra.mxu0 0.0
    %653 = vmatprep.subr.mxu0 0.0
    %654 = vmatpush1.msra.mxu0 0.0
    %655 = vmatprep.subr.mxu0 0.0
    %656 = vmatpush1.msra.mxu0 0.0
    %657 = vmatprep.subr.mxu0 0.0
    %658 = vmatpush1.msra.mxu0 0.0
    %659 = vmatprep.subr.mxu0 0.0
    %660 = vmatpush1.msra.mxu0 0.0
    %661 = vmatprep.subr.mxu0 0.0
    %662 = vmatpush1.msra.mxu0 0.0
    %663 = vmatprep.subr.mxu0 0.0
    %664 = vmatpush1.msra.mxu0 0.0
    %665 = vmatprep.subr.mxu0 0.0
    %666 = vmatpush1.msra.mxu0 0.0
    %667 = vmatprep.subr.mxu0 0.0
    %668 = vmatpush1.msra.mxu0 0.0
    %669 = vmatprep.subr.mxu0 0.0
    %670 = vmatpush1.msra.mxu0 0.0
    %671 = vmatprep.subr.mxu0 0.0
    %672 = vmatpush1.msra.mxu0 0.0
    %673 = vmatprep.subr.mxu0 0.0
    %674 = vmatpush1.msra.mxu0 0.0
    %675 = vmatprep.subr.mxu0 0.0
    %676 = vmatpush1.msra.mxu0 0.0
    %677 = vmatprep.subr.mxu0 0.0
    %678 = vmatpush1.msra.mxu0 0.0
    %679 = vmatprep.subr.mxu0 0.0
    %680 = vmatpush1.msra.mxu0 0.0
    %681 = vmatprep.subr.mxu0 0.0
    %682 = vmatpush1.msra.mxu0 0.0
    %683 = vmatprep.subr.mxu0 0.0
    %684 = vmatpush1.msra.mxu0 0.0
    %685 = vmatprep.subr.mxu0 0.0
    %686 = vmatpush1.msra.mxu0 0.0
    %687 = vmatprep.mubr.f32.mxu0 0.0
    %688 = vmatmul.mubr.f32.gmra.mrb[0].mxu0 %v621
    %v689 = vpop.f32.mrb[0].mxu0
    %v690 = vadd.f32 0.0, %v689
    %v691 = vpop.f32.mrb[0].mxu0
    %692 = vdwg.mxu0
    %694 = vrot.lane.b32.xlu0 %v690, 112
    %v695 = vpop.permute.xlu0 %694
    %vm697 = vcmask 1048448
    %698 = vst.msk [vmem:[#allocation3] sm:$0xff] %vm697, %v695
    %v699 = vld [vmem:[#allocation2] sm:$0xff]
    %701 = vrot.lane.b32.xlu0 %v699, 16
    %v702 = vpop.permute.xlu0 %701
    %v703 = vsel %vm34, %v702, 0
    %705 = vmatprep.subr.mxu0 0.0
    %706 = vmatpush1.msra.mxu0 %v27
    %707 = vmatprep.subr.mxu0 0.0
    %708 = vmatpush1.msra.mxu0 %v28
    %709 = vmatprep.subr.mxu0 0.0
    %710 = vmatpush1.msra.mxu0 0.0
    %711 = vmatprep.subr.mxu0 0.0
    %712 = vmatpush1.msra.mxu0 0.0
    %713 = vmatprep.subr.mxu0 0.0
    %714 = vmatpush1.msra.mxu0 0.0
    %715 = vmatprep.subr.mxu0 0.0
    %716 = vmatpush1.msra.mxu0 0.0
    %717 = vmatprep.subr.mxu0 0.0
    %718 = vmatpush1.msra.mxu0 0.0
    %719 = vmatprep.subr.mxu0 0.0
    %720 = vmatpush1.msra.mxu0 0.0
    %721 = vmatprep.subr.mxu0 0.0
    %722 = vmatpush1.msra.mxu0 0.0
    %723 = vmatprep.subr.mxu0 0.0
    %724 = vmatpush1.msra.mxu0 0.0
    %725 = vmatprep.subr.mxu0 0.0
    %726 = vmatpush1.msra.mxu0 0.0
    %727 = vmatprep.subr.mxu0 0.0
    %728 = vmatpush1.msra.mxu0 0.0
    %729 = vmatprep.subr.mxu0 0.0
    %730 = vmatpush1.msra.mxu0 0.0
    %731 = vmatprep.subr.mxu0 0.0
    %732 = vmatpush1.msra.mxu0 0.0
    %733 = vmatprep.subr.mxu0 0.0
    %734 = vmatpush1.msra.mxu0 0.0
    %735 = vmatprep.subr.mxu0 0.0
    %736 = vmatpush1.msra.mxu0 0.0
    %737 = vmatprep.subr.mxu0 0.0
    %738 = vmatpush1.msra.mxu0 0.0
    %739 = vmatprep.subr.mxu0 0.0
    %740 = vmatpush1.msra.mxu0 0.0
    %741 = vmatprep.subr.mxu0 0.0
    %742 = vmatpush1.msra.mxu0 0.0
    %743 = vmatprep.subr.mxu0 0.0
    %744 = vmatpush1.msra.mxu0 0.0
    %745 = vmatprep.subr.mxu0 0.0
    %746 = vmatpush1.msra.mxu0 0.0
    %747 = vmatprep.subr.mxu0 0.0
    %748 = vmatpush1.msra.mxu0 0.0
    %749 = vmatprep.subr.mxu0 0.0
    %750 = vmatpush1.msra.mxu0 0.0
    %751 = vmatprep.subr.mxu0 0.0
    %752 = vmatpush1.msra.mxu0 0.0
    %753 = vmatprep.subr.mxu0 0.0
    %754 = vmatpush1.msra.mxu0 0.0
    %755 = vmatprep.subr.mxu0 0.0
    %756 = vmatpush1.msra.mxu0 0.0
    %757 = vmatprep.subr.mxu0 0.0
    %758 = vmatpush1.msra.mxu0 0.0
    %759 = vmatprep.subr.mxu0 0.0
    %760 = vmatpush1.msra.mxu0 0.0
    %761 = vmatprep.subr.mxu0 0.0
    %762 = vmatpush1.msra.mxu0 0.0
    %763 = vmatprep.subr.mxu0 0.0
    %764 = vmatpush1.msra.mxu0 0.0
    %765 = vmatprep.subr.mxu0 0.0
    %766 = vmatpush1.msra.mxu0 0.0
    %767 = vmatprep.subr.mxu0 0.0
    %768 = vmatpush1.msra.mxu0 0.0
    %769 = vmatprep.mubr.f32.mxu0 0.0
    %770 = vmatmul.mubr.f32.gmra.mrb[0].mxu0 %v703
    %v771 = vpop.f32.mrb[0].mxu0
    %v772 = vadd.f32 0.0, %v771
    %v773 = vpop.f32.mrb[0].mxu0
    %774 = vdwg.mxu0
    %775 = vst.msk [vmem:[#allocation3 + $0x8] sm:$0xff] %vm34, %v772
    %v776 = vld [vmem:[#allocation2 + $0x8] sm:$0xff]
    %v778 = vsel %vm34, %v776, 0
    %780 = vmatprep.subr.mxu0 0.0
    %781 = vmatpush1.msra.mxu0 %v27
    %782 = vmatprep.subr.mxu0 0.0
    %783 = vmatpush1.msra.mxu0 %v28
    %784 = vmatprep.subr.mxu0 0.0
    %785 = vmatpush1.msra.mxu0 0.0
    %786 = vmatprep.subr.mxu0 0.0
    %787 = vmatpush1.msra.mxu0 0.0
    %788 = vmatprep.subr.mxu0 0.0
    %789 = vmatpush1.msra.mxu0 0.0
    %790 = vmatprep.subr.mxu0 0.0
    %791 = vmatpush1.msra.mxu0 0.0
    %792 = vmatprep.subr.mxu0 0.0
    %793 = vmatpush1.msra.mxu0 0.0
    %794 = vmatprep.subr.mxu0 0.0
    %795 = vmatpush1.msra.mxu0 0.0
    %796 = vmatprep.subr.mxu0 0.0
    %797 = vmatpush1.msra.mxu0 0.0
    %798 = vmatprep.subr.mxu0 0.0
    %799 = vmatpush1.msra.mxu0 0.0
    %800 = vmatprep.subr.mxu0 0.0
    %801 = vmatpush1.msra.mxu0 0.0
    %802 = vmatprep.subr.mxu0 0.0
    %803 = vmatpush1.msra.mxu0 0.0
    %804 = vmatprep.subr.mxu0 0.0
    %805 = vmatpush1.msra.mxu0 0.0
    %806 = vmatprep.subr.mxu0 0.0
    %807 = vmatpush1.msra.mxu0 0.0
    %808 = vmatprep.subr.mxu0 0.0
    %809 = vmatpush1.msra.mxu0 0.0
    %810 = vmatprep.subr.mxu0 0.0
    %811 = vmatpush1.msra.mxu0 0.0
    %812 = vmatprep.subr.mxu0 0.0
    %813 = vmatpush1.msra.mxu0 0.0
    %814 = vmatprep.subr.mxu0 0.0
    %815 = vmatpush1.msra.mxu0 0.0
    %816 = vmatprep.subr.mxu0 0.0
    %817 = vmatpush1.msra.mxu0 0.0
    %818 = vmatprep.subr.mxu0 0.0
    %819 = vmatpush1.msra.mxu0 0.0
    %820 = vmatprep.subr.mxu0 0.0
    %821 = vmatpush1.msra.mxu0 0.0
    %822 = vmatprep.subr.mxu0 0.0
    %823 = vmatpush1.msra.mxu0 0.0
    %824 = vmatprep.subr.mxu0 0.0
    %825 = vmatpush1.msra.mxu0 0.0
    %826 = vmatprep.subr.mxu0 0.0
    %827 = vmatpush1.msra.mxu0 0.0
    %828 = vmatprep.subr.mxu0 0.0
    %829 = vmatpush1.msra.mxu0 0.0
    %830 = vmatprep.subr.mxu0 0.0
    %831 = vmatpush1.msra.mxu0 0.0
    %832 = vmatprep.subr.mxu0 0.0
    %833 = vmatpush1.msra.mxu0 0.0
    %834 = vmatprep.subr.mxu0 0.0
    %835 = vmatpush1.msra.mxu0 0.0
    %836 = vmatprep.subr.mxu0 0.0
    %837 = vmatpush1.msra.mxu0 0.0
    %838 = vmatprep.subr.mxu0 0.0
    %839 = vmatpush1.msra.mxu0 0.0
    %840 = vmatprep.subr.mxu0 0.0
    %841 = vmatpush1.msra.mxu0 0.0
    %842 = vmatprep.subr.mxu0 0.0
    %843 = vmatpush1.msra.mxu0 0.0
    %844 = vmatprep.mubr.f32.mxu0 0.0
    %845 = vmatmul.mubr.f32.gmra.mrb[0].mxu0 %v778
    %v846 = vpop.f32.mrb[0].mxu0
    %v847 = vadd.f32 0.0, %v846
    %v848 = vpop.f32.mrb[0].mxu0
    %849 = vdwg.mxu0
    %851 = vrot.lane.b32.xlu0 %v847, 16
    %v852 = vpop.permute.xlu0 %851
    %854 = vst.msk [vmem:[#allocation3 + $0x8] sm:$0xff] %vm36, %v852
    %v855 = vld [vmem:[#allocation2 + $0x8] sm:$0xff]
    %857 = vrot.lane.b32.xlu0 %v855, 112
    %v858 = vpop.permute.xlu0 %857
    %v859 = vsel %vm34, %v858, 0
    %861 = vmatprep.subr.mxu0 0.0
    %862 = vmatpush1.msra.mxu0 %v27
    %863 = vmatprep.subr.mxu0 0.0
    %864 = vmatpush1.msra.mxu0 %v28
    %865 = vmatprep.subr.mxu0 0.0
    %866 = vmatpush1.msra.mxu0 0.0
    %867 = vmatprep.subr.mxu0 0.0
    %868 = vmatpush1.msra.mxu0 0.0
    %869 = vmatprep.subr.mxu0 0.0
    %870 = vmatpush1.msra.mxu0 0.0
    %871 = vmatprep.subr.mxu0 0.0
    %872 = vmatpush1.msra.mxu0 0.0
    %873 = vmatprep.subr.mxu0 0.0
    %874 = vmatpush1.msra.mxu0 0.0
    %875 = vmatprep.subr.mxu0 0.0
    %876 = vmatpush1.msra.mxu0 0.0
    %877 = vmatprep.subr.mxu0 0.0
    %878 = vmatpush1.msra.mxu0 0.0
    %879 = vmatprep.subr.mxu0 0.0
    %880 = vmatpush1.msra.mxu0 0.0
    %881 = vmatprep.subr.mxu0 0.0
    %882 = vmatpush1.msra.mxu0 0.0
    %883 = vmatprep.subr.mxu0 0.0
    %884 = vmatpush1.msra.mxu0 0.0
    %885 = vmatprep.subr.mxu0 0.0
    %886 = vmatpush1.msra.mxu0 0.0
    %887 = vmatprep.subr.mxu0 0.0
    %888 = vmatpush1.msra.mxu0 0.0
    %889 = vmatprep.subr.mxu0 0.0
    %890 = vmatpush1.msra.mxu0 0.0
    %891 = vmatprep.subr.mxu0 0.0
    %892 = vmatpush1.msra.mxu0 0.0
    %893 = vmatprep.subr.mxu0 0.0
    %894 = vmatpush1.msra.mxu0 0.0
    %895 = vmatprep.subr.mxu0 0.0
    %896 = vmatpush1.msra.mxu0 0.0
    %897 = vmatprep.subr.mxu0 0.0
    %898 = vmatpush1.msra.mxu0 0.0
    %899 = vmatprep.subr.mxu0 0.0
    %900 = vmatpush1.msra.mxu0 0.0
    %901 = vmatprep.subr.mxu0 0.0
    %902 = vmatpush1.msra.mxu0 0.0
    %903 = vmatprep.subr.mxu0 0.0
    %904 = vmatpush1.msra.mxu0 0.0
    %905 = vmatprep.subr.mxu0 0.0
    %906 = vmatpush1.msra.mxu0 0.0
    %907 = vmatprep.subr.mxu0 0.0
    %908 = vmatpush1.msra.mxu0 0.0
    %909 = vmatprep.subr.mxu0 0.0
    %910 = vmatpush1.msra.mxu0 0.0
    %911 = vmatprep.subr.mxu0 0.0
    %912 = vmatpush1.msra.mxu0 0.0
    %913 = vmatprep.subr.mxu0 0.0
    %914 = vmatpush1.msra.mxu0 0.0
    %915 = vmatprep.subr.mxu0 0.0
    %916 = vmatpush1.msra.mxu0 0.0
    %917 = vmatprep.subr.mxu0 0.0
    %918 = vmatpush1.msra.mxu0 0.0
    %919 = vmatprep.subr.mxu0 0.0
    %920 = vmatpush1.msra.mxu0 0.0
    %921 = vmatprep.subr.mxu0 0.0
    %922 = vmatpush1.msra.mxu0 0.0
    %923 = vmatprep.subr.mxu0 0.0
    %924 = vmatpush1.msra.mxu0 0.0
    %925 = vmatprep.mubr.f32.mxu0 0.0
    %926 = vmatmul.mubr.f32.gmra.mrb[0].mxu0 %v859
    %v927 = vpop.f32.mrb[0].mxu0
    %v928 = vadd.f32 0.0, %v927
    %v929 = vpop.f32.mrb[0].mxu0
    %930 = vdwg.mxu0
    %932 = vrot.lane.b32.xlu0 %v928, 32
    %v933 = vpop.permute.xlu0 %932
    %935 = vst.msk [vmem:[#allocation3 + $0x8] sm:$0xff] %vm287, %v933
    %v936 = vld [vmem:[#allocation2 + $0x8] sm:$0xff]
    %938 = vrot.lane.b32.xlu0 %v936, 96
    %v939 = vpop.permute.xlu0 %938
    %v940 = vsel %vm34, %v939, 0
    %942 = vmatprep.subr.mxu0 0.0
    %943 = vmatpush1.msra.mxu0 %v27
    %944 = vmatprep.subr.mxu0 0.0
    %945 = vmatpush1.msra.mxu0 %v28
    %946 = vmatprep.subr.mxu0 0.0
    %947 = vmatpush1.msra.mxu0 0.0
    %948 = vmatprep.subr.mxu0 0.0
    %949 = vmatpush1.msra.mxu0 0.0
    %950 = vmatprep.subr.mxu0 0.0
    %951 = vmatpush1.msra.mxu0 0.0
    %952 = vmatprep.subr.mxu0 0.0
    %953 = vmatpush1.msra.mxu0 0.0
    %954 = vmatprep.subr.mxu0 0.0
    %955 = vmatpush1.msra.mxu0 0.0
    %956 = vmatprep.subr.mxu0 0.0
    %957 = vmatpush1.msra.mxu0 0.0
    %958 = vmatprep.subr.mxu0 0.0
    %959 = vmatpush1.msra.mxu0 0.0
    %960 = vmatprep.subr.mxu0 0.0
    %961 = vmatpush1.msra.mxu0 0.0
    %962 = vmatprep.subr.mxu0 0.0
    %963 = vmatpush1.msra.mxu0 0.0
    %964 = vmatprep.subr.mxu0 0.0
    %965 = vmatpush1.msra.mxu0 0.0
    %966 = vmatprep.subr.mxu0 0.0
    %967 = vmatpush1.msra.mxu0 0.0
    %968 = vmatprep.subr.mxu0 0.0
    %969 = vmatpush1.msra.mxu0 0.0
    %970 = vmatprep.subr.mxu0 0.0
    %971 = vmatpush1.msra.mxu0 0.0
    %972 = vmatprep.subr.mxu0 0.0
    %973 = vmatpush1.msra.mxu0 0.0
    %974 = vmatprep.subr.mxu0 0.0
    %975 = vmatpush1.msra.mxu0 0.0
    %976 = vmatprep.subr.mxu0 0.0
    %977 = vmatpush1.msra.mxu0 0.0
    %978 = vmatprep.subr.mxu0 0.0
    %979 = vmatpush1.msra.mxu0 0.0
    %980 = vmatprep.subr.mxu0 0.0
    %981 = vmatpush1.msra.mxu0 0.0
    %982 = vmatprep.subr.mxu0 0.0
    %983 = vmatpush1.msra.mxu0 0.0
    %984 = vmatprep.subr.mxu0 0.0
    %985 = vmatpush1.msra.mxu0 0.0
    %986 = vmatprep.subr.mxu0 0.0
    %987 = vmatpush1.msra.mxu0 0.0
    %988 = vmatprep.subr.mxu0 0.0
    %989 = vmatpush1.msra.mxu0 0.0
    %990 = vmatprep.subr.mxu0 0.0
    %991 = vmatpush1.msra.mxu0 0.0
    %992 = vmatprep.subr.mxu0 0.0
    %993 = vmatpush1.msra.mxu0 0.0
    %994 = vmatprep.subr.mxu0 0.0
    %995 = vmatpush1.msra.mxu0 0.0
    %996 = vmatprep.subr.mxu0 0.0
    %997 = vmatpush1.msra.mxu0 0.0
    %998 = vmatprep.subr.mxu0 0.0
    %999 = vmatpush1.msra.mxu0 0.0
    %1000 = vmatprep.subr.mxu0 0.0
    %1001 = vmatpush1.msra.mxu0 0.0
    %1002 = vmatprep.subr.mxu0 0.0
    %1003 = vmatpush1.msra.mxu0 0.0
    %1004 = vmatprep.subr.mxu0 0.0
    %1005 = vmatpush1.msra.mxu0 0.0
    %1006 = vmatprep.mubr.f32.mxu0 0.0
    %1007 = vmatmul.mubr.f32.gmra.mrb[0].mxu0 %v940
    %v1008 = vpop.f32.mrb[0].mxu0
    %v1009 = vadd.f32 0.0, %v1008
    %v1010 = vpop.f32.mrb[0].mxu0
    %1011 = vdwg.mxu0
    %1013 = vrot.lane.b32.xlu0 %v1009, 48
    %v1014 = vpop.permute.xlu0 %1013
    %1016 = vst.msk [vmem:[#allocation3 + $0x8] sm:$0xff] %vm369, %v1014
    %v1017 = vld [vmem:[#allocation2 + $0x8] sm:$0xff]
    %1019 = vrot.lane.b32.xlu0 %v1017, 80
    %v1020 = vpop.permute.xlu0 %1019
    %v1021 = vsel %vm34, %v1020, 0
    %1023 = vmatprep.subr.mxu0 0.0
    %1024 = vmatpush1.msra.mxu0 %v27
    %1025 = vmatprep.subr.mxu0 0.0
    %1026 = vmatpush1.msra.mxu0 %v28
    %1027 = vmatprep.subr.mxu0 0.0
    %1028 = vmatpush1.msra.mxu0 0.0
    %1029 = vmatprep.subr.mxu0 0.0
    %1030 = vmatpush1.msra.mxu0 0.0
    %1031 = vmatprep.subr.mxu0 0.0
    %1032 = vmatpush1.msra.mxu0 0.0
    %1033 = vmatprep.subr.mxu0 0.0
    %1034 = vmatpush1.msra.mxu0 0.0
    %1035 = vmatprep.subr.mxu0 0.0
    %1036 = vmatpush1.msra.mxu0 0.0
    %1037 = vmatprep.subr.mxu0 0.0
    %1038 = vmatpush1.msra.mxu0 0.0
    %1039 = vmatprep.subr.mxu0 0.0
    %1040 = vmatpush1.msra.mxu0 0.0
    %1041 = vmatprep.subr.mxu0 0.0
    %1042 = vmatpush1.msra.mxu0 0.0
    %1043 = vmatprep.subr.mxu0 0.0
    %1044 = vmatpush1.msra.mxu0 0.0
    %1045 = vmatprep.subr.mxu0 0.0
    %1046 = vmatpush1.msra.mxu0 0.0
    %1047 = vmatprep.subr.mxu0 0.0
    %1048 = vmatpush1.msra.mxu0 0.0
    %1049 = vmatprep.subr.mxu0 0.0
    %1050 = vmatpush1.msra.mxu0 0.0
    %1051 = vmatprep.subr.mxu0 0.0
    %1052 = vmatpush1.msra.mxu0 0.0
    %1053 = vmatprep.subr.mxu0 0.0
    %1054 = vmatpush1.msra.mxu0 0.0
    %1055 = vmatprep.subr.mxu0 0.0
    %1056 = vmatpush1.msra.mxu0 0.0
    %1057 = vmatprep.subr.mxu0 0.0
    %1058 = vmatpush1.msra.mxu0 0.0
    %1059 = vmatprep.subr.mxu0 0.0
    %1060 = vmatpush1.msra.mxu0 0.0
    %1061 = vmatprep.subr.mxu0 0.0
    %1062 = vmatpush1.msra.mxu0 0.0
    %1063 = vmatprep.subr.mxu0 0.0
    %1064 = vmatpush1.msra.mxu0 0.0
    %1065 = vmatprep.subr.mxu0 0.0
    %1066 = vmatpush1.msra.mxu0 0.0
    %1067 = vmatprep.subr.mxu0 0.0
    %1068 = vmatpush1.msra.mxu0 0.0
    %1069 = vmatprep.subr.mxu0 0.0
    %1070 = vmatpush1.msra.mxu0 0.0
    %1071 = vmatprep.subr.mxu0 0.0
    %1072 = vmatpush1.msra.mxu0 0.0
    %1073 = vmatprep.subr.mxu0 0.0
    %1074 = vmatpush1.msra.mxu0 0.0
    %1075 = vmatprep.subr.mxu0 0.0
    %1076 = vmatpush1.msra.mxu0 0.0
    %1077 = vmatprep.subr.mxu0 0.0
    %1078 = vmatpush1.msra.mxu0 0.0
    %1079 = vmatprep.subr.mxu0 0.0
    %1080 = vmatpush1.msra.mxu0 0.0
    %1081 = vmatprep.subr.mxu0 0.0
    %1082 = vmatpush1.msra.mxu0 0.0
    %1083 = vmatprep.subr.mxu0 0.0
    %1084 = vmatpush1.msra.mxu0 0.0
    %1085 = vmatprep.subr.mxu0 0.0
    %1086 = vmatpush1.msra.mxu0 0.0
    %1087 = vmatprep.mubr.f32.mxu0 0.0
    %1088 = vmatmul.mubr.f32.gmra.mrb[0].mxu0 %v1021
    %v1089 = vpop.f32.mrb[0].mxu0
    %v1090 = vadd.f32 0.0, %v1089
    %v1091 = vpop.f32.mrb[0].mxu0
    %1092 = vdwg.mxu0
    %1094 = vrot.lane.b32.xlu0 %v1090, 64
    %v1095 = vpop.permute.xlu0 %1094
    %1097 = vst.msk [vmem:[#allocation3 + $0x8] sm:$0xff] %vm451, %v1095
    %v1098 = vld [vmem:[#allocation2 + $0x8] sm:$0xff]
    %1100 = vrot.lane.b32.xlu0 %v1098, 64
    %v1101 = vpop.permute.xlu0 %1100
    %v1102 = vsel %vm34, %v1101, 0
    %1104 = vmatprep.subr.mxu0 0.0
    %1105 = vmatpush1.msra.mxu0 %v27
    %1106 = vmatprep.subr.mxu0 0.0
    %1107 = vmatpush1.msra.mxu0 %v28
    %1108 = vmatprep.subr.mxu0 0.0
    %1109 = vmatpush1.msra.mxu0 0.0
    %1110 = vmatprep.subr.mxu0 0.0
    %1111 = vmatpush1.msra.mxu0 0.0
    %1112 = vmatprep.subr.mxu0 0.0
    %1113 = vmatpush1.msra.mxu0 0.0
    %1114 = vmatprep.subr.mxu0 0.0
    %1115 = vmatpush1.msra.mxu0 0.0
    %1116 = vmatprep.subr.mxu0 0.0
    %1117 = vmatpush1.msra.mxu0 0.0
    %1118 = vmatprep.subr.mxu0 0.0
    %1119 = vmatpush1.msra.mxu0 0.0
    %1120 = vmatprep.subr.mxu0 0.0
    %1121 = vmatpush1.msra.mxu0 0.0
    %1122 = vmatprep.subr.mxu0 0.0
    %1123 = vmatpush1.msra.mxu0 0.0
    %1124 = vmatprep.subr.mxu0 0.0
    %1125 = vmatpush1.msra.mxu0 0.0
    %1126 = vmatprep.subr.mxu0 0.0
    %1127 = vmatpush1.msra.mxu0 0.0
    %1128 = vmatprep.subr.mxu0 0.0
    %1129 = vmatpush1.msra.mxu0 0.0
    %1130 = vmatprep.subr.mxu0 0.0
    %1131 = vmatpush1.msra.mxu0 0.0
    %1132 = vmatprep.subr.mxu0 0.0
    %1133 = vmatpush1.msra.mxu0 0.0
    %1134 = vmatprep.subr.mxu0 0.0
    %1135 = vmatpush1.msra.mxu0 0.0
    %1136 = vmatprep.subr.mxu0 0.0
    %1137 = vmatpush1.msra.mxu0 0.0
    %1138 = vmatprep.subr.mxu0 0.0
    %1139 = vmatpush1.msra.mxu0 0.0
    %1140 = vmatprep.subr.mxu0 0.0
    %1141 = vmatpush1.msra.mxu0 0.0
    %1142 = vmatprep.subr.mxu0 0.0
    %1143 = vmatpush1.msra.mxu0 0.0
    %1144 = vmatprep.subr.mxu0 0.0
    %1145 = vmatpush1.msra.mxu0 0.0
    %1146 = vmatprep.subr.mxu0 0.0
    %1147 = vmatpush1.msra.mxu0 0.0
    %1148 = vmatprep.subr.mxu0 0.0
    %1149 = vmatpush1.msra.mxu0 0.0
    %1150 = vmatprep.subr.mxu0 0.0
    %1151 = vmatpush1.msra.mxu0 0.0
    %1152 = vmatprep.subr.mxu0 0.0
    %1153 = vmatpush1.msra.mxu0 0.0
    %1154 = vmatprep.subr.mxu0 0.0
    %1155 = vmatpush1.msra.mxu0 0.0
    %1156 = vmatprep.subr.mxu0 0.0
    %1157 = vmatpush1.msra.mxu0 0.0
    %1158 = vmatprep.subr.mxu0 0.0
    %1159 = vmatpush1.msra.mxu0 0.0
    %1160 = vmatprep.subr.mxu0 0.0
    %1161 = vmatpush1.msra.mxu0 0.0
    %1162 = vmatprep.subr.mxu0 0.0
    %1163 = vmatpush1.msra.mxu0 0.0
    %1164 = vmatprep.subr.mxu0 0.0
    %1165 = vmatpush1.msra.mxu0 0.0
    %1166 = vmatprep.subr.mxu0 0.0
    %1167 = vmatpush1.msra.mxu0 0.0
    %1168 = vmatprep.mubr.f32.mxu0 0.0
    %1169 = vmatmul.mubr.f32.gmra.mrb[0].mxu0 %v1102
    %v1170 = vpop.f32.mrb[0].mxu0
    %v1171 = vadd.f32 0.0, %v1170
    %v1172 = vpop.f32.mrb[0].mxu0
    %1173 = vdwg.mxu0
    %1175 = vrot.lane.b32.xlu0 %v1171, 80
    %v1176 = vpop.permute.xlu0 %1175
    %1178 = vst.msk [vmem:[#allocation3 + $0x8] sm:$0xff] %vm533, %v1176
    %v1179 = vld [vmem:[#allocation2 + $0x8] sm:$0xff]
    %1181 = vrot.lane.b32.xlu0 %v1179, 48
    %v1182 = vpop.permute.xlu0 %1181
    %v1183 = vsel %vm34, %v1182, 0
    %1185 = vmatprep.subr.mxu0 0.0
    %1186 = vmatpush1.msra.mxu0 %v27
    %1187 = vmatprep.subr.mxu0 0.0
    %1188 = vmatpush1.msra.mxu0 %v28
    %1189 = vmatprep.subr.mxu0 0.0
    %1190 = vmatpush1.msra.mxu0 0.0
    %1191 = vmatprep.subr.mxu0 0.0
    %1192 = vmatpush1.msra.mxu0 0.0
    %1193 = vmatprep.subr.mxu0 0.0
    %1194 = vmatpush1.msra.mxu0 0.0
    %1195 = vmatprep.subr.mxu0 0.0
    %1196 = vmatpush1.msra.mxu0 0.0
    %1197 = vmatprep.subr.mxu0 0.0
    %1198 = vmatpush1.msra.mxu0 0.0
    %1199 = vmatprep.subr.mxu0 0.0
    %1200 = vmatpush1.msra.mxu0 0.0
    %1201 = vmatprep.subr.mxu0 0.0
    %1202 = vmatpush1.msra.mxu0 0.0
    %1203 = vmatprep.subr.mxu0 0.0
    %1204 = vmatpush1.msra.mxu0 0.0
    %1205 = vmatprep.subr.mxu0 0.0
    %1206 = vmatpush1.msra.mxu0 0.0
    %1207 = vmatprep.subr.mxu0 0.0
    %1208 = vmatpush1.msra.mxu0 0.0
    %1209 = vmatprep.subr.mxu0 0.0
    %1210 = vmatpush1.msra.mxu0 0.0
    %1211 = vmatprep.subr.mxu0 0.0
    %1212 = vmatpush1.msra.mxu0 0.0
    %1213 = vmatprep.subr.mxu0 0.0
    %1214 = vmatpush1.msra.mxu0 0.0
    %1215 = vmatprep.subr.mxu0 0.0
    %1216 = vmatpush1.msra.mxu0 0.0
    %1217 = vmatprep.subr.mxu0 0.0
    %1218 = vmatpush1.msra.mxu0 0.0
    %1219 = vmatprep.subr.mxu0 0.0
    %1220 = vmatpush1.msra.mxu0 0.0
    %1221 = vmatprep.subr.mxu0 0.0
    %1222 = vmatpush1.msra.mxu0 0.0
    %1223 = vmatprep.subr.mxu0 0.0
    %1224 = vmatpush1.msra.mxu0 0.0
    %1225 = vmatprep.subr.mxu0 0.0
    %1226 = vmatpush1.msra.mxu0 0.0
    %1227 = vmatprep.subr.mxu0 0.0
    %1228 = vmatpush1.msra.mxu0 0.0
    %1229 = vmatprep.subr.mxu0 0.0
    %1230 = vmatpush1.msra.mxu0 0.0
    %1231 = vmatprep.subr.mxu0 0.0
    %1232 = vmatpush1.msra.mxu0 0.0
    %1233 = vmatprep.subr.mxu0 0.0
    %1234 = vmatpush1.msra.mxu0 0.0
    %1235 = vmatprep.subr.mxu0 0.0
    %1236 = vmatpush1.msra.mxu0 0.0
    %1237 = vmatprep.subr.mxu0 0.0
    %1238 = vmatpush1.msra.mxu0 0.0
    %1239 = vmatprep.subr.mxu0 0.0
    %1240 = vmatpush1.msra.mxu0 0.0
    %1241 = vmatprep.subr.mxu0 0.0
    %1242 = vmatpush1.msra.mxu0 0.0
    %1243 = vmatprep.subr.mxu0 0.0
    %1244 = vmatpush1.msra.mxu0 0.0
    %1245 = vmatprep.subr.mxu0 0.0
    %1246 = vmatpush1.msra.mxu0 0.0
    %1247 = vmatprep.subr.mxu0 0.0
    %1248 = vmatpush1.msra.mxu0 0.0
    %1249 = vmatprep.mubr.f32.mxu0 0.0
    %1250 = vmatmul.mubr.f32.gmra.mrb[0].mxu0 %v1183
    %v1251 = vpop.f32.mrb[0].mxu0
    %v1252 = vadd.f32 0.0, %v1251
    %v1253 = vpop.f32.mrb[0].mxu0
    %1254 = vdwg.mxu0
    %1256 = vrot.lane.b32.xlu0 %v1252, 96
    %v1257 = vpop.permute.xlu0 %1256
    %1259 = vst.msk [vmem:[#allocation3 + $0x8] sm:$0xff] %vm615, %v1257
    %v1260 = vld [vmem:[#allocation2 + $0x8] sm:$0xff]
    %1262 = vrot.lane.b32.xlu0 %v1260, 32
    %v1263 = vpop.permute.xlu0 %1262
    %v1264 = vsel %vm34, %v1263, 0
    %1266 = vmatprep.subr.mxu0 0.0
    %1267 = vmatpush1.msra.mxu0 %v27
    %1268 = vmatprep.subr.mxu0 0.0
    %1269 = vmatpush1.msra.mxu0 %v28
    %1270 = vmatprep.subr.mxu0 0.0
    %1271 = vmatpush1.msra.mxu0 0.0
    %1272 = vmatprep.subr.mxu0 0.0
    %1273 = vmatpush1.msra.mxu0 0.0
    %1274 = vmatprep.subr.mxu0 0.0
    %1275 = vmatpush1.msra.mxu0 0.0
    %1276 = vmatprep.subr.mxu0 0.0
    %1277 = vmatpush1.msra.mxu0 0.0
    %1278 = vmatprep.subr.mxu0 0.0
    %1279 = vmatpush1.msra.mxu0 0.0
    %1280 = vmatprep.subr.mxu0 0.0
    %1281 = vmatpush1.msra.mxu0 0.0
    %1282 = vmatprep.subr.mxu0 0.0
    %1283 = vmatpush1.msra.mxu0 0.0
    %1284 = vmatprep.subr.mxu0 0.0
    %1285 = vmatpush1.msra.mxu0 0.0
    %1286 = vmatprep.subr.mxu0 0.0
    %1287 = vmatpush1.msra.mxu0 0.0
    %1288 = vmatprep.subr.mxu0 0.0
    %1289 = vmatpush1.msra.mxu0 0.0
    %1290 = vmatprep.subr.mxu0 0.0
    %1291 = vmatpush1.msra.mxu0 0.0
    %1292 = vmatprep.subr.mxu0 0.0
    %1293 = vmatpush1.msra.mxu0 0.0
    %1294 = vmatprep.subr.mxu0 0.0
    %1295 = vmatpush1.msra.mxu0 0.0
    %1296 = vmatprep.subr.mxu0 0.0
    %1297 = vmatpush1.msra.mxu0 0.0
    %1298 = vmatprep.subr.mxu0 0.0
    %1299 = vmatpush1.msra.mxu0 0.0
    %1300 = vmatprep.subr.mxu0 0.0
    %1301 = vmatpush1.msra.mxu0 0.0
    %1302 = vmatprep.subr.mxu0 0.0
    %1303 = vmatpush1.msra.mxu0 0.0
    %1304 = vmatprep.subr.mxu0 0.0
    %1305 = vmatpush1.msra.mxu0 0.0
    %1306 = vmatprep.subr.mxu0 0.0
    %1307 = vmatpush1.msra.mxu0 0.0
    %1308 = vmatprep.subr.mxu0 0.0
    %1309 = vmatpush1.msra.mxu0 0.0
    %1310 = vmatprep.subr.mxu0 0.0
    %1311 = vmatpush1.msra.mxu0 0.0
    %1312 = vmatprep.subr.mxu0 0.0
    %1313 = vmatpush1.msra.mxu0 0.0
    %1314 = vmatprep.subr.mxu0 0.0
    %1315 = vmatpush1.msra.mxu0 0.0
    %1316 = vmatprep.subr.mxu0 0.0
    %1317 = vmatpush1.msra.mxu0 0.0
    %1318 = vmatprep.subr.mxu0 0.0
    %1319 = vmatpush1.msra.mxu0 0.0
    %1320 = vmatprep.subr.mxu0 0.0
    %1321 = vmatpush1.msra.mxu0 0.0
    %1322 = vmatprep.subr.mxu0 0.0
    %1323 = vmatpush1.msra.mxu0 0.0
    %1324 = vmatprep.subr.mxu0 0.0
    %1325 = vmatpush1.msra.mxu0 0.0
    %1326 = vmatprep.subr.mxu0 0.0
    %1327 = vmatpush1.msra.mxu0 0.0
    %1328 = vmatprep.subr.mxu0 0.0
    %1329 = vmatpush1.msra.mxu0 0.0
    %1330 = vmatprep.mubr.f32.mxu0 0.0
    %1331 = vmatmul.mubr.f32.gmra.mrb[0].mxu0 %v1264
    %v1332 = vpop.f32.mrb[0].mxu0
    %v1333 = vadd.f32 0.0, %v1332
    %v1334 = vpop.f32.mrb[0].mxu0
    %1335 = vdwg.mxu0
    %1337 = vrot.lane.b32.xlu0 %v1333, 112
    %v1338 = vpop.permute.xlu0 %1337
    %1340 = vst.msk [vmem:[#allocation3 + $0x8] sm:$0xff] %vm697, %v1338
    %v1341 = vld [vmem:[#allocation2 + $0x8] sm:$0xff]
    %1343 = vrot.lane.b32.xlu0 %v1341, 16
    %v1344 = vpop.permute.xlu0 %1343
    %v1345 = vsel %vm34, %v1344, 0
    %1347 = vmatprep.subr.mxu0 0.0
    %1348 = vmatpush1.msra.mxu0 %v27
    %1349 = vmatprep.subr.mxu0 0.0
    %1350 = vmatpush1.msra.mxu0 %v28
    %1351 = vmatprep.subr.mxu0 0.0
    %1352 = vmatpush1.msra.mxu0 0.0
    %1353 = vmatprep.subr.mxu0 0.0
    %1354 = vmatpush1.msra.mxu0 0.0
    %1355 = vmatprep.subr.mxu0 0.0
    %1356 = vmatpush1.msra.mxu0 0.0
    %1357 = vmatprep.subr.mxu0 0.0
    %1358 = vmatpush1.msra.mxu0 0.0
    %1359 = vmatprep.subr.mxu0 0.0
    %1360 = vmatpush1.msra.mxu0 0.0
    %1361 = vmatprep.subr.mxu0 0.0
    %1362 = vmatpush1.msra.mxu0 0.0
    %1363 = vmatprep.subr.mxu0 0.0
    %1364 = vmatpush1.msra.mxu0 0.0
    %1365 = vmatprep.subr.mxu0 0.0
    %1366 = vmatpush1.msra.mxu0 0.0
    %1367 = vmatprep.subr.mxu0 0.0
    %1368 = vmatpush1.msra.mxu0 0.0
    %1369 = vmatprep.subr.mxu0 0.0
    %1370 = vmatpush1.msra.mxu0 0.0
    %1371 = vmatprep.subr.mxu0 0.0
    %1372 = vmatpush1.msra.mxu0 0.0
    %1373 = vmatprep.subr.mxu0 0.0
    %1374 = vmatpush1.msra.mxu0 0.0
    %1375 = vmatprep.subr.mxu0 0.0
    %1376 = vmatpush1.msra.mxu0 0.0
    %1377 = vmatprep.subr.mxu0 0.0
    %1378 = vmatpush1.msra.mxu0 0.0
    %1379 = vmatprep.subr.mxu0 0.0
    %1380 = vmatpush1.msra.mxu0 0.0
    %1381 = vmatprep.subr.mxu0 0.0
    %1382 = vmatpush1.msra.mxu0 0.0
    %1383 = vmatprep.subr.mxu0 0.0
    %1384 = vmatpush1.msra.mxu0 0.0
    %1385 = vmatprep.subr.mxu0 0.0
    %1386 = vmatpush1.msra.mxu0 0.0
    %1387 = vmatprep.subr.mxu0 0.0
    %1388 = vmatpush1.msra.mxu0 0.0
    %1389 = vmatprep.subr.mxu0 0.0
    %1390 = vmatpush1.msra.mxu0 0.0
    %1391 = vmatprep.subr.mxu0 0.0
    %1392 = vmatpush1.msra.mxu0 0.0
    %1393 = vmatprep.subr.mxu0 0.0
    %1394 = vmatpush1.msra.mxu0 0.0
    %1395 = vmatprep.subr.mxu0 0.0
    %1396 = vmatpush1.msra.mxu0 0.0
    %1397 = vmatprep.subr.mxu0 0.0
    %1398 = vmatpush1.msra.mxu0 0.0
    %1399 = vmatprep.subr.mxu0 0.0
    %1400 = vmatpush1.msra.mxu0 0.0
    %1401 = vmatprep.subr.mxu0 0.0
    %1402 = vmatpush1.msra.mxu0 0.0
    %1403 = vmatprep.subr.mxu0 0.0
    %1404 = vmatpush1.msra.mxu0 0.0
    %1405 = vmatprep.subr.mxu0 0.0
    %1406 = vmatpush1.msra.mxu0 0.0
    %1407 = vmatprep.subr.mxu0 0.0
    %1408 = vmatpush1.msra.mxu0 0.0
    %1409 = vmatprep.subr.mxu0 0.0
    %1410 = vmatpush1.msra.mxu0 0.0
    %1411 = vmatprep.mubr.f32.mxu0 0.0
    %1412 = vmatmul.mubr.f32.gmra.mrb[0].mxu0 %v1345
    %v1413 = vpop.f32.mrb[0].mxu0
    %v1414 = vadd.f32 0.0, %v1413
    %v1415 = vpop.f32.mrb[0].mxu0
    %1416 = vdwg.mxu0
    %1417 = vst.msk [vmem:[#allocation3 + $0x10] sm:$0xff] %vm34, %v1414
    %1419 = vset.pattern.permute.xlu0 0
    %1420 = vperm.xlu0 %1419, %v33
    %v1421 = vpop.permute.xlu0 %1420
    %v1424 = vsel %vm46, %v32, 0
    %1426 = vmatprep.subr.mxu0 %v53
    %1427 = vmatpush1.msra.mxu0 %v51
    %1428 = vmatprep.subr.mxu0 0.0
    %1429 = vmatpush1.msra.mxu0 0.0
    %1430 = vmatprep.subr.mxu0 0.0
    %1431 = vmatpush1.msra.mxu0 0.0
    %1432 = vmatprep.subr.mxu0 0.0
    %1433 = vmatpush1.msra.mxu0 0.0
    %1434 = vmatprep.subr.mxu0 0.0
    %1435 = vmatpush1.msra.mxu0 0.0
    %1436 = vmatprep.subr.mxu0 0.0
    %1437 = vmatpush1.msra.mxu0 0.0
    %1438 = vmatprep.subr.mxu0 0.0
    %1439 = vmatpush1.msra.mxu0 0.0
    %1440 = vmatprep.subr.mxu0 0.0
    %1441 = vmatpush1.msra.mxu0 0.0
    %1442 = vmatprep.subr.mxu0 0.0
    %1443 = vmatpush1.msra.mxu0 0.0
    %1444 = vmatprep.subr.mxu0 0.0
    %1445 = vmatpush1.msra.mxu0 0.0
    %1446 = vmatprep.subr.mxu0 0.0
    %1447 = vmatpush1.msra.mxu0 0.0
    %1448 = vmatprep.subr.mxu0 0.0
    %1449 = vmatpush1.msra.mxu0 0.0
    %1450 = vmatprep.subr.mxu0 0.0
    %1451 = vmatpush1.msra.mxu0 0.0
    %1452 = vmatprep.subr.mxu0 0.0
    %1453 = vmatpush1.msra.mxu0 0.0
    %1454 = vmatprep.subr.mxu0 0.0
    %1455 = vmatpush1.msra.mxu0 0.0
    %1456 = vmatprep.subr.mxu0 0.0
    %1457 = vmatpush1.msra.mxu0 0.0
    %1458 = vmatprep.subr.mxu0 0.0
    %1459 = vmatpush1.msra.mxu0 0.0
    %1460 = vmatprep.subr.mxu0 0.0
    %1461 = vmatpush1.msra.mxu0 0.0
    %1462 = vmatprep.subr.mxu0 0.0
    %1463 = vmatpush1.msra.mxu0 0.0
    %1464 = vmatprep.subr.mxu0 0.0
    %1465 = vmatpush1.msra.mxu0 0.0
    %1466 = vmatprep.subr.mxu0 0.0
    %1467 = vmatpush1.msra.mxu0 0.0
    %1468 = vmatprep.subr.mxu0 0.0
    %1469 = vmatpush1.msra.mxu0 0.0
    %1470 = vmatprep.subr.mxu0 0.0
    %1471 = vmatpush1.msra.mxu0 0.0
    %1472 = vmatprep.subr.mxu0 0.0
    %1473 = vmatpush1.msra.mxu0 0.0
    %1474 = vmatprep.subr.mxu0 0.0
    %1475 = vmatpush1.msra.mxu0 0.0
    %1476 = vmatprep.subr.mxu0 0.0
    %1477 = vmatpush1.msra.mxu0 0.0
    %1478 = vmatprep.subr.mxu0 0.0
    %1479 = vmatpush1.msra.mxu0 0.0
    %1480 = vmatprep.subr.mxu0 0.0
    %1481 = vmatpush1.msra.mxu0 0.0
    %1482 = vmatprep.subr.mxu0 0.0
    %1483 = vmatpush1.msra.mxu0 0.0
    %1484 = vmatprep.subr.mxu0 0.0
    %1485 = vmatpush1.msra.mxu0 0.0
    %1486 = vmatprep.subr.mxu0 0.0
    %1487 = vmatpush1.msra.mxu0 0.0
    %1488 = vmatprep.subr.mxu0 0.0
    %1489 = vmatpush1.msra.mxu0 0.0
    %1490 = vmatprep.mubr.f32.mxu0 0.0
    %1491 = vmatmul.mubr.f32.gmra.mrb[0].mxu0 %v1424
    %v1492 = vpop.f32.mrb[0].mxu0
    %v1493 = vadd.f32 %v1421, %v1492
    %v1494 = vpop.f32.mrb[0].mxu0
    %v1495 = vadd.f32 %v1421, %v1494
    %1496 = vdwg.mxu0
    %v1497 = vld [vmem:[#allocation3] sm:$0xff]
    %v1498 = vld [vmem:[#allocation3 + $0x8] sm:$0xff]
    %v1499 = vld [vmem:[#allocation3 + $0x10] sm:$0xff]
    %1503 = vrot.lane.b32.xlu0 %v1497, 112
    %v1504 = vpop.permute.xlu0 %1503
    %1505 = vrot.lane.b32.xlu0 %v1498, 112
    %v1506 = vpop.permute.xlu0 %1505
    %1507 = vrot.lane.b32.xlu0 %v1499, 112
    %v1508 = vpop.permute.xlu0 %1507
    %vm1509 = vcmask 916480
    %v1510 = vsel %vm1509, %v1504, %v1506
    %v1511 = vsel %vm1509, %v1506, %v1508
    %1514 = vrot.lane.b32.xlu0 %v1497, 96
    %v1515 = vpop.permute.xlu0 %1514
    %1516 = vrot.lane.b32.xlu0 %v1498, 96
    %v1517 = vpop.permute.xlu0 %1516
    %1518 = vrot.lane.b32.xlu0 %v1499, 96
    %v1519 = vpop.permute.xlu0 %1518
    %vm1520 = vcmask 785408
    %v1521 = vsel %vm1520, %v1515, %v1517
    %v1522 = vsel %vm1520, %v1517, %v1519
    %vm1525 = vcmask 195584
    %v1527 = vsel %vm1525, %v31, 0
    %1529 = vmatprep.subr.mxu0 %v1498
    %1530 = vmatpush1.msra.mxu0 %v1497
    %1531 = vmatprep.subr.mxu0 %v1511
    %1532 = vmatpush1.msra.mxu0 %v1510
    %1533 = vmatprep.subr.mxu0 %v1522
    %1534 = vmatpush1.msra.mxu0 %v1521
    %1535 = vmatprep.subr.mxu0 0.0
    %1536 = vmatpush1.msra.mxu0 0.0
    %1537 = vmatprep.subr.mxu0 0.0
    %1538 = vmatpush1.msra.mxu0 0.0
    %1539 = vmatprep.subr.mxu0 0.0
    %1540 = vmatpush1.msra.mxu0 0.0
    %1541 = vmatprep.subr.mxu0 0.0
    %1542 = vmatpush1.msra.mxu0 0.0
    %1543 = vmatprep.subr.mxu0 0.0
    %1544 = vmatpush1.msra.mxu0 0.0
    %1545 = vmatprep.subr.mxu0 0.0
    %1546 = vmatpush1.msra.mxu0 0.0
    %1547 = vmatprep.subr.mxu0 0.0
    %1548 = vmatpush1.msra.mxu0 0.0
    %1549 = vmatprep.subr.mxu0 0.0
    %1550 = vmatpush1.msra.mxu0 0.0
    %1551 = vmatprep.subr.mxu0 0.0
    %1552 = vmatpush1.msra.mxu0 0.0
    %1553 = vmatprep.subr.mxu0 0.0
    %1554 = vmatpush1.msra.mxu0 0.0
    %1555 = vmatprep.subr.mxu0 0.0
    %1556 = vmatpush1.msra.mxu0 0.0
    %1557 = vmatprep.subr.mxu0 0.0
    %1558 = vmatpush1.msra.mxu0 0.0
    %1559 = vmatprep.subr.mxu0 0.0
    %1560 = vmatpush1.msra.mxu0 0.0
    %1561 = vmatprep.subr.mxu0 0.0
    %1562 = vmatpush1.msra.mxu0 0.0
    %1563 = vmatprep.subr.mxu0 0.0
    %1564 = vmatpush1.msra.mxu0 0.0
    %1565 = vmatprep.subr.mxu0 0.0
    %1566 = vmatpush1.msra.mxu0 0.0
    %1567 = vmatprep.subr.mxu0 0.0
    %1568 = vmatpush1.msra.mxu0 0.0
    %1569 = vmatprep.subr.mxu0 0.0
    %1570 = vmatpush1.msra.mxu0 0.0
    %1571 = vmatprep.subr.mxu0 0.0
    %1572 = vmatpush1.msra.mxu0 0.0
    %1573 = vmatprep.subr.mxu0 0.0
    %1574 = vmatpush1.msra.mxu0 0.0
    %1575 = vmatprep.subr.mxu0 0.0
    %1576 = vmatpush1.msra.mxu0 0.0
    %1577 = vmatprep.subr.mxu0 0.0
    %1578 = vmatpush1.msra.mxu0 0.0
    %1579 = vmatprep.subr.mxu0 0.0
    %1580 = vmatpush1.msra.mxu0 0.0
    %1581 = vmatprep.subr.mxu0 0.0
    %1582 = vmatpush1.msra.mxu0 0.0
    %1583 = vmatprep.subr.mxu0 0.0
    %1584 = vmatpush1.msra.mxu0 0.0
    %1585 = vmatprep.subr.mxu0 0.0
    %1586 = vmatpush1.msra.mxu0 0.0
    %1587 = vmatprep.subr.mxu0 0.0
    %1588 = vmatpush1.msra.mxu0 0.0
    %1589 = vmatprep.subr.mxu0 0.0
    %1590 = vmatpush1.msra.mxu0 0.0
    %1591 = vmatprep.subr.mxu0 0.0
    %1592 = vmatpush1.msra.mxu0 0.0
    %1593 = vmatprep.mubr.f32.mxu0 0.0
    %1594 = vmatmul.mubr.f32.gmra.mrb[0].mxu0 %v1527
    %v1595 = vpop.f32.mrb[0].mxu0
    %v1596 = vadd.f32 0.0, %v1595
    %v1597 = vpop.f32.mrb[0].mxu0
    %v1598 = vadd.f32 0.0, %v1597
    %1599 = vdwg.mxu0
    %v1600 = vadd.f32 %v1493, %v1596
    %v1601 = vadd.f32 %v1495, %v1598
    %vm1602 = vcmp.ge.f32.partialorder %v1600, 0.0
    %vm1603 = vcmp.ge.f32.partialorder %v1601, 0.0
    %v1604 = vmul.f32 %v1600, 0.05
    %v1605 = vmul.f32 %v1601, 0.05
    %v1606 = vsel %vm1602, %v1600, %v1604
    %v1607 = vsel %vm1603, %v1601, %v1605
    %1608 = vst [vmem:[#allocation4] sm:$0xff] %v1606
    %1609 = vst [vmem:[#allocation4 + $0x8] sm:$0xff] %v1607
    %s1610 = scalar_lea.vmem %s0, 8
    %v1611 = vld [vmem:[%s1610] sm:$0xff]
    %v1613 = vcombine.high %v1611, %v1611
    %v1614 = vsel %vm50, %v1611, 0
    %v1616 = vsel %vm50, %v1613, 0
    %1618 = vmatprep.subr.mxu0 %v1616
    %1619 = vmatpush1.msra.mxu0 %v1614
    %1620 = vmatprep.subr.mxu0 0.0
    %1621 = vmatpush1.msra.mxu0 0.0
    %1622 = vmatprep.subr.mxu0 0.0
    %1623 = vmatpush1.msra.mxu0 0.0
    %1624 = vmatprep.subr.mxu0 0.0
    %1625 = vmatpush1.msra.mxu0 0.0
    %1626 = vmatprep.subr.mxu0 0.0
    %1627 = vmatpush1.msra.mxu0 0.0
    %1628 = vmatprep.subr.mxu0 0.0
    %1629 = vmatpush1.msra.mxu0 0.0
    %1630 = vmatprep.subr.mxu0 0.0
    %1631 = vmatpush1.msra.mxu0 0.0
    %1632 = vmatprep.subr.mxu0 0.0
    %1633 = vmatpush1.msra.mxu0 0.0
    %1634 = vmatprep.subr.mxu0 0.0
    %1635 = vmatpush1.msra.mxu0 0.0
    %1636 = vmatprep.subr.mxu0 0.0
    %1637 = vmatpush1.msra.mxu0 0.0
    %1638 = vmatprep.subr.mxu0 0.0
    %1639 = vmatpush1.msra.mxu0 0.0
    %1640 = vmatprep.subr.mxu0 0.0
    %1641 = vmatpush1.msra.mxu0 0.0
    %1642 = vmatprep.subr.mxu0 0.0
    %1643 = vmatpush1.msra.mxu0 0.0
    %1644 = vmatprep.subr.mxu0 0.0
    %1645 = vmatpush1.msra.mxu0 0.0
    %1646 = vmatprep.subr.mxu0 0.0
    %1647 = vmatpush1.msra.mxu0 0.0
    %1648 = vmatprep.subr.mxu0 0.0
    %1649 = vmatpush1.msra.mxu0 0.0
    %1650 = vmatprep.subr.mxu0 0.0
    %1651 = vmatpush1.msra.mxu0 0.0
    %1652 = vmatprep.subr.mxu0 0.0
    %1653 = vmatpush1.msra.mxu0 0.0
    %1654 = vmatprep.subr.mxu0 0.0
    %1655 = vmatpush1.msra.mxu0 0.0
    %1656 = vmatprep.subr.mxu0 0.0
    %1657 = vmatpush1.msra.mxu0 0.0
    %1658 = vmatprep.subr.mxu0 0.0
    %1659 = vmatpush1.msra.mxu0 0.0
    %1660 = vmatprep.subr.mxu0 0.0
    %1661 = vmatpush1.msra.mxu0 0.0
    %1662 = vmatprep.subr.mxu0 0.0
    %1663 = vmatpush1.msra.mxu0 0.0
    %1664 = vmatprep.subr.mxu0 0.0
    %1665 = vmatpush1.msra.mxu0 0.0
    %1666 = vmatprep.subr.mxu0 0.0
    %1667 = vmatpush1.msra.mxu0 0.0
    %1668 = vmatprep.subr.mxu0 0.0
    %1669 = vmatpush1.msra.mxu0 0.0
    %1670 = vmatprep.subr.mxu0 0.0
    %1671 = vmatpush1.msra.mxu0 0.0
    %1672 = vmatprep.subr.mxu0 0.0
    %1673 = vmatpush1.msra.mxu0 0.0
    %1674 = vmatprep.subr.mxu0 0.0
    %1675 = vmatpush1.msra.mxu0 0.0
    %1676 = vmatprep.subr.mxu0 0.0
    %1677 = vmatpush1.msra.mxu0 0.0
    %1678 = vmatprep.subr.mxu0 0.0
    %1679 = vmatpush1.msra.mxu0 0.0
    %1680 = vmatprep.subr.mxu0 0.0
    %1681 = vmatpush1.msra.mxu0 0.0
    %1682 = vmatprep.mubr.f32.mxu0 0.0
    %1683 = vmatmul.mubr.f32.gmra.mrb[0].mxu0 %v48
    %v1684 = vpop.f32.mrb[0].mxu0
    %v1685 = vadd.f32 %v42, %v1684
    %v1686 = vpop.f32.mrb[0].mxu0
    %v1687 = vadd.f32 %v42, %v1686
    %1688 = vdwg.mxu0
    %1689 = vst [vmem:[#allocation2] sm:$0xff] %v1685
    %1690 = vst [vmem:[#allocation2 + $0x8] sm:$0xff] %v1687
    %v1691 = vld [vmem:[#allocation2] sm:$0xff]
    %v1693 = vsel %vm34, %v1691, 0
    %1695 = vmatprep.subr.mxu0 0.0
    %1696 = vmatpush1.msra.mxu0 %v27
    %1697 = vmatprep.subr.mxu0 0.0
    %1698 = vmatpush1.msra.mxu0 %v28
    %1699 = vmatprep.subr.mxu0 0.0
    %1700 = vmatpush1.msra.mxu0 0.0
    %1701 = vmatprep.subr.mxu0 0.0
    %1702 = vmatpush1.msra.mxu0 0.0
    %1703 = vmatprep.subr.mxu0 0.0
    %1704 = vmatpush1.msra.mxu0 0.0
    %1705 = vmatprep.subr.mxu0 0.0
    %1706 = vmatpush1.msra.mxu0 0.0
    %1707 = vmatprep.subr.mxu0 0.0
    %1708 = vmatpush1.msra.mxu0 0.0
    %1709 = vmatprep.subr.mxu0 0.0
    %1710 = vmatpush1.msra.mxu0 0.0
    %1711 = vmatprep.subr.mxu0 0.0
    %1712 = vmatpush1.msra.mxu0 0.0
    %1713 = vmatprep.subr.mxu0 0.0
    %1714 = vmatpush1.msra.mxu0 0.0
    %1715 = vmatprep.subr.mxu0 0.0
    %1716 = vmatpush1.msra.mxu0 0.0
    %1717 = vmatprep.subr.mxu0 0.0
    %1718 = vmatpush1.msra.mxu0 0.0
    %1719 = vmatprep.subr.mxu0 0.0
    %1720 = vmatpush1.msra.mxu0 0.0
    %1721 = vmatprep.subr.mxu0 0.0
    %1722 = vmatpush1.msra.mxu0 0.0
    %1723 = vmatprep.subr.mxu0 0.0
    %1724 = vmatpush1.msra.mxu0 0.0
    %1725 = vmatprep.subr.mxu0 0.0
    %1726 = vmatpush1.msra.mxu0 0.0
    %1727 = vmatprep.subr.mxu0 0.0
    %1728 = vmatpush1.msra.mxu0 0.0
    %1729 = vmatprep.subr.mxu0 0.0
    %1730 = vmatpush1.msra.mxu0 0.0
    %1731 = vmatprep.subr.mxu0 0.0
    %1732 = vmatpush1.msra.mxu0 0.0
    %1733 = vmatprep.subr.mxu0 0.0
    %1734 = vmatpush1.msra.mxu0 0.0
    %1735 = vmatprep.subr.mxu0 0.0
    %1736 = vmatpush1.msra.mxu0 0.0
    %1737 = vmatprep.subr.mxu0 0.0
    %1738 = vmatpush1.msra.mxu0 0.0
    %1739 = vmatprep.subr.mxu0 0.0
    %1740 = vmatpush1.msra.mxu0 0.0
    %1741 = vmatprep.subr.mxu0 0.0
    %1742 = vmatpush1.msra.mxu0 0.0
    %1743 = vmatprep.subr.mxu0 0.0
    %1744 = vmatpush1.msra.mxu0 0.0
    %1745 = vmatprep.subr.mxu0 0.0
    %1746 = vmatpush1.msra.mxu0 0.0
    %1747 = vmatprep.subr.mxu0 0.0
    %1748 = vmatpush1.msra.mxu0 0.0
    %1749 = vmatprep.subr.mxu0 0.0
    %1750 = vmatpush1.msra.mxu0 0.0
    %1751 = vmatprep.subr.mxu0 0.0
    %1752 = vmatpush1.msra.mxu0 0.0
    %1753 = vmatprep.subr.mxu0 0.0
    %1754 = vmatpush1.msra.mxu0 0.0
    %1755 = vmatprep.subr.mxu0 0.0
    %1756 = vmatpush1.msra.mxu0 0.0
    %1757 = vmatprep.subr.mxu0 0.0
    %1758 = vmatpush1.msra.mxu0 0.0
    %1759 = vmatprep.mubr.f32.mxu0 0.0
    %1760 = vmatmul.mubr.f32.gmra.mrb[0].mxu0 %v1693
    %v1761 = vpop.f32.mrb[0].mxu0
    %v1762 = vadd.f32 0.0, %v1761
    %v1763 = vpop.f32.mrb[0].mxu0
    %1764 = vdwg.mxu0
    %1766 = vrot.lane.b32.xlu0 %v1762, 16
    %v1767 = vpop.permute.xlu0 %1766
    %1769 = vst.msk [vmem:[#allocation3] sm:$0xff] %vm36, %v1767
    %v1770 = vld [vmem:[#allocation2] sm:$0xff]
    %1772 = vrot.lane.b32.xlu0 %v1770, 112
    %v1773 = vpop.permute.xlu0 %1772
    %v1774 = vsel %vm34, %v1773, 0
    %1776 = vmatprep.subr.mxu0 0.0
    %1777 = vmatpush1.msra.mxu0 %v27
    %1778 = vmatprep.subr.mxu0 0.0
    %1779 = vmatpush1.msra.mxu0 %v28
    %1780 = vmatprep.subr.mxu0 0.0
    %1781 = vmatpush1.msra.mxu0 0.0
    %1782 = vmatprep.subr.mxu0 0.0
    %1783 = vmatpush1.msra.mxu0 0.0
    %1784 = vmatprep.subr.mxu0 0.0
    %1785 = vmatpush1.msra.mxu0 0.0
    %1786 = vmatprep.subr.mxu0 0.0
    %1787 = vmatpush1.msra.mxu0 0.0
    %1788 = vmatprep.subr.mxu0 0.0
    %1789 = vmatpush1.msra.mxu0 0.0
    %1790 = vmatprep.subr.mxu0 0.0
    %1791 = vmatpush1.msra.mxu0 0.0
    %1792 = vmatprep.subr.mxu0 0.0
    %1793 = vmatpush1.msra.mxu0 0.0
    %1794 = vmatprep.subr.mxu0 0.0
    %1795 = vmatpush1.msra.mxu0 0.0
    %1796 = vmatprep.subr.mxu0 0.0
    %1797 = vmatpush1.msra.mxu0 0.0
    %1798 = vmatprep.subr.mxu0 0.0
    %1799 = vmatpush1.msra.mxu0 0.0
    %1800 = vmatprep.subr.mxu0 0.0
    %1801 = vmatpush1.msra.mxu0 0.0
    %1802 = vmatprep.subr.mxu0 0.0
    %1803 = vmatpush1.msra.mxu0 0.0
    %1804 = vmatprep.subr.mxu0 0.0
    %1805 = vmatpush1.msra.mxu0 0.0
    %1806 = vmatprep.subr.mxu0 0.0
    %1807 = vmatpush1.msra.mxu0 0.0
    %1808 = vmatprep.subr.mxu0 0.0
    %1809 = vmatpush1.msra.mxu0 0.0
    %1810 = vmatprep.subr.mxu0 0.0
    %1811 = vmatpush1.msra.mxu0 0.0
    %1812 = vmatprep.subr.mxu0 0.0
    %1813 = vmatpush1.msra.mxu0 0.0
    %1814 = vmatprep.subr.mxu0 0.0
    %1815 = vmatpush1.msra.mxu0 0.0
    %1816 = vmatprep.subr.mxu0 0.0
    %1817 = vmatpush1.msra.mxu0 0.0
    %1818 = vmatprep.subr.mxu0 0.0
    %1819 = vmatpush1.msra.mxu0 0.0
    %1820 = vmatprep.subr.mxu0 0.0
    %1821 = vmatpush1.msra.mxu0 0.0
    %1822 = vmatprep.subr.mxu0 0.0
    %1823 = vmatpush1.msra.mxu0 0.0
    %1824 = vmatprep.subr.mxu0 0.0
    %1825 = vmatpush1.msra.mxu0 0.0
    %1826 = vmatprep.subr.mxu0 0.0
    %1827 = vmatpush1.msra.mxu0 0.0
    %1828 = vmatprep.subr.mxu0 0.0
    %1829 = vmatpush1.msra.mxu0 0.0
    %1830 = vmatprep.subr.mxu0 0.0
    %1831 = vmatpush1.msra.mxu0 0.0
    %1832 = vmatprep.subr.mxu0 0.0
    %1833 = vmatpush1.msra.mxu0 0.0
    %1834 = vmatprep.subr.mxu0 0.0
    %1835 = vmatpush1.msra.mxu0 0.0
    %1836 = vmatprep.subr.mxu0 0.0
    %1837 = vmatpush1.msra.mxu0 0.0
    %1838 = vmatprep.subr.mxu0 0.0
    %1839 = vmatpush1.msra.mxu0 0.0
    %1840 = vmatprep.mubr.f32.mxu0 0.0
    %1841 = vmatmul.mubr.f32.gmra.mrb[0].mxu0 %v1774
    %v1842 = vpop.f32.mrb[0].mxu0
    %v1843 = vadd.f32 0.0, %v1842
    %v1844 = vpop.f32.mrb[0].mxu0
    %1845 = vdwg.mxu0
    %1847 = vrot.lane.b32.xlu0 %v1843, 32
    %v1848 = vpop.permute.xlu0 %1847
    %1850 = vst.msk [vmem:[#allocation3] sm:$0xff] %vm287, %v1848
    %v1851 = vld [vmem:[#allocation2] sm:$0xff]
    %1853 = vrot.lane.b32.xlu0 %v1851, 96
    %v1854 = vpop.permute.xlu0 %1853
    %v1855 = vsel %vm34, %v1854, 0
    %1857 = vmatprep.subr.mxu0 0.0
    %1858 = vmatpush1.msra.mxu0 %v27
    %1859 = vmatprep.subr.mxu0 0.0
    %1860 = vmatpush1.msra.mxu0 %v28
    %1861 = vmatprep.subr.mxu0 0.0
    %1862 = vmatpush1.msra.mxu0 0.0
    %1863 = vmatprep.subr.mxu0 0.0
    %1864 = vmatpush1.msra.mxu0 0.0
    %1865 = vmatprep.subr.mxu0 0.0
    %1866 = vmatpush1.msra.mxu0 0.0
    %1867 = vmatprep.subr.mxu0 0.0
    %1868 = vmatpush1.msra.mxu0 0.0
    %1869 = vmatprep.subr.mxu0 0.0
    %1870 = vmatpush1.msra.mxu0 0.0
    %1871 = vmatprep.subr.mxu0 0.0
    %1872 = vmatpush1.msra.mxu0 0.0
    %1873 = vmatprep.subr.mxu0 0.0
    %1874 = vmatpush1.msra.mxu0 0.0
    %1875 = vmatprep.subr.mxu0 0.0
    %1876 = vmatpush1.msra.mxu0 0.0
    %1877 = vmatprep.subr.mxu0 0.0
    %1878 = vmatpush1.msra.mxu0 0.0
    %1879 = vmatprep.subr.mxu0 0.0
    %1880 = vmatpush1.msra.mxu0 0.0
    %1881 = vmatprep.subr.mxu0 0.0
    %1882 = vmatpush1.msra.mxu0 0.0
    %1883 = vmatprep.subr.mxu0 0.0
    %1884 = vmatpush1.msra.mxu0 0.0
    %1885 = vmatprep.subr.mxu0 0.0
    %1886 = vmatpush1.msra.mxu0 0.0
    %1887 = vmatprep.subr.mxu0 0.0
    %1888 = vmatpush1.msra.mxu0 0.0
    %1889 = vmatprep.subr.mxu0 0.0
    %1890 = vmatpush1.msra.mxu0 0.0
    %1891 = vmatprep.subr.mxu0 0.0
    %1892 = vmatpush1.msra.mxu0 0.0
    %1893 = vmatprep.subr.mxu0 0.0
    %1894 = vmatpush1.msra.mxu0 0.0
    %1895 = vmatprep.subr.mxu0 0.0
    %1896 = vmatpush1.msra.mxu0 0.0
    %1897 = vmatprep.subr.mxu0 0.0
    %1898 = vmatpush1.msra.mxu0 0.0
    %1899 = vmatprep.subr.mxu0 0.0
    %1900 = vmatpush1.msra.mxu0 0.0
    %1901 = vmatprep.subr.mxu0 0.0
    %1902 = vmatpush1.msra.mxu0 0.0
    %1903 = vmatprep.subr.mxu0 0.0
    %1904 = vmatpush1.msra.mxu0 0.0
    %1905 = vmatprep.subr.mxu0 0.0
    %1906 = vmatpush1.msra.mxu0 0.0
    %1907 = vmatprep.subr.mxu0 0.0
    %1908 = vmatpush1.msra.mxu0 0.0
    %1909 = vmatprep.subr.mxu0 0.0
    %1910 = vmatpush1.msra.mxu0 0.0
    %1911 = vmatprep.subr.mxu0 0.0
    %1912 = vmatpush1.msra.mxu0 0.0
    %1913 = vmatprep.subr.mxu0 0.0
    %1914 = vmatpush1.msra.mxu0 0.0
    %1915 = vmatprep.subr.mxu0 0.0
    %1916 = vmatpush1.msra.mxu0 0.0
    %1917 = vmatprep.subr.mxu0 0.0
    %1918 = vmatpush1.msra.mxu0 0.0
    %1919 = vmatprep.subr.mxu0 0.0
    %1920 = vmatpush1.msra.mxu0 0.0
    %1921 = vmatprep.mubr.f32.mxu0 0.0
    %1922 = vmatmul.mubr.f32.gmra.mrb[0].mxu0 %v1855
    %v1923 = vpop.f32.mrb[0].mxu0
    %v1924 = vadd.f32 0.0, %v1923
    %v1925 = vpop.f32.mrb[0].mxu0
    %1926 = vdwg.mxu0
    %1928 = vrot.lane.b32.xlu0 %v1924, 48
    %v1929 = vpop.permute.xlu0 %1928
    %1931 = vst.msk [vmem:[#allocation3] sm:$0xff] %vm369, %v1929
    %v1932 = vld [vmem:[#allocation2] sm:$0xff]
    %1934 = vrot.lane.b32.xlu0 %v1932, 80
    %v1935 = vpop.permute.xlu0 %1934
    %v1936 = vsel %vm34, %v1935, 0
    %1938 = vmatprep.subr.mxu0 0.0
    %1939 = vmatpush1.msra.mxu0 %v27
    %1940 = vmatprep.subr.mxu0 0.0
    %1941 = vmatpush1.msra.mxu0 %v28
    %1942 = vmatprep.subr.mxu0 0.0
    %1943 = vmatpush1.msra.mxu0 0.0
    %1944 = vmatprep.subr.mxu0 0.0
    %1945 = vmatpush1.msra.mxu0 0.0
    %1946 = vmatprep.subr.mxu0 0.0
    %1947 = vmatpush1.msra.mxu0 0.0
    %1948 = vmatprep.subr.mxu0 0.0
    %1949 = vmatpush1.msra.mxu0 0.0
    %1950 = vmatprep.subr.mxu0 0.0
    %1951 = vmatpush1.msra.mxu0 0.0
    %1952 = vmatprep.subr.mxu0 0.0
    %1953 = vmatpush1.msra.mxu0 0.0
    %1954 = vmatprep.subr.mxu0 0.0
    %1955 = vmatpush1.msra.mxu0 0.0
    %1956 = vmatprep.subr.mxu0 0.0
    %1957 = vmatpush1.msra.mxu0 0.0
    %1958 = vmatprep.subr.mxu0 0.0
    %1959 = vmatpush1.msra.mxu0 0.0
    %1960 = vmatprep.subr.mxu0 0.0
    %1961 = vmatpush1.msra.mxu0 0.0
    %1962 = vmatprep.subr.mxu0 0.0
    %1963 = vmatpush1.msra.mxu0 0.0
    %1964 = vmatprep.subr.mxu0 0.0
    %1965 = vmatpush1.msra.mxu0 0.0
    %1966 = vmatprep.subr.mxu0 0.0
    %1967 = vmatpush1.msra.mxu0 0.0
    %1968 = vmatprep.subr.mxu0 0.0
    %1969 = vmatpush1.msra.mxu0 0.0
    %1970 = vmatprep.subr.mxu0 0.0
    %1971 = vmatpush1.msra.mxu0 0.0
    %1972 = vmatprep.subr.mxu0 0.0
    %1973 = vmatpush1.msra.mxu0 0.0
    %1974 = vmatprep.subr.mxu0 0.0
    %1975 = vmatpush1.msra.mxu0 0.0
    %1976 = vmatprep.subr.mxu0 0.0
    %1977 = vmatpush1.msra.mxu0 0.0
    %1978 = vmatprep.subr.mxu0 0.0
    %1979 = vmatpush1.msra.mxu0 0.0
    %1980 = vmatprep.subr.mxu0 0.0
    %1981 = vmatpush1.msra.mxu0 0.0
    %1982 = vmatprep.subr.mxu0 0.0
    %1983 = vmatpush1.msra.mxu0 0.0
    %1984 = vmatprep.subr.mxu0 0.0
    %1985 = vmatpush1.msra.mxu0 0.0
    %1986 = vmatprep.subr.mxu0 0.0
    %1987 = vmatpush1.msra.mxu0 0.0
    %1988 = vmatprep.subr.mxu0 0.0
    %1989 = vmatpush1.msra.mxu0 0.0
    %1990 = vmatprep.subr.mxu0 0.0
    %1991 = vmatpush1.msra.mxu0 0.0
    %1992 = vmatprep.subr.mxu0 0.0
    %1993 = vmatpush1.msra.mxu0 0.0
    %1994 = vmatprep.subr.mxu0 0.0
    %1995 = vmatpush1.msra.mxu0 0.0
    %1996 = vmatprep.subr.mxu0 0.0
    %1997 = vmatpush1.msra.mxu0 0.0
    %1998 = vmatprep.subr.mxu0 0.0
    %1999 = vmatpush1.msra.mxu0 0.0
    %2000 = vmatprep.subr.mxu0 0.0
    %2001 = vmatpush1.msra.mxu0 0.0
    %2002 = vmatprep.mubr.f32.mxu0 0.0
    %2003 = vmatmul.mubr.f32.gmra.mrb[0].mxu0 %v1936
    %v2004 = vpop.f32.mrb[0].mxu0
    %v2005 = vadd.f32 0.0, %v2004
    %v2006 = vpop.f32.mrb[0].mxu0
    %2007 = vdwg.mxu0
    %2009 = vrot.lane.b32.xlu0 %v2005, 64
    %v2010 = vpop.permute.xlu0 %2009
    %2012 = vst.msk [vmem:[#allocation3] sm:$0xff] %vm451, %v2010
    %v2013 = vld [vmem:[#allocation2] sm:$0xff]
    %2015 = vrot.lane.b32.xlu0 %v2013, 64
    %v2016 = vpop.permute.xlu0 %2015
    %v2017 = vsel %vm34, %v2016, 0
    %2019 = vmatprep.subr.mxu0 0.0
    %2020 = vmatpush1.msra.mxu0 %v27
    %2021 = vmatprep.subr.mxu0 0.0
    %2022 = vmatpush1.msra.mxu0 %v28
    %2023 = vmatprep.subr.mxu0 0.0
    %2024 = vmatpush1.msra.mxu0 0.0
    %2025 = vmatprep.subr.mxu0 0.0
    %2026 = vmatpush1.msra.mxu0 0.0
    %2027 = vmatprep.subr.mxu0 0.0
    %2028 = vmatpush1.msra.mxu0 0.0
    %2029 = vmatprep.subr.mxu0 0.0
    %2030 = vmatpush1.msra.mxu0 0.0
    %2031 = vmatprep.subr.mxu0 0.0
    %2032 = vmatpush1.msra.mxu0 0.0
    %2033 = vmatprep.subr.mxu0 0.0
    %2034 = vmatpush1.msra.mxu0 0.0
    %2035 = vmatprep.subr.mxu0 0.0
    %2036 = vmatpush1.msra.mxu0 0.0
    %2037 = vmatprep.subr.mxu0 0.0
    %2038 = vmatpush1.msra.mxu0 0.0
    %2039 = vmatprep.subr.mxu0 0.0
    %2040 = vmatpush1.msra.mxu0 0.0
    %2041 = vmatprep.subr.mxu0 0.0
    %2042 = vmatpush1.msra.mxu0 0.0
    %2043 = vmatprep.subr.mxu0 0.0
    %2044 = vmatpush1.msra.mxu0 0.0
    %2045 = vmatprep.subr.mxu0 0.0
    %2046 = vmatpush1.msra.mxu0 0.0
    %2047 = vmatprep.subr.mxu0 0.0
    %2048 = vmatpush1.msra.mxu0 0.0
    %2049 = vmatprep.subr.mxu0 0.0
    %2050 = vmatpush1.msra.mxu0 0.0
    %2051 = vmatprep.subr.mxu0 0.0
    %2052 = vmatpush1.msra.mxu0 0.0
    %2053 = vmatprep.subr.mxu0 0.0
    %2054 = vmatpush1.msra.mxu0 0.0
    %2055 = vmatprep.subr.mxu0 0.0
    %2056 = vmatpush1.msra.mxu0 0.0
    %2057 = vmatprep.subr.mxu0 0.0
    %2058 = vmatpush1.msra.mxu0 0.0
    %2059 = vmatprep.subr.mxu0 0.0
    %2060 = vmatpush1.msra.mxu0 0.0
    %2061 = vmatprep.subr.mxu0 0.0
    %2062 = vmatpush1.msra.mxu0 0.0
    %2063 = vmatprep.subr.mxu0 0.0
    %2064 = vmatpush1.msra.mxu0 0.0
    %2065 = vmatprep.subr.mxu0 0.0
    %2066 = vmatpush1.msra.mxu0 0.0
    %2067 = vmatprep.subr.mxu0 0.0
    %2068 = vmatpush1.msra.mxu0 0.0
    %2069 = vmatprep.subr.mxu0 0.0
    %2070 = vmatpush1.msra.mxu0 0.0
    %2071 = vmatprep.subr.mxu0 0.0
    %2072 = vmatpush1.msra.mxu0 0.0
    %2073 = vmatprep.subr.mxu0 0.0
    %2074 = vmatpush1.msra.mxu0 0.0
    %2075 = vmatprep.subr.mxu0 0.0
    %2076 = vmatpush1.msra.mxu0 0.0
    %2077 = vmatprep.subr.mxu0 0.0
    %2078 = vmatpush1.msra.mxu0 0.0
    %2079 = vmatprep.subr.mxu0 0.0
    %2080 = vmatpush1.msra.mxu0 0.0
    %2081 = vmatprep.subr.mxu0 0.0
    %2082 = vmatpush1.msra.mxu0 0.0
    %2083 = vmatprep.mubr.f32.mxu0 0.0
    %2084 = vmatmul.mubr.f32.gmra.mrb[0].mxu0 %v2017
    %v2085 = vpop.f32.mrb[0].mxu0
    %v2086 = vadd.f32 0.0, %v2085
    %v2087 = vpop.f32.mrb[0].mxu0
    %2088 = vdwg.mxu0
    %2090 = vrot.lane.b32.xlu0 %v2086, 80
    %v2091 = vpop.permute.xlu0 %2090
    %2093 = vst.msk [vmem:[#allocation3] sm:$0xff] %vm533, %v2091
    %v2094 = vld [vmem:[#allocation2] sm:$0xff]
    %2096 = vrot.lane.b32.xlu0 %v2094, 48
    %v2097 = vpop.permute.xlu0 %2096
    %v2098 = vsel %vm34, %v2097, 0
    %2100 = vmatprep.subr.mxu0 0.0
    %2101 = vmatpush1.msra.mxu0 %v27
    %2102 = vmatprep.subr.mxu0 0.0
    %2103 = vmatpush1.msra.mxu0 %v28
    %2104 = vmatprep.subr.mxu0 0.0
    %2105 = vmatpush1.msra.mxu0 0.0
    %2106 = vmatprep.subr.mxu0 0.0
    %2107 = vmatpush1.msra.mxu0 0.0
    %2108 = vmatprep.subr.mxu0 0.0
    %2109 = vmatpush1.msra.mxu0 0.0
    %2110 = vmatprep.subr.mxu0 0.0
    %2111 = vmatpush1.msra.mxu0 0.0
    %2112 = vmatprep.subr.mxu0 0.0
    %2113 = vmatpush1.msra.mxu0 0.0
    %2114 = vmatprep.subr.mxu0 0.0
    %2115 = vmatpush1.msra.mxu0 0.0
    %2116 = vmatprep.subr.mxu0 0.0
    %2117 = vmatpush1.msra.mxu0 0.0
    %2118 = vmatprep.subr.mxu0 0.0
    %2119 = vmatpush1.msra.mxu0 0.0
    %2120 = vmatprep.subr.mxu0 0.0
    %2121 = vmatpush1.msra.mxu0 0.0
    %2122 = vmatprep.subr.mxu0 0.0
    %2123 = vmatpush1.msra.mxu0 0.0
    %2124 = vmatprep.subr.mxu0 0.0
    %2125 = vmatpush1.msra.mxu0 0.0
    %2126 = vmatprep.subr.mxu0 0.0
    %2127 = vmatpush1.msra.mxu0 0.0
    %2128 = vmatprep.subr.mxu0 0.0
    %2129 = vmatpush1.msra.mxu0 0.0
    %2130 = vmatprep.subr.mxu0 0.0
    %2131 = vmatpush1.msra.mxu0 0.0
    %2132 = vmatprep.subr.mxu0 0.0
    %2133 = vmatpush1.msra.mxu0 0.0
    %2134 = vmatprep.subr.mxu0 0.0
    %2135 = vmatpush1.msra.mxu0 0.0
    %2136 = vmatprep.subr.mxu0 0.0
    %2137 = vmatpush1.msra.mxu0 0.0
    %2138 = vmatprep.subr.mxu0 0.0
    %2139 = vmatpush1.msra.mxu0 0.0
    %2140 = vmatprep.subr.mxu0 0.0
    %2141 = vmatpush1.msra.mxu0 0.0
    %2142 = vmatprep.subr.mxu0 0.0
    %2143 = vmatpush1.msra.mxu0 0.0
    %2144 = vmatprep.subr.mxu0 0.0
    %2145 = vmatpush1.msra.mxu0 0.0
    %2146 = vmatprep.subr.mxu0 0.0
    %2147 = vmatpush1.msra.mxu0 0.0
    %2148 = vmatprep.subr.mxu0 0.0
    %2149 = vmatpush1.msra.mxu0 0.0
    %2150 = vmatprep.subr.mxu0 0.0
    %2151 = vmatpush1.msra.mxu0 0.0
    %2152 = vmatprep.subr.mxu0 0.0
    %2153 = vmatpush1.msra.mxu0 0.0
    %2154 = vmatprep.subr.mxu0 0.0
    %2155 = vmatpush1.msra.mxu0 0.0
    %2156 = vmatprep.subr.mxu0 0.0
    %2157 = vmatpush1.msra.mxu0 0.0
    %2158 = vmatprep.subr.mxu0 0.0
    %2159 = vmatpush1.msra.mxu0 0.0
    %2160 = vmatprep.subr.mxu0 0.0
    %2161 = vmatpush1.msra.mxu0 0.0
    %2162 = vmatprep.subr.mxu0 0.0
    %2163 = vmatpush1.msra.mxu0 0.0
    %2164 = vmatprep.mubr.f32.mxu0 0.0
    %2165 = vmatmul.mubr.f32.gmra.mrb[0].mxu0 %v2098
    %v2166 = vpop.f32.mrb[0].mxu0
    %v2167 = vadd.f32 0.0, %v2166
    %v2168 = vpop.f32.mrb[0].mxu0
    %2169 = vdwg.mxu0
    %2171 = vrot.lane.b32.xlu0 %v2167, 96
    %v2172 = vpop.permute.xlu0 %2171
    %2174 = vst.msk [vmem:[#allocation3] sm:$0xff] %vm615, %v2172
    %v2175 = vld [vmem:[#allocation2] sm:$0xff]
    %2177 = vrot.lane.b32.xlu0 %v2175, 32
    %v2178 = vpop.permute.xlu0 %2177
    %v2179 = vsel %vm34, %v2178, 0
    %2181 = vmatprep.subr.mxu0 0.0
    %2182 = vmatpush1.msra.mxu0 %v27
    %2183 = vmatprep.subr.mxu0 0.0
    %2184 = vmatpush1.msra.mxu0 %v28
    %2185 = vmatprep.subr.mxu0 0.0
    %2186 = vmatpush1.msra.mxu0 0.0
    %2187 = vmatprep.subr.mxu0 0.0
    %2188 = vmatpush1.msra.mxu0 0.0
    %2189 = vmatprep.subr.mxu0 0.0
    %2190 = vmatpush1.msra.mxu0 0.0
    %2191 = vmatprep.subr.mxu0 0.0
    %2192 = vmatpush1.msra.mxu0 0.0
    %2193 = vmatprep.subr.mxu0 0.0
    %2194 = vmatpush1.msra.mxu0 0.0
    %2195 = vmatprep.subr.mxu0 0.0
    %2196 = vmatpush1.msra.mxu0 0.0
    %2197 = vmatprep.subr.mxu0 0.0
    %2198 = vmatpush1.msra.mxu0 0.0
    %2199 = vmatprep.subr.mxu0 0.0
    %2200 = vmatpush1.msra.mxu0 0.0
    %2201 = vmatprep.subr.mxu0 0.0
    %2202 = vmatpush1.msra.mxu0 0.0
    %2203 = vmatprep.subr.mxu0 0.0
    %2204 = vmatpush1.msra.mxu0 0.0
    %2205 = vmatprep.subr.mxu0 0.0
    %2206 = vmatpush1.msra.mxu0 0.0
    %2207 = vmatprep.subr.mxu0 0.0
    %2208 = vmatpush1.msra.mxu0 0.0
    %2209 = vmatprep.subr.mxu0 0.0
    %2210 = vmatpush1.msra.mxu0 0.0
    %2211 = vmatprep.subr.mxu0 0.0
    %2212 = vmatpush1.msra.mxu0 0.0
    %2213 = vmatprep.subr.mxu0 0.0
    %2214 = vmatpush1.msra.mxu0 0.0
    %2215 = vmatprep.subr.mxu0 0.0
    %2216 = vmatpush1.msra.mxu0 0.0
    %2217 = vmatprep.subr.mxu0 0.0
    %2218 = vmatpush1.msra.mxu0 0.0
    %2219 = vmatprep.subr.mxu0 0.0
    %2220 = vmatpush1.msra.mxu0 0.0
    %2221 = vmatprep.subr.mxu0 0.0
    %2222 = vmatpush1.msra.mxu0 0.0
    %2223 = vmatprep.subr.mxu0 0.0
    %2224 = vmatpush1.msra.mxu0 0.0
    %2225 = vmatprep.subr.mxu0 0.0
    %2226 = vmatpush1.msra.mxu0 0.0
    %2227 = vmatprep.subr.mxu0 0.0
    %2228 = vmatpush1.msra.mxu0 0.0
    %2229 = vmatprep.subr.mxu0 0.0
    %2230 = vmatpush1.msra.mxu0 0.0
    %2231 = vmatprep.subr.mxu0 0.0
    %2232 = vmatpush1.msra.mxu0 0.0
    %2233 = vmatprep.subr.mxu0 0.0
    %2234 = vmatpush1.msra.mxu0 0.0
    %2235 = vmatprep.subr.mxu0 0.0
    %2236 = vmatpush1.msra.mxu0 0.0
    %2237 = vmatprep.subr.mxu0 0.0
    %2238 = vmatpush1.msra.mxu0 0.0
    %2239 = vmatprep.subr.mxu0 0.0
    %2240 = vmatpush1.msra.mxu0 0.0
    %2241 = vmatprep.subr.mxu0 0.0
    %2242 = vmatpush1.msra.mxu0 0.0
    %2243 = vmatprep.subr.mxu0 0.0
    %2244 = vmatpush1.msra.mxu0 0.0
    %2245 = vmatprep.mubr.f32.mxu0 0.0
    %2246 = vmatmul.mubr.f32.gmra.mrb[0].mxu0 %v2179
    %v2247 = vpop.f32.mrb[0].mxu0
    %v2248 = vadd.f32 0.0, %v2247
    %v2249 = vpop.f32.mrb[0].mxu0
    %2250 = vdwg.mxu0
    %2252 = vrot.lane.b32.xlu0 %v2248, 112
    %v2253 = vpop.permute.xlu0 %2252
    %2255 = vst.msk [vmem:[#allocation3] sm:$0xff] %vm697, %v2253
    %v2256 = vld [vmem:[#allocation2] sm:$0xff]
    %2258 = vrot.lane.b32.xlu0 %v2256, 16
    %v2259 = vpop.permute.xlu0 %2258
    %v2260 = vsel %vm34, %v2259, 0
    %2262 = vmatprep.subr.mxu0 0.0
    %2263 = vmatpush1.msra.mxu0 %v27
    %2264 = vmatprep.subr.mxu0 0.0
    %2265 = vmatpush1.msra.mxu0 %v28
    %2266 = vmatprep.subr.mxu0 0.0
    %2267 = vmatpush1.msra.mxu0 0.0
    %2268 = vmatprep.subr.mxu0 0.0
    %2269 = vmatpush1.msra.mxu0 0.0
    %2270 = vmatprep.subr.mxu0 0.0
    %2271 = vmatpush1.msra.mxu0 0.0
    %2272 = vmatprep.subr.mxu0 0.0
    %2273 = vmatpush1.msra.mxu0 0.0
    %2274 = vmatprep.subr.mxu0 0.0
    %2275 = vmatpush1.msra.mxu0 0.0
    %2276 = vmatprep.subr.mxu0 0.0
    %2277 = vmatpush1.msra.mxu0 0.0
    %2278 = vmatprep.subr.mxu0 0.0
    %2279 = vmatpush1.msra.mxu0 0.0
    %2280 = vmatprep.subr.mxu0 0.0
    %2281 = vmatpush1.msra.mxu0 0.0
    %2282 = vmatprep.subr.mxu0 0.0
    %2283 = vmatpush1.msra.mxu0 0.0
    %2284 = vmatprep.subr.mxu0 0.0
    %2285 = vmatpush1.msra.mxu0 0.0
    %2286 = vmatprep.subr.mxu0 0.0
    %2287 = vmatpush1.msra.mxu0 0.0
    %2288 = vmatprep.subr.mxu0 0.0
    %2289 = vmatpush1.msra.mxu0 0.0
    %2290 = vmatprep.subr.mxu0 0.0
    %2291 = vmatpush1.msra.mxu0 0.0
    %2292 = vmatprep.subr.mxu0 0.0
    %2293 = vmatpush1.msra.mxu0 0.0
    %2294 = vmatprep.subr.mxu0 0.0
    %2295 = vmatpush1.msra.mxu0 0.0
    %2296 = vmatprep.subr.mxu0 0.0
    %2297 = vmatpush1.msra.mxu0 0.0
    %2298 = vmatprep.subr.mxu0 0.0
    %2299 = vmatpush1.msra.mxu0 0.0
    %2300 = vmatprep.subr.mxu0 0.0
    %2301 = vmatpush1.msra.mxu0 0.0
    %2302 = vmatprep.subr.mxu0 0.0
    %2303 = vmatpush1.msra.mxu0 0.0
    %2304 = vmatprep.subr.mxu0 0.0
    %2305 = vmatpush1.msra.mxu0 0.0
    %2306 = vmatprep.subr.mxu0 0.0
    %2307 = vmatpush1.msra.mxu0 0.0
    %2308 = vmatprep.subr.mxu0 0.0
    %2309 = vmatpush1.msra.mxu0 0.0
    %2310 = vmatprep.subr.mxu0 0.0
    %2311 = vmatpush1.msra.mxu0 0.0
    %2312 = vmatprep.subr.mxu0 0.0
    %2313 = vmatpush1.msra.mxu0 0.0
    %2314 = vmatprep.subr.mxu0 0.0
    %2315 = vmatpush1.msra.mxu0 0.0
    %2316 = vmatprep.subr.mxu0 0.0
    %2317 = vmatpush1.msra.mxu0 0.0
    %2318 = vmatprep.subr.mxu0 0.0
    %2319 = vmatpush1.msra.mxu0 0.0
    %2320 = vmatprep.subr.mxu0 0.0
    %2321 = vmatpush1.msra.mxu0 0.0
    %2322 = vmatprep.subr.mxu0 0.0
    %2323 = vmatpush1.msra.mxu0 0.0
    %2324 = vmatprep.subr.mxu0 0.0
    %2325 = vmatpush1.msra.mxu0 0.0
    %2326 = vmatprep.mubr.f32.mxu0 0.0
    %2327 = vmatmul.mubr.f32.gmra.mrb[0].mxu0 %v2260
    %v2328 = vpop.f32.mrb[0].mxu0
    %v2329 = vadd.f32 0.0, %v2328
    %v2330 = vpop.f32.mrb[0].mxu0
    %2331 = vdwg.mxu0
    %2332 = vst.msk [vmem:[#allocation3 + $0x8] sm:$0xff] %vm34, %v2329
    %v2333 = vld [vmem:[#allocation2 + $0x8] sm:$0xff]
    %v2335 = vsel %vm34, %v2333, 0
    %2337 = vmatprep.subr.mxu0 0.0
    %2338 = vmatpush1.msra.mxu0 %v27
    %2339 = vmatprep.subr.mxu0 0.0
    %2340 = vmatpush1.msra.mxu0 %v28
    %2341 = vmatprep.subr.mxu0 0.0
    %2342 = vmatpush1.msra.mxu0 0.0
    %2343 = vmatprep.subr.mxu0 0.0
    %2344 = vmatpush1.msra.mxu0 0.0
    %2345 = vmatprep.subr.mxu0 0.0
    %2346 = vmatpush1.msra.mxu0 0.0
    %2347 = vmatprep.subr.mxu0 0.0
    %2348 = vmatpush1.msra.mxu0 0.0
    %2349 = vmatprep.subr.mxu0 0.0
    %2350 = vmatpush1.msra.mxu0 0.0
    %2351 = vmatprep.subr.mxu0 0.0
    %2352 = vmatpush1.msra.mxu0 0.0
    %2353 = vmatprep.subr.mxu0 0.0
    %2354 = vmatpush1.msra.mxu0 0.0
    %2355 = vmatprep.subr.mxu0 0.0
    %2356 = vmatpush1.msra.mxu0 0.0
    %2357 = vmatprep.subr.mxu0 0.0
    %2358 = vmatpush1.msra.mxu0 0.0
    %2359 = vmatprep.subr.mxu0 0.0
    %2360 = vmatpush1.msra.mxu0 0.0
    %2361 = vmatprep.subr.mxu0 0.0
    %2362 = vmatpush1.msra.mxu0 0.0
    %2363 = vmatprep.subr.mxu0 0.0
    %2364 = vmatpush1.msra.mxu0 0.0
    %2365 = vmatprep.subr.mxu0 0.0
    %2366 = vmatpush1.msra.mxu0 0.0
    %2367 = vmatprep.subr.mxu0 0.0
    %2368 = vmatpush1.msra.mxu0 0.0
    %2369 = vmatprep.subr.mxu0 0.0
    %2370 = vmatpush1.msra.mxu0 0.0
    %2371 = vmatprep.subr.mxu0 0.0
    %2372 = vmatpush1.msra.mxu0 0.0
    %2373 = vmatprep.subr.mxu0 0.0
    %2374 = vmatpush1.msra.mxu0 0.0
    %2375 = vmatprep.subr.mxu0 0.0
    %2376 = vmatpush1.msra.mxu0 0.0
    %2377 = vmatprep.subr.mxu0 0.0
    %2378 = vmatpush1.msra.mxu0 0.0
    %2379 = vmatprep.subr.mxu0 0.0
    %2380 = vmatpush1.msra.mxu0 0.0
    %2381 = vmatprep.subr.mxu0 0.0
    %2382 = vmatpush1.msra.mxu0 0.0
    %2383 = vmatprep.subr.mxu0 0.0
    %2384 = vmatpush1.msra.mxu0 0.0
    %2385 = vmatprep.subr.mxu0 0.0
    %2386 = vmatpush1.msra.mxu0 0.0
    %2387 = vmatprep.subr.mxu0 0.0
    %2388 = vmatpush1.msra.mxu0 0.0
    %2389 = vmatprep.subr.mxu0 0.0
    %2390 = vmatpush1.msra.mxu0 0.0
    %2391 = vmatprep.subr.mxu0 0.0
    %2392 = vmatpush1.msra.mxu0 0.0
    %2393 = vmatprep.subr.mxu0 0.0
    %2394 = vmatpush1.msra.mxu0 0.0
    %2395 = vmatprep.subr.mxu0 0.0
    %2396 = vmatpush1.msra.mxu0 0.0
    %2397 = vmatprep.subr.mxu0 0.0
    %2398 = vmatpush1.msra.mxu0 0.0
    %2399 = vmatprep.subr.mxu0 0.0
    %2400 = vmatpush1.msra.mxu0 0.0
    %2401 = vmatprep.mubr.f32.mxu0 0.0
    %2402 = vmatmul.mubr.f32.gmra.mrb[0].mxu0 %v2335
    %v2403 = vpop.f32.mrb[0].mxu0
    %v2404 = vadd.f32 0.0, %v2403
    %v2405 = vpop.f32.mrb[0].mxu0
    %2406 = vdwg.mxu0
    %2408 = vrot.lane.b32.xlu0 %v2404, 16
    %v2409 = vpop.permute.xlu0 %2408
    %2411 = vst.msk [vmem:[#allocation3 + $0x8] sm:$0xff] %vm36, %v2409
    %v2412 = vld [vmem:[#allocation2 + $0x8] sm:$0xff]
    %2414 = vrot.lane.b32.xlu0 %v2412, 112
    %v2415 = vpop.permute.xlu0 %2414
    %v2416 = vsel %vm34, %v2415, 0
    %2418 = vmatprep.subr.mxu0 0.0
    %2419 = vmatpush1.msra.mxu0 %v27
    %2420 = vmatprep.subr.mxu0 0.0
    %2421 = vmatpush1.msra.mxu0 %v28
    %2422 = vmatprep.subr.mxu0 0.0
    %2423 = vmatpush1.msra.mxu0 0.0
    %2424 = vmatprep.subr.mxu0 0.0
    %2425 = vmatpush1.msra.mxu0 0.0
    %2426 = vmatprep.subr.mxu0 0.0
    %2427 = vmatpush1.msra.mxu0 0.0
    %2428 = vmatprep.subr.mxu0 0.0
    %2429 = vmatpush1.msra.mxu0 0.0
    %2430 = vmatprep.subr.mxu0 0.0
    %2431 = vmatpush1.msra.mxu0 0.0
    %2432 = vmatprep.subr.mxu0 0.0
    %2433 = vmatpush1.msra.mxu0 0.0
    %2434 = vmatprep.subr.mxu0 0.0
    %2435 = vmatpush1.msra.mxu0 0.0
    %2436 = vmatprep.subr.mxu0 0.0
    %2437 = vmatpush1.msra.mxu0 0.0
    %2438 = vmatprep.subr.mxu0 0.0
    %2439 = vmatpush1.msra.mxu0 0.0
    %2440 = vmatprep.subr.mxu0 0.0
    %2441 = vmatpush1.msra.mxu0 0.0
    %2442 = vmatprep.subr.mxu0 0.0
    %2443 = vmatpush1.msra.mxu0 0.0
    %2444 = vmatprep.subr.mxu0 0.0
    %2445 = vmatpush1.msra.mxu0 0.0
    %2446 = vmatprep.subr.mxu0 0.0
    %2447 = vmatpush1.msra.mxu0 0.0
    %2448 = vmatprep.subr.mxu0 0.0
    %2449 = vmatpush1.msra.mxu0 0.0
    %2450 = vmatprep.subr.mxu0 0.0
    %2451 = vmatpush1.msra.mxu0 0.0
    %2452 = vmatprep.subr.mxu0 0.0
    %2453 = vmatpush1.msra.mxu0 0.0
    %2454 = vmatprep.subr.mxu0 0.0
    %2455 = vmatpush1.msra.mxu0 0.0
    %2456 = vmatprep.subr.mxu0 0.0
    %2457 = vmatpush1.msra.mxu0 0.0
    %2458 = vmatprep.subr.mxu0 0.0
    %2459 = vmatpush1.msra.mxu0 0.0
    %2460 = vmatprep.subr.mxu0 0.0
    %2461 = vmatpush1.msra.mxu0 0.0
    %2462 = vmatprep.subr.mxu0 0.0
    %2463 = vmatpush1.msra.mxu0 0.0
    %2464 = vmatprep.subr.mxu0 0.0
    %2465 = vmatpush1.msra.mxu0 0.0
    %2466 = vmatprep.subr.mxu0 0.0
    %2467 = vmatpush1.msra.mxu0 0.0
    %2468 = vmatprep.subr.mxu0 0.0
    %2469 = vmatpush1.msra.mxu0 0.0
    %2470 = vmatprep.subr.mxu0 0.0
    %2471 = vmatpush1.msra.mxu0 0.0
    %2472 = vmatprep.subr.mxu0 0.0
    %2473 = vmatpush1.msra.mxu0 0.0
    %2474 = vmatprep.subr.mxu0 0.0
    %2475 = vmatpush1.msra.mxu0 0.0
    %2476 = vmatprep.subr.mxu0 0.0
    %2477 = vmatpush1.msra.mxu0 0.0
    %2478 = vmatprep.subr.mxu0 0.0
    %2479 = vmatpush1.msra.mxu0 0.0
    %2480 = vmatprep.subr.mxu0 0.0
    %2481 = vmatpush1.msra.mxu0 0.0
    %2482 = vmatprep.mubr.f32.mxu0 0.0
    %2483 = vmatmul.mubr.f32.gmra.mrb[0].mxu0 %v2416
    %v2484 = vpop.f32.mrb[0].mxu0
    %v2485 = vadd.f32 0.0, %v2484
    %v2486 = vpop.f32.mrb[0].mxu0
    %2487 = vdwg.mxu0
    %2489 = vrot.lane.b32.xlu0 %v2485, 32
    %v2490 = vpop.permute.xlu0 %2489
    %2492 = vst.msk [vmem:[#allocation3 + $0x8] sm:$0xff] %vm287, %v2490
    %v2493 = vld [vmem:[#allocation2 + $0x8] sm:$0xff]
    %2495 = vrot.lane.b32.xlu0 %v2493, 96
    %v2496 = vpop.permute.xlu0 %2495
    %v2497 = vsel %vm34, %v2496, 0
    %2499 = vmatprep.subr.mxu0 0.0
    %2500 = vmatpush1.msra.mxu0 %v27
    %2501 = vmatprep.subr.mxu0 0.0
    %2502 = vmatpush1.msra.mxu0 %v28
    %2503 = vmatprep.subr.mxu0 0.0
    %2504 = vmatpush1.msra.mxu0 0.0
    %2505 = vmatprep.subr.mxu0 0.0
    %2506 = vmatpush1.msra.mxu0 0.0
    %2507 = vmatprep.subr.mxu0 0.0
    %2508 = vmatpush1.msra.mxu0 0.0
    %2509 = vmatprep.subr.mxu0 0.0
    %2510 = vmatpush1.msra.mxu0 0.0
    %2511 = vmatprep.subr.mxu0 0.0
    %2512 = vmatpush1.msra.mxu0 0.0
    %2513 = vmatprep.subr.mxu0 0.0
    %2514 = vmatpush1.msra.mxu0 0.0
    %2515 = vmatprep.subr.mxu0 0.0
    %2516 = vmatpush1.msra.mxu0 0.0
    %2517 = vmatprep.subr.mxu0 0.0
    %2518 = vmatpush1.msra.mxu0 0.0
    %2519 = vmatprep.subr.mxu0 0.0
    %2520 = vmatpush1.msra.mxu0 0.0
    %2521 = vmatprep.subr.mxu0 0.0
    %2522 = vmatpush1.msra.mxu0 0.0
    %2523 = vmatprep.subr.mxu0 0.0
    %2524 = vmatpush1.msra.mxu0 0.0
    %2525 = vmatprep.subr.mxu0 0.0
    %2526 = vmatpush1.msra.mxu0 0.0
    %2527 = vmatprep.subr.mxu0 0.0
    %2528 = vmatpush1.msra.mxu0 0.0
    %2529 = vmatprep.subr.mxu0 0.0
    %2530 = vmatpush1.msra.mxu0 0.0
    %2531 = vmatprep.subr.mxu0 0.0
    %2532 = vmatpush1.msra.mxu0 0.0
    %2533 = vmatprep.subr.mxu0 0.0
    %2534 = vmatpush1.msra.mxu0 0.0
    %2535 = vmatprep.subr.mxu0 0.0
    %2536 = vmatpush1.msra.mxu0 0.0
    %2537 = vmatprep.subr.mxu0 0.0
    %2538 = vmatpush1.msra.mxu0 0.0
    %2539 = vmatprep.subr.mxu0 0.0
    %2540 = vmatpush1.msra.mxu0 0.0
    %2541 = vmatprep.subr.mxu0 0.0
    %2542 = vmatpush1.msra.mxu0 0.0
    %2543 = vmatprep.subr.mxu0 0.0
    %2544 = vmatpush1.msra.mxu0 0.0
    %2545 = vmatprep.subr.mxu0 0.0
    %2546 = vmatpush1.msra.mxu0 0.0
    %2547 = vmatprep.subr.mxu0 0.0
    %2548 = vmatpush1.msra.mxu0 0.0
    %2549 = vmatprep.subr.mxu0 0.0
    %2550 = vmatpush1.msra.mxu0 0.0
    %2551 = vmatprep.subr.mxu0 0.0
    %2552 = vmatpush1.msra.mxu0 0.0
    %2553 = vmatprep.subr.mxu0 0.0
    %2554 = vmatpush1.msra.mxu0 0.0
    %2555 = vmatprep.subr.mxu0 0.0
    %2556 = vmatpush1.msra.mxu0 0.0
    %2557 = vmatprep.subr.mxu0 0.0
    %2558 = vmatpush1.msra.mxu0 0.0
    %2559 = vmatprep.subr.mxu0 0.0
    %2560 = vmatpush1.msra.mxu0 0.0
    %2561 = vmatprep.subr.mxu0 0.0
    %2562 = vmatpush1.msra.mxu0 0.0
    %2563 = vmatprep.mubr.f32.mxu0 0.0
    %2564 = vmatmul.mubr.f32.gmra.mrb[0].mxu0 %v2497
    %v2565 = vpop.f32.mrb[0].mxu0
    %v2566 = vadd.f32 0.0, %v2565
    %v2567 = vpop.f32.mrb[0].mxu0
    %2568 = vdwg.mxu0
    %2570 = vrot.lane.b32.xlu0 %v2566, 48
    %v2571 = vpop.permute.xlu0 %2570
    %2573 = vst.msk [vmem:[#allocation3 + $0x8] sm:$0xff] %vm369, %v2571
    %v2574 = vld [vmem:[#allocation2 + $0x8] sm:$0xff]
    %2576 = vrot.lane.b32.xlu0 %v2574, 80
    %v2577 = vpop.permute.xlu0 %2576
    %v2578 = vsel %vm34, %v2577, 0
    %2580 = vmatprep.subr.mxu0 0.0
    %2581 = vmatpush1.msra.mxu0 %v27
    %2582 = vmatprep.subr.mxu0 0.0
    %2583 = vmatpush1.msra.mxu0 %v28
    %2584 = vmatprep.subr.mxu0 0.0
    %2585 = vmatpush1.msra.mxu0 0.0
    %2586 = vmatprep.subr.mxu0 0.0
    %2587 = vmatpush1.msra.mxu0 0.0
    %2588 = vmatprep.subr.mxu0 0.0
    %2589 = vmatpush1.msra.mxu0 0.0
    %2590 = vmatprep.subr.mxu0 0.0
    %2591 = vmatpush1.msra.mxu0 0.0
    %2592 = vmatprep.subr.mxu0 0.0
    %2593 = vmatpush1.msra.mxu0 0.0
    %2594 = vmatprep.subr.mxu0 0.0
    %2595 = vmatpush1.msra.mxu0 0.0
    %2596 = vmatprep.subr.mxu0 0.0
    %2597 = vmatpush1.msra.mxu0 0.0
    %2598 = vmatprep.subr.mxu0 0.0
    %2599 = vmatpush1.msra.mxu0 0.0
    %2600 = vmatprep.subr.mxu0 0.0
    %2601 = vmatpush1.msra.mxu0 0.0
    %2602 = vmatprep.subr.mxu0 0.0
    %2603 = vmatpush1.msra.mxu0 0.0
    %2604 = vmatprep.subr.mxu0 0.0
    %2605 = vmatpush1.msra.mxu0 0.0
    %2606 = vmatprep.subr.mxu0 0.0
    %2607 = vmatpush1.msra.mxu0 0.0
    %2608 = vmatprep.subr.mxu0 0.0
    %2609 = vmatpush1.msra.mxu0 0.0
    %2610 = vmatprep.subr.mxu0 0.0
    %2611 = vmatpush1.msra.mxu0 0.0
    %2612 = vmatprep.subr.mxu0 0.0
    %2613 = vmatpush1.msra.mxu0 0.0
    %2614 = vmatprep.subr.mxu0 0.0
    %2615 = vmatpush1.msra.mxu0 0.0
    %2616 = vmatprep.subr.mxu0 0.0
    %2617 = vmatpush1.msra.mxu0 0.0
    %2618 = vmatprep.subr.mxu0 0.0
    %2619 = vmatpush1.msra.mxu0 0.0
    %2620 = vmatprep.subr.mxu0 0.0
    %2621 = vmatpush1.msra.mxu0 0.0
    %2622 = vmatprep.subr.mxu0 0.0
    %2623 = vmatpush1.msra.mxu0 0.0
    %2624 = vmatprep.subr.mxu0 0.0
    %2625 = vmatpush1.msra.mxu0 0.0
    %2626 = vmatprep.subr.mxu0 0.0
    %2627 = vmatpush1.msra.mxu0 0.0
    %2628 = vmatprep.subr.mxu0 0.0
    %2629 = vmatpush1.msra.mxu0 0.0
    %2630 = vmatprep.subr.mxu0 0.0
    %2631 = vmatpush1.msra.mxu0 0.0
    %2632 = vmatprep.subr.mxu0 0.0
    %2633 = vmatpush1.msra.mxu0 0.0
    %2634 = vmatprep.subr.mxu0 0.0
    %2635 = vmatpush1.msra.mxu0 0.0
    %2636 = vmatprep.subr.mxu0 0.0
    %2637 = vmatpush1.msra.mxu0 0.0
    %2638 = vmatprep.subr.mxu0 0.0
    %2639 = vmatpush1.msra.mxu0 0.0
    %2640 = vmatprep.subr.mxu0 0.0
    %2641 = vmatpush1.msra.mxu0 0.0
    %2642 = vmatprep.subr.mxu0 0.0
    %2643 = vmatpush1.msra.mxu0 0.0
    %2644 = vmatprep.mubr.f32.mxu0 0.0
    %2645 = vmatmul.mubr.f32.gmra.mrb[0].mxu0 %v2578
    %v2646 = vpop.f32.mrb[0].mxu0
    %v2647 = vadd.f32 0.0, %v2646
    %v2648 = vpop.f32.mrb[0].mxu0
    %2649 = vdwg.mxu0
    %2651 = vrot.lane.b32.xlu0 %v2647, 64
    %v2652 = vpop.permute.xlu0 %2651
    %2654 = vst.msk [vmem:[#allocation3 + $0x8] sm:$0xff] %vm451, %v2652
    %v2655 = vld [vmem:[#allocation2 + $0x8] sm:$0xff]
    %2657 = vrot.lane.b32.xlu0 %v2655, 64
    %v2658 = vpop.permute.xlu0 %2657
    %v2659 = vsel %vm34, %v2658, 0
    %2661 = vmatprep.subr.mxu0 0.0
    %2662 = vmatpush1.msra.mxu0 %v27
    %2663 = vmatprep.subr.mxu0 0.0
    %2664 = vmatpush1.msra.mxu0 %v28
    %2665 = vmatprep.subr.mxu0 0.0
    %2666 = vmatpush1.msra.mxu0 0.0
    %2667 = vmatprep.subr.mxu0 0.0
    %2668 = vmatpush1.msra.mxu0 0.0
    %2669 = vmatprep.subr.mxu0 0.0
    %2670 = vmatpush1.msra.mxu0 0.0
    %2671 = vmatprep.subr.mxu0 0.0
    %2672 = vmatpush1.msra.mxu0 0.0
    %2673 = vmatprep.subr.mxu0 0.0
    %2674 = vmatpush1.msra.mxu0 0.0
    %2675 = vmatprep.subr.mxu0 0.0
    %2676 = vmatpush1.msra.mxu0 0.0
    %2677 = vmatprep.subr.mxu0 0.0
    %2678 = vmatpush1.msra.mxu0 0.0
    %2679 = vmatprep.subr.mxu0 0.0
    %2680 = vmatpush1.msra.mxu0 0.0
    %2681 = vmatprep.subr.mxu0 0.0
    %2682 = vmatpush1.msra.mxu0 0.0
    %2683 = vmatprep.subr.mxu0 0.0
    %2684 = vmatpush1.msra.mxu0 0.0
    %2685 = vmatprep.subr.mxu0 0.0
    %2686 = vmatpush1.msra.mxu0 0.0
    %2687 = vmatprep.subr.mxu0 0.0
    %2688 = vmatpush1.msra.mxu0 0.0
    %2689 = vmatprep.subr.mxu0 0.0
    %2690 = vmatpush1.msra.mxu0 0.0
    %2691 = vmatprep.subr.mxu0 0.0
    %2692 = vmatpush1.msra.mxu0 0.0
    %2693 = vmatprep.subr.mxu0 0.0
    %2694 = vmatpush1.msra.mxu0 0.0
    %2695 = vmatprep.subr.mxu0 0.0
    %2696 = vmatpush1.msra.mxu0 0.0
    %2697 = vmatprep.subr.mxu0 0.0
    %2698 = vmatpush1.msra.mxu0 0.0
    %2699 = vmatprep.subr.mxu0 0.0
    %2700 = vmatpush1.msra.mxu0 0.0
    %2701 = vmatprep.subr.mxu0 0.0
    %2702 = vmatpush1.msra.mxu0 0.0
    %2703 = vmatprep.subr.mxu0 0.0
    %2704 = vmatpush1.msra.mxu0 0.0
    %2705 = vmatprep.subr.mxu0 0.0
    %2706 = vmatpush1.msra.mxu0 0.0
    %2707 = vmatprep.subr.mxu0 0.0
    %2708 = vmatpush1.msra.mxu0 0.0
    %2709 = vmatprep.subr.mxu0 0.0
    %2710 = vmatpush1.msra.mxu0 0.0
    %2711 = vmatprep.subr.mxu0 0.0
    %2712 = vmatpush1.msra.mxu0 0.0
    %2713 = vmatprep.subr.mxu0 0.0
    %2714 = vmatpush1.msra.mxu0 0.0
    %2715 = vmatprep.subr.mxu0 0.0
    %2716 = vmatpush1.msra.mxu0 0.0
    %2717 = vmatprep.subr.mxu0 0.0
    %2718 = vmatpush1.msra.mxu0 0.0
    %2719 = vmatprep.subr.mxu0 0.0
    %2720 = vmatpush1.msra.mxu0 0.0
    %2721 = vmatprep.subr.mxu0 0.0
    %2722 = vmatpush1.msra.mxu0 0.0
    %2723 = vmatprep.subr.mxu0 0.0
    %2724 = vmatpush1.msra.mxu0 0.0
    %2725 = vmatprep.mubr.f32.mxu0 0.0
    %2726 = vmatmul.mubr.f32.gmra.mrb[0].mxu0 %v2659
    %v2727 = vpop.f32.mrb[0].mxu0
    %v2728 = vadd.f32 0.0, %v2727
    %v2729 = vpop.f32.mrb[0].mxu0
    %2730 = vdwg.mxu0
    %2732 = vrot.lane.b32.xlu0 %v2728, 80
    %v2733 = vpop.permute.xlu0 %2732
    %2735 = vst.msk [vmem:[#allocation3 + $0x8] sm:$0xff] %vm533, %v2733
    %v2736 = vld [vmem:[#allocation2 + $0x8] sm:$0xff]
    %2738 = vrot.lane.b32.xlu0 %v2736, 48
    %v2739 = vpop.permute.xlu0 %2738
    %v2740 = vsel %vm34, %v2739, 0
    %2742 = vmatprep.subr.mxu0 0.0
    %2743 = vmatpush1.msra.mxu0 %v27
    %2744 = vmatprep.subr.mxu0 0.0
    %2745 = vmatpush1.msra.mxu0 %v28
    %2746 = vmatprep.subr.mxu0 0.0
    %2747 = vmatpush1.msra.mxu0 0.0
    %2748 = vmatprep.subr.mxu0 0.0
    %2749 = vmatpush1.msra.mxu0 0.0
    %2750 = vmatprep.subr.mxu0 0.0
    %2751 = vmatpush1.msra.mxu0 0.0
    %2752 = vmatprep.subr.mxu0 0.0
    %2753 = vmatpush1.msra.mxu0 0.0
    %2754 = vmatprep.subr.mxu0 0.0
    %2755 = vmatpush1.msra.mxu0 0.0
    %2756 = vmatprep.subr.mxu0 0.0
    %2757 = vmatpush1.msra.mxu0 0.0
    %2758 = vmatprep.subr.mxu0 0.0
    %2759 = vmatpush1.msra.mxu0 0.0
    %2760 = vmatprep.subr.mxu0 0.0
    %2761 = vmatpush1.msra.mxu0 0.0
    %2762 = vmatprep.subr.mxu0 0.0
    %2763 = vmatpush1.msra.mxu0 0.0
    %2764 = vmatprep.subr.mxu0 0.0
    %2765 = vmatpush1.msra.mxu0 0.0
    %2766 = vmatprep.subr.mxu0 0.0
    %2767 = vmatpush1.msra.mxu0 0.0
    %2768 = vmatprep.subr.mxu0 0.0
    %2769 = vmatpush1.msra.mxu0 0.0
    %2770 = vmatprep.subr.mxu0 0.0
    %2771 = vmatpush1.msra.mxu0 0.0
    %2772 = vmatprep.subr.mxu0 0.0
    %2773 = vmatpush1.msra.mxu0 0.0
    %2774 = vmatprep.subr.mxu0 0.0
    %2775 = vmatpush1.msra.mxu0 0.0
    %2776 = vmatprep.subr.mxu0 0.0
    %2777 = vmatpush1.msra.mxu0 0.0
    %2778 = vmatprep.subr.mxu0 0.0
    %2779 = vmatpush1.msra.mxu0 0.0
    %2780 = vmatprep.subr.mxu0 0.0
    %2781 = vmatpush1.msra.mxu0 0.0
    %2782 = vmatprep.subr.mxu0 0.0
    %2783 = vmatpush1.msra.mxu0 0.0
    %2784 = vmatprep.subr.mxu0 0.0
    %2785 = vmatpush1.msra.mxu0 0.0
    %2786 = vmatprep.subr.mxu0 0.0
    %2787 = vmatpush1.msra.mxu0 0.0
    %2788 = vmatprep.subr.mxu0 0.0
    %2789 = vmatpush1.msra.mxu0 0.0
    %2790 = vmatprep.subr.mxu0 0.0
    %2791 = vmatpush1.msra.mxu0 0.0
    %2792 = vmatprep.subr.mxu0 0.0
    %2793 = vmatpush1.msra.mxu0 0.0
    %2794 = vmatprep.subr.mxu0 0.0
    %2795 = vmatpush1.msra.mxu0 0.0
    %2796 = vmatprep.subr.mxu0 0.0
    %2797 = vmatpush1.msra.mxu0 0.0
    %2798 = vmatprep.subr.mxu0 0.0
    %2799 = vmatpush1.msra.mxu0 0.0
    %2800 = vmatprep.subr.mxu0 0.0
    %2801 = vmatpush1.msra.mxu0 0.0
    %2802 = vmatprep.subr.mxu0 0.0
    %2803 = vmatpush1.msra.mxu0 0.0
    %2804 = vmatprep.subr.mxu0 0.0
    %2805 = vmatpush1.msra.mxu0 0.0
    %2806 = vmatprep.mubr.f32.mxu0 0.0
    %2807 = vmatmul.mubr.f32.gmra.mrb[0].mxu0 %v2740
    %v2808 = vpop.f32.mrb[0].mxu0
    %v2809 = vadd.f32 0.0, %v2808
    %v2810 = vpop.f32.mrb[0].mxu0
    %2811 = vdwg.mxu0
    %2813 = vrot.lane.b32.xlu0 %v2809, 96
    %v2814 = vpop.permute.xlu0 %2813
    %2816 = vst.msk [vmem:[#allocation3 + $0x8] sm:$0xff] %vm615, %v2814
    %v2817 = vld [vmem:[#allocation2 + $0x8] sm:$0xff]
    %2819 = vrot.lane.b32.xlu0 %v2817, 32
    %v2820 = vpop.permute.xlu0 %2819
    %v2821 = vsel %vm34, %v2820, 0
    %2823 = vmatprep.subr.mxu0 0.0
    %2824 = vmatpush1.msra.mxu0 %v27
    %2825 = vmatprep.subr.mxu0 0.0
    %2826 = vmatpush1.msra.mxu0 %v28
    %2827 = vmatprep.subr.mxu0 0.0
    %2828 = vmatpush1.msra.mxu0 0.0
    %2829 = vmatprep.subr.mxu0 0.0
    %2830 = vmatpush1.msra.mxu0 0.0
    %2831 = vmatprep.subr.mxu0 0.0
    %2832 = vmatpush1.msra.mxu0 0.0
    %2833 = vmatprep.subr.mxu0 0.0
    %2834 = vmatpush1.msra.mxu0 0.0
    %2835 = vmatprep.subr.mxu0 0.0
    %2836 = vmatpush1.msra.mxu0 0.0
    %2837 = vmatprep.subr.mxu0 0.0
    %2838 = vmatpush1.msra.mxu0 0.0
    %2839 = vmatprep.subr.mxu0 0.0
    %2840 = vmatpush1.msra.mxu0 0.0
    %2841 = vmatprep.subr.mxu0 0.0
    %2842 = vmatpush1.msra.mxu0 0.0
    %2843 = vmatprep.subr.mxu0 0.0
    %2844 = vmatpush1.msra.mxu0 0.0
    %2845 = vmatprep.subr.mxu0 0.0
    %2846 = vmatpush1.msra.mxu0 0.0
    %2847 = vmatprep.subr.mxu0 0.0
    %2848 = vmatpush1.msra.mxu0 0.0
    %2849 = vmatprep.subr.mxu0 0.0
    %2850 = vmatpush1.msra.mxu0 0.0
    %2851 = vmatprep.subr.mxu0 0.0
    %2852 = vmatpush1.msra.mxu0 0.0
    %2853 = vmatprep.subr.mxu0 0.0
    %2854 = vmatpush1.msra.mxu0 0.0
    %2855 = vmatprep.subr.mxu0 0.0
    %2856 = vmatpush1.msra.mxu0 0.0
    %2857 = vmatprep.subr.mxu0 0.0
    %2858 = vmatpush1.msra.mxu0 0.0
    %2859 = vmatprep.subr.mxu0 0.0
    %2860 = vmatpush1.msra.mxu0 0.0
    %2861 = vmatprep.subr.mxu0 0.0
    %2862 = vmatpush1.msra.mxu0 0.0
    %2863 = vmatprep.subr.mxu0 0.0
    %2864 = vmatpush1.msra.mxu0 0.0
    %2865 = vmatprep.subr.mxu0 0.0
    %2866 = vmatpush1.msra.mxu0 0.0
    %2867 = vmatprep.subr.mxu0 0.0
    %2868 = vmatpush1.msra.mxu0 0.0
    %2869 = vmatprep.subr.mxu0 0.0
    %2870 = vmatpush1.msra.mxu0 0.0
    %2871 = vmatprep.subr.mxu0 0.0
    %2872 = vmatpush1.msra.mxu0 0.0
    %2873 = vmatprep.subr.mxu0 0.0
    %2874 = vmatpush1.msra.mxu0 0.0
    %2875 = vmatprep.subr.mxu0 0.0
    %2876 = vmatpush1.msra.mxu0 0.0
    %2877 = vmatprep.subr.mxu0 0.0
    %2878 = vmatpush1.msra.mxu0 0.0
    %2879 = vmatprep.subr.mxu0 0.0
    %2880 = vmatpush1.msra.mxu0 0.0
    %2881 = vmatprep.subr.mxu0 0.0
    %2882 = vmatpush1.msra.mxu0 0.0
    %2883 = vmatprep.subr.mxu0 0.0
    %2884 = vmatpush1.msra.mxu0 0.0
    %2885 = vmatprep.subr.mxu0 0.0
    %2886 = vmatpush1.msra.mxu0 0.0
    %2887 = vmatprep.mubr.f32.mxu0 0.0
    %2888 = vmatmul.mubr.f32.gmra.mrb[0].mxu0 %v2821
    %v2889 = vpop.f32.mrb[0].mxu0
    %v2890 = vadd.f32 0.0, %v2889
    %v2891 = vpop.f32.mrb[0].mxu0
    %2892 = vdwg.mxu0
    %2894 = vrot.lane.b32.xlu0 %v2890, 112
    %v2895 = vpop.permute.xlu0 %2894
    %2897 = vst.msk [vmem:[#allocation3 + $0x8] sm:$0xff] %vm697, %v2895
    %v2898 = vld [vmem:[#allocation2 + $0x8] sm:$0xff]
    %2900 = vrot.lane.b32.xlu0 %v2898, 16
    %v2901 = vpop.permute.xlu0 %2900
    %v2902 = vsel %vm34, %v2901, 0
    %2904 = vmatprep.subr.mxu0 0.0
    %2905 = vmatpush1.msra.mxu0 %v27
    %2906 = vmatprep.subr.mxu0 0.0
    %2907 = vmatpush1.msra.mxu0 %v28
    %2908 = vmatprep.subr.mxu0 0.0
    %2909 = vmatpush1.msra.mxu0 0.0
    %2910 = vmatprep.subr.mxu0 0.0
    %2911 = vmatpush1.msra.mxu0 0.0
    %2912 = vmatprep.subr.mxu0 0.0
    %2913 = vmatpush1.msra.mxu0 0.0
    %2914 = vmatprep.subr.mxu0 0.0
    %2915 = vmatpush1.msra.mxu0 0.0
    %2916 = vmatprep.subr.mxu0 0.0
    %2917 = vmatpush1.msra.mxu0 0.0
    %2918 = vmatprep.subr.mxu0 0.0
    %2919 = vmatpush1.msra.mxu0 0.0
    %2920 = vmatprep.subr.mxu0 0.0
    %2921 = vmatpush1.msra.mxu0 0.0
    %2922 = vmatprep.subr.mxu0 0.0
    %2923 = vmatpush1.msra.mxu0 0.0
    %2924 = vmatprep.subr.mxu0 0.0
    %2925 = vmatpush1.msra.mxu0 0.0
    %2926 = vmatprep.subr.mxu0 0.0
    %2927 = vmatpush1.msra.mxu0 0.0
    %2928 = vmatprep.subr.mxu0 0.0
    %2929 = vmatpush1.msra.mxu0 0.0
    %2930 = vmatprep.subr.mxu0 0.0
    %2931 = vmatpush1.msra.mxu0 0.0
    %2932 = vmatprep.subr.mxu0 0.0
    %2933 = vmatpush1.msra.mxu0 0.0
    %2934 = vmatprep.subr.mxu0 0.0
    %2935 = vmatpush1.msra.mxu0 0.0
    %2936 = vmatprep.subr.mxu0 0.0
    %2937 = vmatpush1.msra.mxu0 0.0
    %2938 = vmatprep.subr.mxu0 0.0
    %2939 = vmatpush1.msra.mxu0 0.0
    %2940 = vmatprep.subr.mxu0 0.0
    %2941 = vmatpush1.msra.mxu0 0.0
    %2942 = vmatprep.subr.mxu0 0.0
    %2943 = vmatpush1.msra.mxu0 0.0
    %2944 = vmatprep.subr.mxu0 0.0
    %2945 = vmatpush1.msra.mxu0 0.0
    %2946 = vmatprep.subr.mxu0 0.0
    %2947 = vmatpush1.msra.mxu0 0.0
    %2948 = vmatprep.subr.mxu0 0.0
    %2949 = vmatpush1.msra.mxu0 0.0
    %2950 = vmatprep.subr.mxu0 0.0
    %2951 = vmatpush1.msra.mxu0 0.0
    %2952 = vmatprep.subr.mxu0 0.0
    %2953 = vmatpush1.msra.mxu0 0.0
    %2954 = vmatprep.subr.mxu0 0.0
    %2955 = vmatpush1.msra.mxu0 0.0
    %2956 = vmatprep.subr.mxu0 0.0
    %2957 = vmatpush1.msra.mxu0 0.0
    %2958 = vmatprep.subr.mxu0 0.0
    %2959 = vmatpush1.msra.mxu0 0.0
    %2960 = vmatprep.subr.mxu0 0.0
    %2961 = vmatpush1.msra.mxu0 0.0
    %2962 = vmatprep.subr.mxu0 0.0
    %2963 = vmatpush1.msra.mxu0 0.0
    %2964 = vmatprep.subr.mxu0 0.0
    %2965 = vmatpush1.msra.mxu0 0.0
    %2966 = vmatprep.subr.mxu0 0.0
    %2967 = vmatpush1.msra.mxu0 0.0
    %2968 = vmatprep.mubr.f32.mxu0 0.0
    %2969 = vmatmul.mubr.f32.gmra.mrb[0].mxu0 %v2902
    %v2970 = vpop.f32.mrb[0].mxu0
    %v2971 = vadd.f32 0.0, %v2970
    %v2972 = vpop.f32.mrb[0].mxu0
    %2973 = vdwg.mxu0
    %2974 = vst.msk [vmem:[#allocation3 + $0x10] sm:$0xff] %vm34, %v2971
    %2975 = vmatprep.subr.mxu0 %v1616
    %2976 = vmatpush1.msra.mxu0 %v1614
    %2977 = vmatprep.subr.mxu0 0.0
    %2978 = vmatpush1.msra.mxu0 0.0
    %2979 = vmatprep.subr.mxu0 0.0
    %2980 = vmatpush1.msra.mxu0 0.0
    %2981 = vmatprep.subr.mxu0 0.0
    %2982 = vmatpush1.msra.mxu0 0.0
    %2983 = vmatprep.subr.mxu0 0.0
    %2984 = vmatpush1.msra.mxu0 0.0
    %2985 = vmatprep.subr.mxu0 0.0
    %2986 = vmatpush1.msra.mxu0 0.0
    %2987 = vmatprep.subr.mxu0 0.0
    %2988 = vmatpush1.msra.mxu0 0.0
    %2989 = vmatprep.subr.mxu0 0.0
    %2990 = vmatpush1.msra.mxu0 0.0
    %2991 = vmatprep.subr.mxu0 0.0
    %2992 = vmatpush1.msra.mxu0 0.0
    %2993 = vmatprep.subr.mxu0 0.0
    %2994 = vmatpush1.msra.mxu0 0.0
    %2995 = vmatprep.subr.mxu0 0.0
    %2996 = vmatpush1.msra.mxu0 0.0
    %2997 = vmatprep.subr.mxu0 0.0
    %2998 = vmatpush1.msra.mxu0 0.0
    %2999 = vmatprep.subr.mxu0 0.0
    %3000 = vmatpush1.msra.mxu0 0.0
    %3001 = vmatprep.subr.mxu0 0.0
    %3002 = vmatpush1.msra.mxu0 0.0
    %3003 = vmatprep.subr.mxu0 0.0
    %3004 = vmatpush1.msra.mxu0 0.0
    %3005 = vmatprep.subr.mxu0 0.0
    %3006 = vmatpush1.msra.mxu0 0.0
    %3007 = vmatprep.subr.mxu0 0.0
    %3008 = vmatpush1.msra.mxu0 0.0
    %3009 = vmatprep.subr.mxu0 0.0
    %3010 = vmatpush1.msra.mxu0 0.0
    %3011 = vmatprep.subr.mxu0 0.0
    %3012 = vmatpush1.msra.mxu0 0.0
    %3013 = vmatprep.subr.mxu0 0.0
    %3014 = vmatpush1.msra.mxu0 0.0
    %3015 = vmatprep.subr.mxu0 0.0
    %3016 = vmatpush1.msra.mxu0 0.0
    %3017 = vmatprep.subr.mxu0 0.0
    %3018 = vmatpush1.msra.mxu0 0.0
    %3019 = vmatprep.subr.mxu0 0.0
    %3020 = vmatpush1.msra.mxu0 0.0
    %3021 = vmatprep.subr.mxu0 0.0
    %3022 = vmatpush1.msra.mxu0 0.0
    %3023 = vmatprep.subr.mxu0 0.0
    %3024 = vmatpush1.msra.mxu0 0.0
    %3025 = vmatprep.subr.mxu0 0.0
    %3026 = vmatpush1.msra.mxu0 0.0
    %3027 = vmatprep.subr.mxu0 0.0
    %3028 = vmatpush1.msra.mxu0 0.0
    %3029 = vmatprep.subr.mxu0 0.0
    %3030 = vmatpush1.msra.mxu0 0.0
    %3031 = vmatprep.subr.mxu0 0.0
    %3032 = vmatpush1.msra.mxu0 0.0
    %3033 = vmatprep.subr.mxu0 0.0
    %3034 = vmatpush1.msra.mxu0 0.0
    %3035 = vmatprep.subr.mxu0 0.0
    %3036 = vmatpush1.msra.mxu0 0.0
    %3037 = vmatprep.subr.mxu0 0.0
    %3038 = vmatpush1.msra.mxu0 0.0
    %3039 = vmatprep.mubr.f32.mxu0 0.0
    %3040 = vmatmul.mubr.f32.gmra.mrb[0].mxu0 %v1424
    %v3041 = vpop.f32.mrb[0].mxu0
    %v3042 = vadd.f32 %v1421, %v3041
    %v3043 = vpop.f32.mrb[0].mxu0
    %v3044 = vadd.f32 %v1421, %v3043
    %3045 = vdwg.mxu0
    %v3046 = vld [vmem:[#allocation3] sm:$0xff]
    %v3047 = vld [vmem:[#allocation3 + $0x8] sm:$0xff]
    %v3048 = vld [vmem:[#allocation3 + $0x10] sm:$0xff]
    %3052 = vrot.lane.b32.xlu0 %v3046, 112
    %v3053 = vpop.permute.xlu0 %3052
    %3054 = vrot.lane.b32.xlu0 %v3047, 112
    %v3055 = vpop.permute.xlu0 %3054
    %3056 = vrot.lane.b32.xlu0 %v3048, 112
    %v3057 = vpop.permute.xlu0 %3056
    %v3058 = vsel %vm1509, %v3053, %v3055
    %v3059 = vsel %vm1509, %v3055, %v3057
    %3062 = vrot.lane.b32.xlu0 %v3046, 96
    %v3063 = vpop.permute.xlu0 %3062
    %3064 = vrot.lane.b32.xlu0 %v3047, 96
    %v3065 = vpop.permute.xlu0 %3064
    %3066 = vrot.lane.b32.xlu0 %v3048, 96
    %v3067 = vpop.permute.xlu0 %3066
    %v3068 = vsel %vm1520, %v3063, %v3065
    %v3069 = vsel %vm1520, %v3065, %v3067
    %3072 = vmatprep.subr.mxu0 %v3047
    %3073 = vmatpush1.msra.mxu0 %v3046
    %3074 = vmatprep.subr.mxu0 %v3059
    %3075 = vmatpush1.msra.mxu0 %v3058
    %3076 = vmatprep.subr.mxu0 %v3069
    %3077 = vmatpush1.msra.mxu0 %v3068
    %3078 = vmatprep.subr.mxu0 0.0
    %3079 = vmatpush1.msra.mxu0 0.0
    %3080 = vmatprep.subr.mxu0 0.0
    %3081 = vmatpush1.msra.mxu0 0.0
    %3082 = vmatprep.subr.mxu0 0.0
    %3083 = vmatpush1.msra.mxu0 0.0
    %3084 = vmatprep.subr.mxu0 0.0
    %3085 = vmatpush1.msra.mxu0 0.0
    %3086 = vmatprep.subr.mxu0 0.0
    %3087 = vmatpush1.msra.mxu0 0.0
    %3088 = vmatprep.subr.mxu0 0.0
    %3089 = vmatpush1.msra.mxu0 0.0
    %3090 = vmatprep.subr.mxu0 0.0
    %3091 = vmatpush1.msra.mxu0 0.0
    %3092 = vmatprep.subr.mxu0 0.0
    %3093 = vmatpush1.msra.mxu0 0.0
    %3094 = vmatprep.subr.mxu0 0.0
    %3095 = vmatpush1.msra.mxu0 0.0
    %3096 = vmatprep.subr.mxu0 0.0
    %3097 = vmatpush1.msra.mxu0 0.0
    %3098 = vmatprep.subr.mxu0 0.0
    %3099 = vmatpush1.msra.mxu0 0.0
    %3100 = vmatprep.subr.mxu0 0.0
    %3101 = vmatpush1.msra.mxu0 0.0
    %3102 = vmatprep.subr.mxu0 0.0
    %3103 = vmatpush1.msra.mxu0 0.0
    %3104 = vmatprep.subr.mxu0 0.0
    %3105 = vmatpush1.msra.mxu0 0.0
    %3106 = vmatprep.subr.mxu0 0.0
    %3107 = vmatpush1.msra.mxu0 0.0
    %3108 = vmatprep.subr.mxu0 0.0
    %3109 = vmatpush1.msra.mxu0 0.0
    %3110 = vmatprep.subr.mxu0 0.0
    %3111 = vmatpush1.msra.mxu0 0.0
    %3112 = vmatprep.subr.mxu0 0.0
    %3113 = vmatpush1.msra.mxu0 0.0
    %3114 = vmatprep.subr.mxu0 0.0
    %3115 = vmatpush1.msra.mxu0 0.0
    %3116 = vmatprep.subr.mxu0 0.0
    %3117 = vmatpush1.msra.mxu0 0.0
    %3118 = vmatprep.subr.mxu0 0.0
    %3119 = vmatpush1.msra.mxu0 0.0
    %3120 = vmatprep.subr.mxu0 0.0
    %3121 = vmatpush1.msra.mxu0 0.0
    %3122 = vmatprep.subr.mxu0 0.0
    %3123 = vmatpush1.msra.mxu0 0.0
    %3124 = vmatprep.subr.mxu0 0.0
    %3125 = vmatpush1.msra.mxu0 0.0
    %3126 = vmatprep.subr.mxu0 0.0
    %3127 = vmatpush1.msra.mxu0 0.0
    %3128 = vmatprep.subr.mxu0 0.0
    %3129 = vmatpush1.msra.mxu0 0.0
    %3130 = vmatprep.subr.mxu0 0.0
    %3131 = vmatpush1.msra.mxu0 0.0
    %3132 = vmatprep.subr.mxu0 0.0
    %3133 = vmatpush1.msra.mxu0 0.0
    %3134 = vmatprep.subr.mxu0 0.0
    %3135 = vmatpush1.msra.mxu0 0.0
    %3136 = vmatprep.mubr.f32.mxu0 0.0
    %3137 = vmatmul.mubr.f32.gmra.mrb[0].mxu0 %v1527
    %v3138 = vpop.f32.mrb[0].mxu0
    %v3139 = vadd.f32 0.0, %v3138
    %v3140 = vpop.f32.mrb[0].mxu0
    %v3141 = vadd.f32 0.0, %v3140
    %3142 = vdwg.mxu0
    %v3143 = vadd.f32 %v3042, %v3139
    %v3144 = vadd.f32 %v3044, %v3141
    %vm3145 = vcmp.ge.f32.partialorder %v3143, 0.0
    %vm3146 = vcmp.ge.f32.partialorder %v3144, 0.0
    %v3147 = vmul.f32 %v3143, 0.05
    %v3148 = vmul.f32 %v3144, 0.05
    %v3149 = vsel %vm3145, %v3143, %v3147
    %v3150 = vsel %vm3146, %v3144, %v3148
    %s3151 = scalar_lea.vmem [#allocation4], 16
    %3152 = vst [vmem:[%s3151] sm:$0xff] %v3149
    %3153 = vst [vmem:[%s3151 + $0x8] sm:$0xff] %v3150
    // Predicated region
    $region30: #{tpu_custom_call.1} parent=1 // pred_check
      _
    $region31: #{tpu_custom_call.1} parent=1 // pred_check_branch
      %3155 = sbr.rel (0) target = $region33
    $region32: #{tpu_custom_call.1} parent=1 // pred_region
      %s3157 = ssub.s32 512, 512
      %3158 = vsyncadd [#allocation5], %s3157
      %s3159 = sshll.u32 [#allocation4], 4
      %s3160 = int_to_ptr.vmem [resolvable:$true] %s3159
      %3165 = dma.vmem_to_hbm [thread:$0]  %s3160, 512, %s7, [#allocation5], 256, 256, 16
    $region33: #{tpu_custom_call.1} parent=1 // pred_fallthru
      _
    // Predicated region
    $region34: #{tpu_custom_call.1} parent=1 // pred_check
      _
    $region35: #{tpu_custom_call.1} parent=1 // pred_check_branch
      %3167 = sbr.rel (0) target = $region37
    $region36: #{tpu_custom_call.1} parent=1 // pred_region
      %3168 = dma.done [#allocation5], 512
    $region37: #{tpu_custom_call.1} parent=1 // pred_fallthru
      _
    %3169 = vsyncpa [#allocation5], 1

</llo_original>
